<compile_context>
chip_gen: v7x
topology: tpu7x:2x2x1
jax: 0.10.0
libtpu: 0.0.40
codegen_flags: <defaults>
</compile_context>

<pallas_src>
import functools

import jax
import jax.numpy as jnp
from jax.experimental import pallas as pl
from jax.experimental.pallas import tpu as pltpu


D_HIDDEN = 512  # fixed by the module (Conv1d kernel size / FDModel hidden width)


# ----------------------------------------------------------------------------- #
# Pallas kernel: fused projection + confidence + grouped-conv classifier + fusion
# ----------------------------------------------------------------------------- #
def _make_fused_head_kernel(num_views: int, with_p_pre: bool):
    def kernel(xT_ref, wT_ref, fb_ref, cw_ref, cb_ref, wl_ref, bias_ref, maskT_ref,
               *out_refs):
        if with_p_pre:
            p_stackT_ref, pT_ref = out_refs
        else:
            (pT_ref,) = out_refs
        C, TB = pT_ref.shape

        wl = wl_ref[...]                                     # (C, D) bf16, resident
        # hoist the lane-broadcast of the conv bias out of the per-view loop
        bias_b = jnp.broadcast_to(bias_ref[...], (C, TB))    # (C, TB) f32

        acc = jnp.zeros((C, TB), jnp.float32)                # sum_v logits_v * mc_v
        msum = jnp.zeros((1, TB), jnp.float32)               # sum_v mc_v

        for v in range(num_views):                           # V small & static -> unrolled
            # per-view projection + LeakyReLU(0.1): builds the hT tile in VMEM,
            # no HBM round-trip for the (D, B) activations.
            h = jnp.dot(wT_ref[v], xT_ref[v],
                        preferred_element_type=jnp.float32) + fb_ref[v]          # (D, TB)
            h = jax.nn.leaky_relu(h, 0.1)
            h_bf = h.astype(jnp.bfloat16)

            # confidence head: sigmoid(h @ conf_w + conf_b)  -> (1, TB)
            conf = jax.nn.sigmoid(
                jnp.dot(cw_ref[v], h_bf, preferred_element_type=jnp.float32) + cb_ref[v])

            # grouped Conv1d(C, C, 512, groups=C) on rank-1 Z == (lab*cls_w) @ h + cls_b
            logits = jnp.dot(wl, h_bf, preferred_element_type=jnp.float32) + bias_b  # (C, TB)
            if with_p_pre:
                p_stackT_ref[v] = logits

            m = maskT_ref[v:v + 1, :]                        # (1, TB)
            mc = (1.0 - m) * conf + m
            acc = acc + logits * mc
            msum = msum + mc

        # mask_confi row-normalization factored out (common denominator across views)
        pT_ref[...] = jax.nn.sigmoid(acc / (msum + 1e-9))

    return kernel


def _pick_batch_tile(B):
    """Largest lane-aligned tile that divides B, capped at 2048 and at B//2 so the grid
    keeps >= 2 steps (v7x megacore sharding + double-buffered DMA/compute overlap)."""
    if B < 256 or B % 128 != 0:
        return B                       # small / ragged batch: single full-extent block
    cap = min(2048, B // 2)
    tb = cap - cap % 128
    while tb >= 128:
        if B % tb == 0:
            return tb
        tb -= 128
    return B


@functools.partial(jax.jit, static_argnames=("with_p_pre",))
def fused_head(xT, fd_WT, fd_b, conf_wT, conf_b, wl, cls_b, maskT, *, with_p_pre=True):
    """xT      (V, dpad, B) bf16  per-view inputs, zero-padded, batch on lanes (streams)
       fd_WT   (V, D, dpad) bf16  per-view projection weights (resident)
       fd_b    (V, D, 1)    f32   projection bias
       conf_wT (V, 1, D)    bf16  confidence weights
       conf_b  (V, 1, 1)    f32   confidence bias
       wl      (C, D)       bf16  fused classifier weight = lab * cls_conv_weight
       cls_b   (C, 1)       f32   cls_conv bias
       maskT   (V, B)       f32   observed-view mask (transposed)
       returns (pT (C, B) probabilities, p_stackT (V, C, B) pre-sigmoid logits or None)."""
    V, dpad, B = xT.shape
    D = fd_WT.shape[1]
    C = wl.shape[0]
    TB = _pick_batch_tile(B)
    grid = (B // TB,)

    in_specs = [
        pl.BlockSpec((V, dpad, TB), lambda i: (0, 0, i)),   # xT: batch-tiled (the stream)
        pl.BlockSpec((V, D, dpad), lambda i: (0, 0, 0)),    # fd_W^T: resident
        pl.BlockSpec((V, D, 1), lambda i: (0, 0, 0)),       # fd_b: resident
        pl.BlockSpec((V, 1, D), lambda i: (0, 0, 0)),       # conf_w^T: resident
        pl.BlockSpec((V, 1, 1), lambda i: (0, 0, 0)),       # conf_b: resident
        pl.BlockSpec((C, D), lambda i: (0, 0)),             # fused cls weight: resident
        pl.BlockSpec((C, 1), lambda i: (0, 0)),             # cls bias: resident
        pl.BlockSpec((V, TB), lambda i: (0, i)),            # mask^T: batch-tiled
    ]
    if with_p_pre:
        out_shape = (jax.ShapeDtypeStruct((V, C, B), jnp.float32),
                     jax.ShapeDtypeStruct((C, B), jnp.float32))
        out_specs = (pl.BlockSpec((V, C, TB), lambda i: (0, 0, i)),
                     pl.BlockSpec((C, TB), lambda i: (0, i)))
    else:
        out_shape = jax.ShapeDtypeStruct((C, B), jnp.float32)
        out_specs = pl.BlockSpec((C, TB), lambda i: (0, i))

    outs = pl.pallas_call(
        _make_fused_head_kernel(V, with_p_pre),
        out_shape=out_shape,
        grid=grid,
        in_specs=in_specs,
        out_specs=out_specs,
        compiler_params=pltpu.CompilerParams(
            dimension_semantics=("parallel",),   # megacore-shard the batch axis (v7x)
            vmem_limit_bytes=48 * 1024 * 1024,   # headroom at TB=2048; under v7x 64 MiB
        ),
    )(xT, fd_WT, fd_b, conf_wT, conf_b, wl, cls_b, maskT)

    if with_p_pre:
        p_stackT, pT = outs
        return pT, p_stackT
    return outs, None


# ----------------------------------------------------------------------------- #
# Plain-JAX glue for undefined submodules (deterministic stand-ins)
# ----------------------------------------------------------------------------- #
def gat_encoder(x, adj, W, a):
    # TODO(synk): GAT class definition not provided; single-head GAT stand-in.
    h = x @ W                                   # (C, E)
    E = h.shape[1]
    f1 = h @ a[:E]
    f2 = h @ a[E:]
    e = jax.nn.leaky_relu(f1[:, None] + f2[None, :], 0.2)
    e = jnp.where(adj > 0, e, -1e9)
    alpha = jax.nn.softmax(e, axis=1)
    return jax.nn.elu(alpha @ h)                # (C, E)


@functools.partial(jax.jit, static_argnames=("with_p_pre",))
def net_forward(params, input_list, mask, adj, *, with_p_pre=True):
    V = len(input_list)
    D = params["cls_w"].shape[1]
    B = input_list[0].shape[0]

    # 1) label embedding through the GAT encoder (tiny; plain JAX)
    label_emb = gat_encoder(params["label_embedding"], adj, params["gat_W"], params["gat_a"])

    # 2) FDModel label projection (tiny; plain JAX)
    # TODO(synk): FDModel class definition not provided; stand-in = per-view encoder +
    # rank-1 label interaction Z_v[b,c,:] = h_v[b,:]*lab[c,:] + per-view confidence head.
    lab = jax.nn.leaky_relu(label_emb @ params["fd_lab_W"] + params["fd_lab_b"], 0.1)  # (C, D)

    # Grouped Conv1d(C, C, 512, groups=C) on rank-1 Z collapses exactly to
    #   logits[b, v, c] = h_v[b, :] @ (lab * cls_w)[c, :] + cls_b[c]
    # (re-validate if the real FDModel is not rank-1).
    wl = (lab * params["cls_w"]).astype(jnp.bfloat16)          # (C, D) fused weight, bf16
    cls_b = params["cls_b"].reshape(-1, 1)                     # (C, 1) f32

    # Pack per-view inputs as (V, dpad, B) with batch on the lane axis.  d_v <= 32, so
    # these transposes are tiny; the large (B, D) -> (D, B) activation transpose of the
    # previous version is gone because the projection is fused into the kernel.
    d_list = [x.shape[1] for x in input_list]
    dpad = max(8, -(-max(d_list) // 8) * 8)
    xT = jnp.zeros((V, dpad, B), jnp.float32)
    fd_WT = jnp.zeros((V, D, dpad), jnp.float32)
    for v in range(V):
        xT = xT.at[v, :d_list[v], :].set(input_list[v].T)
        fd_WT = fd_WT.at[v, :, :d_list[v]].set(params["fd_W"][v].T)
    fd_b = jnp.stack([b.reshape(D, 1) for b in params["fd_b"]], axis=0)          # (V, D, 1)
    conf_wT = jnp.stack([w.T for w in params["fd_conf_w"]], axis=0)              # (V, 1, D)
    conf_b = jnp.stack([b.reshape(1, 1) for b in params["fd_conf_b"]], axis=0)   # (V, 1, 1)
    maskT = mask.T                                                               # (V, B)

    # 3) fused projection + confidence + cls_conv + mask/confidence fusion (Pallas)
    pT, p_stackT = fused_head(
        xT.astype(jnp.bfloat16), fd_WT.astype(jnp.bfloat16), fd_b,
        conf_wT.astype(jnp.bfloat16), conf_b, wl, cls_b, maskT,
        with_p_pre=with_p_pre)

    p = pT.T                                                   # (B, C)
    p_pre = [p_stackT[v].T for v in range(V)] if with_p_pre else None
    return p, label_emb, p_pre


# ----------------------------------------------------------------------------- #
# Plain-JAX f32 reference that materializes z_stack like the original torch code
# (used only to validate the fused/factorized Pallas path on small shapes).
# ----------------------------------------------------------------------------- #
def net_forward_reference(params, input_list, mask, adj):
    label_emb = gat_encoder(params["label_embedding"], adj, params["gat_W"], params["gat_a"])
    lab = jax.nn.leaky_relu(label_emb @ params["fd_lab_W"] + params["fd_lab_b"], 0.1)
    p_list, confi_rows = [], []
    for v, x in enumerate(input_list):
        h = jax.nn.leaky_relu(x @ params["fd_W"][v] + params["fd_b"][v], 0.1)
        z = h[:, None, :] * lab[None, :, :]                                      # (B, C, D)
        p_ii = jnp.sum(z * params["cls_w"][None], axis=-1) + params["cls_b"]     # grouped conv
        p_list.append(p_ii)
        confi_rows.append(
            jax.nn.sigmoid(h @ params["fd_conf_w"][v] + params["fd_conf_b"][v])[:, 0])
    confi = jnp.stack(confi_rows, axis=0)                       # (V, B)
    p = jnp.stack(p_list, axis=1)                               # (B, V, C)
    mc = (1.0 - mask) * confi.T + mask
    mc = mc / (jnp.sum(mc, axis=1, keepdims=True) + 1e-9)
    p = jax.nn.sigmoid(jnp.sum(p * mc[:, :, None], axis=1))
    return p, label_emb, p_list


# ----------------------------------------------------------------------------- #
# Deterministic parameter construction (shapes from Net.__init__ / reset_parameters)
# ----------------------------------------------------------------------------- #
def init_params(key, d_list, num_classes, class_emb, D=D_HIDDEN):
    ks = iter(jax.random.split(key, 16 + 4 * len(d_list)))
    params = {
        "label_embedding": jax.random.normal(next(ks), (num_classes, num_classes), jnp.float32),
        "label_adj": jax.random.normal(next(ks), (num_classes, num_classes), jnp.float32),  # unused in fwd
        "gat_W": jax.random.normal(next(ks), (num_classes, class_emb), jnp.float32) * 0.1,
        "gat_a": jax.random.normal(next(ks), (2 * class_emb,), jnp.float32) * 0.1,
        "fd_lab_W": jax.random.normal(next(ks), (class_emb, D), jnp.float32) * 0.05,
        "fd_lab_b": jnp.zeros((D,), jnp.float32),
        "cls_w": jax.random.normal(next(ks), (num_classes, D), jnp.float32) * 0.05,  # Conv1d(C,C,D,groups=C)
        "cls_b": jnp.zeros((1, num_classes), jnp.float32),
        "fd_W": [], "fd_b": [], "fd_conf_w": [], "fd_conf_b": [],
    }
    for d in d_list:
        params["fd_W"].append(jax.random.normal(next(ks), (d, D), jnp.float32) * 0.05)
        params["fd_b"].append(jnp.zeros((D,), jnp.float32))
        params["fd_conf_w"].append(jax.random.normal(next(ks), (D, 1), jnp.float32) * 0.05)
        params["fd_conf_b"].append(jnp.zeros((1,), jnp.float32))
    return params


if __name__ == "__main__":
    key = jax.random.PRNGKey(0)
    d_list = [16, 20, 24]     # per-view input dims
    C = 8                     # num_classes
    E = 32                    # class_emb
    D = D_HIDDEN              # fixed by module (Conv1d kernel size / hidden)

    kp, kx, km, kx2, km2 = jax.random.split(key, 5)
    params = init_params(kp, d_list, C, E, D)

    # adjacency over classes: ring + self-loops (deterministic)
    adj = jnp.eye(C, dtype=jnp.float32) + jnp.eye(C, k=1, dtype=jnp.float32) + jnp.eye(C, k=-1, dtype=jnp.float32)
    adj = (adj > 0).astype(jnp.float32)

    # --- small shapes through the fused Pallas path (B=2 -> single full-extent block) ---
    B = 2
    xkeys = jax.random.split(kx, len(d_list))
    input_list = [jax.random.normal(xkeys[v], (B, d_list[v]), jnp.float32) for v in range(len(d_list))]
    mask = jax.random.bernoulli(km, 0.5, (B, len(d_list))).astype(jnp.float32)   # 1 = view observed

    p, label_emb, p_pre = net_forward(params, input_list, mask, adj, with_p_pre=True)
    jax.block_until_ready(p)
    jax.block_until_ready(label_emb)

    assert p.shape == (B, C)
    assert label_emb.shape == (C, E)
    assert len(p_pre) == len(d_list) and p_pre[0].shape == (B, C)
    assert bool(jnp.all((p >= 0) & (p <= 1)))

    # --- validate against the z_stack-materializing f32 reference (original semantics) ---
    p_ref, label_emb_ref, p_pre_ref = net_forward_reference(params, input_list, mask, adj)
    assert bool(jnp.allclose(p, p_ref, atol=2e-2, rtol=2e-2))
    assert bool(jnp.allclose(label_emb, label_emb_ref, atol=1e-4, rtol=1e-4))
    for v in range(len(d_list)):
        assert bool(jnp.allclose(p_pre[v], p_pre_ref[v], atol=2e-2, rtol=2e-2))

    # --- batch-tiled grid path: B=384 -> TB=128, grid=(3,) (pipelined, megacore-shardable) ---
    B2 = 384
    xkeys2 = jax.random.split(kx2, len(d_list))
    input_list2 = [jax.random.normal(xkeys2[v], (B2, d_list[v]), jnp.float32) for v in range(len(d_list))]
    mask2 = jax.random.bernoulli(km2, 0.5, (B2, len(d_list))).astype(jnp.float32)

    p2, _, p_pre2 = net_forward(params, input_list2, mask2, adj, with_p_pre=True)
    jax.block_until_ready(p2)
    p2_ref, _, p_pre2_ref = net_forward_reference(params, input_list2, mask2, adj)
    assert bool(jnp.allclose(p2, p2_ref, atol=2e-2, rtol=2e-2))
    for v in range(len(d_list)):
        assert bool(jnp.allclose(p_pre2[v], p_pre2_ref[v], atol=2e-2, rtol=2e-2))

    # --- inference path: per-view logits output dropped (saves the V*C*B stores) ---
    p3, _, p_pre3 = net_forward(params, input_list2, mask2, adj, with_p_pre=False)
    jax.block_until_ready(p3)
    assert p_pre3 is None
    assert bool(jnp.allclose(p3, p2, atol=1e-4, rtol=1e-4))

    print("KERNEL_OK")
</pallas_src>

<mosaic_0001>
module attributes {stable_mosaic.version = 11 : i64} {
  func.func @kernel(%arg0: i32, %arg1: memref<3x24x2xbf16, #tpu.memory_space<vmem>>, %arg2: memref<3x512x24xbf16, #tpu.memory_space<vmem>>, %arg3: memref<3x512x1xf32, #tpu.memory_space<vmem>>, %arg4: memref<3x1x512xbf16, #tpu.memory_space<vmem>>, %arg5: memref<3x1x1xf32, #tpu.memory_space<vmem>>, %arg6: memref<8x512xbf16, #tpu.memory_space<vmem>>, %arg7: memref<8x1xf32, #tpu.memory_space<vmem>>, %arg8: memref<3x2xf32, #tpu.memory_space<vmem>>, %arg9: memref<3x8x2xf32, #tpu.memory_space<vmem>>, %arg10: memref<8x2xf32, #tpu.memory_space<vmem>>) attributes {dimension_semantics = [#tpu.dimension_semantics<parallel>], iteration_bounds = array<i64: 1>, scalar_prefetch = 0 : i64, scratch_operands = 0 : i64, tpu.core_type = #tpu.core_type<tc>, window_params = [{transform_indices = @transform_0, window_bounds = array<i64: 3, 24, 2>}, {pipeline_mode = #tpu.pipeline_mode<synchronous>, transform_indices = @transform_1, window_bounds = array<i64: 3, 512, 24>}, {pipeline_mode = #tpu.pipeline_mode<synchronous>, transform_indices = @transform_2, window_bounds = array<i64: 3, 512, 1>}, {pipeline_mode = #tpu.pipeline_mode<synchronous>, transform_indices = @transform_3, window_bounds = array<i64: 3, 1, 512>}, {pipeline_mode = #tpu.pipeline_mode<synchronous>, transform_indices = @transform_4, window_bounds = array<i64: 3, 1, 1>}, {pipeline_mode = #tpu.pipeline_mode<synchronous>, transform_indices = @transform_5, window_bounds = array<i64: 8, 512>}, {pipeline_mode = #tpu.pipeline_mode<synchronous>, transform_indices = @transform_6, window_bounds = array<i64: 8, 1>}, {transform_indices = @transform_7, window_bounds = array<i64: 3, 2>}, {transform_indices = @transform_8, window_bounds = array<i64: 3, 8, 2>}, {transform_indices = @transform_9, window_bounds = array<i64: 8, 2>}]} {
    %c0 = arith.constant 0 : index
    %c0_0 = arith.constant 0 : index
    %0 = vector.load %arg6[%c0, %c0_0] : memref<8x512xbf16, #tpu.memory_space<vmem>>, vector<8x512xbf16>
    %c0_1 = arith.constant 0 : index
    %c0_2 = arith.constant 0 : index
    %1 = vector.load %arg7[%c0_1, %c0_2] : memref<8x1xf32, #tpu.memory_space<vmem>>, vector<8x1xf32>
    %2 = vector.shape_cast %1 : vector<8x1xf32> to vector<8x1xf32>
    %3 = vector.broadcast %2 : vector<8x1xf32> to vector<8x2xf32>
    %cst = arith.constant 0.000000e+00 : f32
    %4 = vector.broadcast %cst : f32 to vector<8x2xf32>
    %cst_3 = arith.constant 0.000000e+00 : f32
    %5 = vector.broadcast %cst_3 : f32 to vector<1x2xf32>
    %c0_4 = arith.constant 0 : index
    %c0_5 = arith.constant 0 : index
    %c0_6 = arith.constant 0 : index
    %6 = vector.load %arg2[%c0_4, %c0_5, %c0_6] : memref<3x512x24xbf16, #tpu.memory_space<vmem>>, vector<1x512x24xbf16>
    %7 = vector.shape_cast %6 : vector<1x512x24xbf16> to vector<512x24xbf16>
    %c0_7 = arith.constant 0 : index
    %c0_8 = arith.constant 0 : index
    %c0_9 = arith.constant 0 : index
    %8 = vector.load %arg1[%c0_7, %c0_8, %c0_9] : memref<3x24x2xbf16, #tpu.memory_space<vmem>>, vector<1x24x2xbf16>
    %9 = vector.shape_cast %8 : vector<1x24x2xbf16> to vector<24x2xbf16>
    %cst_10 = arith.constant dense<0.000000e+00> : vector<512x2xf32>
    %10 = tpu.matmul %7, %9, %cst_10 {dimension_numbers = #tpu.dot_dimension_numbers<[1], [0], [0], [1], [0, 0, 1, 1], [], []>} : vector<512x24xbf16>, vector<24x2xbf16>, vector<512x2xf32> -> vector<512x2xf32>
    %c0_11 = arith.constant 0 : index
    %c0_12 = arith.constant 0 : index
    %c0_13 = arith.constant 0 : index
    %11 = vector.load %arg3[%c0_11, %c0_12, %c0_13] : memref<3x512x1xf32, #tpu.memory_space<vmem>>, vector<1x512x1xf32>
    %12 = vector.shape_cast %11 : vector<1x512x1xf32> to vector<512x1xf32>
    %13 = vector.broadcast %12 : vector<512x1xf32> to vector<512x2xf32>
    %14 = arith.addf %10, %13 : vector<512x2xf32>
    %cst_14 = arith.constant 1.000000e-01 : f32
    %cst_15 = arith.constant 0.000000e+00 : f32
    %15 = vector.broadcast %cst_15 : f32 to vector<512x2xf32>
    %16 = arith.cmpf oge, %14, %15 : vector<512x2xf32>
    %17 = vector.broadcast %cst_14 : f32 to vector<512x2xf32>
    %18 = arith.mulf %17, %14 : vector<512x2xf32>
    %19 = arith.select %16, %14, %18 : vector<512x2xi1>, vector<512x2xf32>
    %20 = arith.truncf %19 : vector<512x2xf32> to vector<512x2xbf16>
    %c0_16 = arith.constant 0 : index
    %c0_17 = arith.constant 0 : index
    %c0_18 = arith.constant 0 : index
    %21 = vector.load %arg4[%c0_16, %c0_17, %c0_18] : memref<3x1x512xbf16, #tpu.memory_space<vmem>>, vector<1x1x512xbf16>
    %22 = vector.shape_cast %21 : vector<1x1x512xbf16> to vector<1x512xbf16>
    %cst_19 = arith.constant dense<0.000000e+00> : vector<1x2xf32>
    %23 = tpu.matmul %22, %20, %cst_19 {dimension_numbers = #tpu.dot_dimension_numbers<[1], [0], [0], [1], [0, 0, 1, 1], [], []>} : vector<1x512xbf16>, vector<512x2xbf16>, vector<1x2xf32> -> vector<1x2xf32>
    %c0_20 = arith.constant 0 : index
    %c0_21 = arith.constant 0 : index
    %c0_22 = arith.constant 0 : index
    %24 = vector.load %arg5[%c0_20, %c0_21, %c0_22] : memref<3x1x1xf32, #tpu.memory_space<vmem>>, vector<1x1x1xf32>
    %25 = vector.shape_cast %24 : vector<1x1x1xf32> to vector<1x1xf32>
    %26 = vector.broadcast %25 : vector<1x1xf32> to vector<1x2xf32>
    %27 = arith.addf %23, %26 : vector<1x2xf32>
    %28 = arith.negf %27 : vector<1x2xf32>
    %29 = math.exp %28 : vector<1x2xf32>
    %cst_23 = arith.constant 1.000000e+00 : f32
    %30 = vector.broadcast %cst_23 : f32 to vector<1x2xf32>
    %31 = arith.addf %30, %29 : vector<1x2xf32>
    %32 = arith.divf %30, %31 : vector<1x2xf32>
    %cst_24 = arith.constant dense<0.000000e+00> : vector<8x2xf32>
    %33 = tpu.matmul %0, %20, %cst_24 {dimension_numbers = #tpu.dot_dimension_numbers<[1], [0], [0], [1], [0, 0, 1, 1], [], []>} : vector<8x512xbf16>, vector<512x2xbf16>, vector<8x2xf32> -> vector<8x2xf32>
    %34 = arith.addf %33, %3 : vector<8x2xf32>
    %c0_25 = arith.constant 0 : index
    %c0_26 = arith.constant 0 : index
    %c0_27 = arith.constant 0 : index
    %35 = vector.load %arg9[%c0_25, %c0_26, %c0_27] : memref<3x8x2xf32, #tpu.memory_space<vmem>>, vector<1x8x2xf32>
    %36 = vector.shape_cast %35 : vector<1x8x2xf32> to vector<8x2xf32>
    %37 = vector.shape_cast %34 : vector<8x2xf32> to vector<1x8x2xf32>
    tpu.vector_store %arg9[%c0_25, %c0_26, %c0_27], %37 {strides = array<i32>} : memref<3x8x2xf32, #tpu.memory_space<vmem>>, vector<1x8x2xf32>,
    %c0_28 = arith.constant 0 : index
    %c0_29 = arith.constant 0 : index
    %38 = vector.load %arg8[%c0_28, %c0_29] : memref<3x2xf32, #tpu.memory_space<vmem>>, vector<1x2xf32>
    %cst_30 = arith.constant 1.000000e+00 : f32
    %39 = vector.broadcast %cst_30 : f32 to vector<1x2xf32>
    %40 = arith.subf %39, %38 : vector<1x2xf32>
    %41 = arith.mulf %40, %32 : vector<1x2xf32>
    %42 = arith.addf %41, %38 : vector<1x2xf32>
    %43 = vector.broadcast %42 : vector<1x2xf32> to vector<8x2xf32>
    %44 = arith.mulf %34, %43 : vector<8x2xf32>
    %45 = arith.addf %4, %44 : vector<8x2xf32>
    %46 = arith.addf %5, %42 : vector<1x2xf32>
    %c1 = arith.constant 1 : index
    %c0_31 = arith.constant 0 : index
    %c0_32 = arith.constant 0 : index
    %47 = vector.load %arg2[%c1, %c0_31, %c0_32] : memref<3x512x24xbf16, #tpu.memory_space<vmem>>, vector<1x512x24xbf16>
    %48 = vector.shape_cast %47 : vector<1x512x24xbf16> to vector<512x24xbf16>
    %c1_33 = arith.constant 1 : index
    %c0_34 = arith.constant 0 : index
    %c0_35 = arith.constant 0 : index
    %49 = vector.load %arg1[%c1_33, %c0_34, %c0_35] : memref<3x24x2xbf16, #tpu.memory_space<vmem>>, vector<1x24x2xbf16>
    %50 = vector.shape_cast %49 : vector<1x24x2xbf16> to vector<24x2xbf16>
    %cst_36 = arith.constant dense<0.000000e+00> : vector<512x2xf32>
    %51 = tpu.matmul %48, %50, %cst_36 {dimension_numbers = #tpu.dot_dimension_numbers<[1], [0], [0], [1], [0, 0, 1, 1], [], []>} : vector<512x24xbf16>, vector<24x2xbf16>, vector<512x2xf32> -> vector<512x2xf32>
    %c1_37 = arith.constant 1 : index
    %c0_38 = arith.constant 0 : index
    %c0_39 = arith.constant 0 : index
    %52 = vector.load %arg3[%c1_37, %c0_38, %c0_39] : memref<3x512x1xf32, #tpu.memory_space<vmem>>, vector<1x512x1xf32>
    %53 = vector.shape_cast %52 : vector<1x512x1xf32> to vector<512x1xf32>
    %54 = vector.broadcast %53 : vector<512x1xf32> to vector<512x2xf32>
    %55 = arith.addf %51, %54 : vector<512x2xf32>
    %cst_40 = arith.constant 1.000000e-01 : f32
    %cst_41 = arith.constant 0.000000e+00 : f32
    %56 = vector.broadcast %cst_41 : f32 to vector<512x2xf32>
    %57 = arith.cmpf oge, %55, %56 : vector<512x2xf32>
    %58 = vector.broadcast %cst_40 : f32 to vector<512x2xf32>
    %59 = arith.mulf %58, %55 : vector<512x2xf32>
    %60 = arith.select %57, %55, %59 : vector<512x2xi1>, vector<512x2xf32>
    %61 = arith.truncf %60 : vector<512x2xf32> to vector<512x2xbf16>
    %c1_42 = arith.constant 1 : index
    %c0_43 = arith.constant 0 : index
    %c0_44 = arith.constant 0 : index
    %62 = vector.load %arg4[%c1_42, %c0_43, %c0_44] : memref<3x1x512xbf16, #tpu.memory_space<vmem>>, vector<1x1x512xbf16>
    %63 = vector.shape_cast %62 : vector<1x1x512xbf16> to vector<1x512xbf16>
    %cst_45 = arith.constant dense<0.000000e+00> : vector<1x2xf32>
    %64 = tpu.matmul %63, %61, %cst_45 {dimension_numbers = #tpu.dot_dimension_numbers<[1], [0], [0], [1], [0, 0, 1, 1], [], []>} : vector<1x512xbf16>, vector<512x2xbf16>, vector<1x2xf32> -> vector<1x2xf32>
    %c1_46 = arith.constant 1 : index
    %c0_47 = arith.constant 0 : index
    %c0_48 = arith.constant 0 : index
    %65 = vector.load %arg5[%c1_46, %c0_47, %c0_48] : memref<3x1x1xf32, #tpu.memory_space<vmem>>, vector<1x1x1xf32>
    %66 = vector.shape_cast %65 : vector<1x1x1xf32> to vector<1x1xf32>
    %67 = vector.broadcast %66 : vector<1x1xf32> to vector<1x2xf32>
    %68 = arith.addf %64, %67 : vector<1x2xf32>
    %69 = arith.negf %68 : vector<1x2xf32>
    %70 = math.exp %69 : vector<1x2xf32>
    %cst_49 = arith.constant 1.000000e+00 : f32
    %71 = vector.broadcast %cst_49 : f32 to vector<1x2xf32>
    %72 = arith.addf %71, %70 : vector<1x2xf32>
    %73 = arith.divf %71, %72 : vector<1x2xf32>
    %cst_50 = arith.constant dense<0.000000e+00> : vector<8x2xf32>
    %74 = tpu.matmul %0, %61, %cst_50 {dimension_numbers = #tpu.dot_dimension_numbers<[1], [0], [0], [1], [0, 0, 1, 1], [], []>} : vector<8x512xbf16>, vector<512x2xbf16>, vector<8x2xf32> -> vector<8x2xf32>
    %75 = arith.addf %74, %3 : vector<8x2xf32>
    %c1_51 = arith.constant 1 : index
    %c0_52 = arith.constant 0 : index
    %c0_53 = arith.constant 0 : index
    %76 = vector.load %arg9[%c1_51, %c0_52, %c0_53] : memref<3x8x2xf32, #tpu.memory_space<vmem>>, vector<1x8x2xf32>
    %77 = vector.shape_cast %76 : vector<1x8x2xf32> to vector<8x2xf32>
    %78 = vector.shape_cast %75 : vector<8x2xf32> to vector<1x8x2xf32>
    tpu.vector_store %arg9[%c1_51, %c0_52, %c0_53], %78 {strides = array<i32>} : memref<3x8x2xf32, #tpu.memory_space<vmem>>, vector<1x8x2xf32>,
    %c1_54 = arith.constant 1 : index
    %c0_55 = arith.constant 0 : index
    %79 = vector.load %arg8[%c1_54, %c0_55] : memref<3x2xf32, #tpu.memory_space<vmem>>, vector<1x2xf32>
    %cst_56 = arith.constant 1.000000e+00 : f32
    %80 = vector.broadcast %cst_56 : f32 to vector<1x2xf32>
    %81 = arith.subf %80, %79 : vector<1x2xf32>
    %82 = arith.mulf %81, %73 : vector<1x2xf32>
    %83 = arith.addf %82, %79 : vector<1x2xf32>
    %84 = vector.broadcast %83 : vector<1x2xf32> to vector<8x2xf32>
    %85 = arith.mulf %75, %84 : vector<8x2xf32>
    %86 = arith.addf %45, %85 : vector<8x2xf32>
    %87 = arith.addf %46, %83 : vector<1x2xf32>
    %c2 = arith.constant 2 : index
    %c0_57 = arith.constant 0 : index
    %c0_58 = arith.constant 0 : index
    %88 = vector.load %arg2[%c2, %c0_57, %c0_58] : memref<3x512x24xbf16, #tpu.memory_space<vmem>>, vector<1x512x24xbf16>
    %89 = vector.shape_cast %88 : vector<1x512x24xbf16> to vector<512x24xbf16>
    %c2_59 = arith.constant 2 : index
    %c0_60 = arith.constant 0 : index
    %c0_61 = arith.constant 0 : index
    %90 = vector.load %arg1[%c2_59, %c0_60, %c0_61] : memref<3x24x2xbf16, #tpu.memory_space<vmem>>, vector<1x24x2xbf16>
    %91 = vector.shape_cast %90 : vector<1x24x2xbf16> to vector<24x2xbf16>
    %cst_62 = arith.constant dense<0.000000e+00> : vector<512x2xf32>
    %92 = tpu.matmul %89, %91, %cst_62 {dimension_numbers = #tpu.dot_dimension_numbers<[1], [0], [0], [1], [0, 0, 1, 1], [], []>} : vector<512x24xbf16>, vector<24x2xbf16>, vector<512x2xf32> -> vector<512x2xf32>
    %c2_63 = arith.constant 2 : index
    %c0_64 = arith.constant 0 : index
    %c0_65 = arith.constant 0 : index
    %93 = vector.load %arg3[%c2_63, %c0_64, %c0_65] : memref<3x512x1xf32, #tpu.memory_space<vmem>>, vector<1x512x1xf32>
    %94 = vector.shape_cast %93 : vector<1x512x1xf32> to vector<512x1xf32>
    %95 = vector.broadcast %94 : vector<512x1xf32> to vector<512x2xf32>
    %96 = arith.addf %92, %95 : vector<512x2xf32>
    %cst_66 = arith.constant 1.000000e-01 : f32
    %cst_67 = arith.constant 0.000000e+00 : f32
    %97 = vector.broadcast %cst_67 : f32 to vector<512x2xf32>
    %98 = arith.cmpf oge, %96, %97 : vector<512x2xf32>
    %99 = vector.broadcast %cst_66 : f32 to vector<512x2xf32>
    %100 = arith.mulf %99, %96 : vector<512x2xf32>
    %101 = arith.select %98, %96, %100 : vector<512x2xi1>, vector<512x2xf32>
    %102 = arith.truncf %101 : vector<512x2xf32> to vector<512x2xbf16>
    %c2_68 = arith.constant 2 : index
    %c0_69 = arith.constant 0 : index
    %c0_70 = arith.constant 0 : index
    %103 = vector.load %arg4[%c2_68, %c0_69, %c0_70] : memref<3x1x512xbf16, #tpu.memory_space<vmem>>, vector<1x1x512xbf16>
    %104 = vector.shape_cast %103 : vector<1x1x512xbf16> to vector<1x512xbf16>
    %cst_71 = arith.constant dense<0.000000e+00> : vector<1x2xf32>
    %105 = tpu.matmul %104, %102, %cst_71 {dimension_numbers = #tpu.dot_dimension_numbers<[1], [0], [0], [1], [0, 0, 1, 1], [], []>} : vector<1x512xbf16>, vector<512x2xbf16>, vector<1x2xf32> -> vector<1x2xf32>
    %c2_72 = arith.constant 2 : index
    %c0_73 = arith.constant 0 : index
    %c0_74 = arith.constant 0 : index
    %106 = vector.load %arg5[%c2_72, %c0_73, %c0_74] : memref<3x1x1xf32, #tpu.memory_space<vmem>>, vector<1x1x1xf32>
    %107 = vector.shape_cast %106 : vector<1x1x1xf32> to vector<1x1xf32>
    %108 = vector.broadcast %107 : vector<1x1xf32> to vector<1x2xf32>
    %109 = arith.addf %105, %108 : vector<1x2xf32>
    %110 = arith.negf %109 : vector<1x2xf32>
    %111 = math.exp %110 : vector<1x2xf32>
    %cst_75 = arith.constant 1.000000e+00 : f32
    %112 = vector.broadcast %cst_75 : f32 to vector<1x2xf32>
    %113 = arith.addf %112, %111 : vector<1x2xf32>
    %114 = arith.divf %112, %113 : vector<1x2xf32>
    %cst_76 = arith.constant dense<0.000000e+00> : vector<8x2xf32>
    %115 = tpu.matmul %0, %102, %cst_76 {dimension_numbers = #tpu.dot_dimension_numbers<[1], [0], [0], [1], [0, 0, 1, 1], [], []>} : vector<8x512xbf16>, vector<512x2xbf16>, vector<8x2xf32> -> vector<8x2xf32>
    %116 = arith.addf %115, %3 : vector<8x2xf32>
    %c2_77 = arith.constant 2 : index
    %c0_78 = arith.constant 0 : index
    %c0_79 = arith.constant 0 : index
    %117 = vector.load %arg9[%c2_77, %c0_78, %c0_79] : memref<3x8x2xf32, #tpu.memory_space<vmem>>, vector<1x8x2xf32>
    %118 = vector.shape_cast %117 : vector<1x8x2xf32> to vector<8x2xf32>
    %119 = vector.shape_cast %116 : vector<8x2xf32> to vector<1x8x2xf32>
    tpu.vector_store %arg9[%c2_77, %c0_78, %c0_79], %119 {strides = array<i32>} : memref<3x8x2xf32, #tpu.memory_space<vmem>>, vector<1x8x2xf32>,
    %c2_80 = arith.constant 2 : index
    %c0_81 = arith.constant 0 : index
    %120 = vector.load %arg8[%c2_80, %c0_81] : memref<3x2xf32, #tpu.memory_space<vmem>>, vector<1x2xf32>
    %cst_82 = arith.constant 1.000000e+00 : f32
    %121 = vector.broadcast %cst_82 : f32 to vector<1x2xf32>
    %122 = arith.subf %121, %120 : vector<1x2xf32>
    %123 = arith.mulf %122, %114 : vector<1x2xf32>
    %124 = arith.addf %123, %120 : vector<1x2xf32>
    %125 = vector.broadcast %124 : vector<1x2xf32> to vector<8x2xf32>
    %126 = arith.mulf %116, %125 : vector<8x2xf32>
    %127 = arith.addf %86, %126 : vector<8x2xf32>
    %128 = arith.addf %87, %124 : vector<1x2xf32>
    %cst_83 = arith.constant 9.99999971E-10 : f32
    %129 = vector.broadcast %cst_83 : f32 to vector<1x2xf32>
    %130 = arith.addf %128, %129 : vector<1x2xf32>
    %131 = vector.broadcast %130 : vector<1x2xf32> to vector<8x2xf32>
    %132 = arith.divf %127, %131 : vector<8x2xf32>
    %133 = arith.negf %132 : vector<8x2xf32>
    %134 = math.exp %133 : vector<8x2xf32>
    %cst_84 = arith.constant 1.000000e+00 : f32
    %135 = vector.broadcast %cst_84 : f32 to vector<8x2xf32>
    %136 = arith.addf %135, %134 : vector<8x2xf32>
    %137 = arith.divf %135, %136 : vector<8x2xf32>
    %c0_85 = arith.constant 0 : index
    %c0_86 = arith.constant 0 : index
    %138 = vector.load %arg10[%c0_85, %c0_86] : memref<8x2xf32, #tpu.memory_space<vmem>>, vector<8x2xf32>
    tpu.vector_store %arg10[%c0_85, %c0_86], %137 {strides = array<i32>} : memref<8x2xf32, #tpu.memory_space<vmem>>, vector<8x2xf32>,
    return
  }
  func.func @transform_0(%arg0: i32) -> (i32, i32, i32) {
    %c0_i32 = arith.constant 0 : i32
    %c0_i32_0 = arith.constant 0 : i32
    %c0_i32_1 = arith.constant 0 : i32
    return %c0_i32, %c0_i32_0, %arg0 : i32, i32, i32
  }
  func.func @transform_1(%arg0: i32) -> (i32, i32, i32) {
    %c0_i32 = arith.constant 0 : i32
    %c0_i32_0 = arith.constant 0 : i32
    %c0_i32_1 = arith.constant 0 : i32
    %c0_i32_2 = arith.constant 0 : i32
    return %c0_i32, %c0_i32_0, %c0_i32_1 : i32, i32, i32
  }
  func.func @transform_2(%arg0: i32) -> (i32, i32, i32) {
    %c0_i32 = arith.constant 0 : i32
    %c0_i32_0 = arith.constant 0 : i32
    %c0_i32_1 = arith.constant 0 : i32
    %c0_i32_2 = arith.constant 0 : i32
    return %c0_i32, %c0_i32_0, %c0_i32_1 : i32, i32, i32
  }
  func.func @transform_3(%arg0: i32) -> (i32, i32, i32) {
    %c0_i32 = arith.constant 0 : i32
    %c0_i32_0 = arith.constant 0 : i32
    %c0_i32_1 = arith.constant 0 : i32
    %c0_i32_2 = arith.constant 0 : i32
    return %c0_i32, %c0_i32_0, %c0_i32_1 : i32, i32, i32
  }
  func.func @transform_4(%arg0: i32) -> (i32, i32, i32) {
    %c0_i32 = arith.constant 0 : i32
    %c0_i32_0 = arith.constant 0 : i32
    %c0_i32_1 = arith.constant 0 : i32
    %c0_i32_2 = arith.constant 0 : i32
    return %c0_i32, %c0_i32_0, %c0_i32_1 : i32, i32, i32
  }
  func.func @transform_5(%arg0: i32) -> (i32, i32) {
    %c0_i32 = arith.constant 0 : i32
    %c0_i32_0 = arith.constant 0 : i32
    %c0_i32_1 = arith.constant 0 : i32
    return %c0_i32, %c0_i32_0 : i32, i32
  }
  func.func @transform_6(%arg0: i32) -> (i32, i32) {
    %c0_i32 = arith.constant 0 : i32
    %c0_i32_0 = arith.constant 0 : i32
    %c0_i32_1 = arith.constant 0 : i32
    return %c0_i32, %c0_i32_0 : i32, i32
  }
  func.func @transform_7(%arg0: i32) -> (i32, i32) {
    %c0_i32 = arith.constant 0 : i32
    %c0_i32_0 = arith.constant 0 : i32
    return %c0_i32, %arg0 : i32, i32
  }
  func.func @transform_8(%arg0: i32) -> (i32, i32, i32) {
    %c0_i32 = arith.constant 0 : i32
    %c0_i32_0 = arith.constant 0 : i32
    %c0_i32_1 = arith.constant 0 : i32
    return %c0_i32, %c0_i32_0, %arg0 : i32, i32, i32
  }
  func.func @transform_9(%arg0: i32) -> (i32, i32) {
    %c0_i32 = arith.constant 0 : i32
    %c0_i32_0 = arith.constant 0 : i32
    return %c0_i32, %arg0 : i32, i32
  }
}

</mosaic_0001>

<llo_original>
// kernel: fused_head.1
$region0: #{fused_head.1}
  #allocation0 [shape = 'u32[]', space=smem, size = 0x4, offset = 0x4, fixed_abs, tag = 'smem constant byte address 0x4 - core index']
  #allocation1 [shape = 'u32[144,128]{1,0:T(1,128)}', space=vmem, size = 0x12000, scoped, tag = 'internal scratch']
  %s0 = inlined_call_operand.vmem [shape: bf16[3,24,2], index: 0, kind: input, shape index: {}]
  %s1 = inlined_call_operand.vmem [shape: bf16[3,512,24], index: 1, kind: input, shape index: {}]
  %s2 = inlined_call_operand.vmem [shape: f32[3,512,1], index: 2, kind: input, shape index: {}]
  %s3 = inlined_call_operand.vmem [shape: bf16[3,1,512], index: 3, kind: input, shape index: {}]
  %s4 = inlined_call_operand.vmem [shape: f32[3,1,1], index: 4, kind: input, shape index: {}]
  %s5 = inlined_call_operand.vmem [shape: bf16[8,512], index: 5, kind: input, shape index: {}]
  %s6 = inlined_call_operand.vmem [shape: f32[8,1], index: 6, kind: input, shape index: {}]
  %s7 = inlined_call_operand.vmem [shape: f32[3,2], index: 7, kind: input, shape index: {}]
  %s8 = inlined_call_operand.vmem [shape: f32[3,8,2], index: 8, kind: output, shape index: {0}]
  %s9 = inlined_call_operand.vmem [shape: f32[8,2], index: 9, kind: output, shape index: {1}]
  %10 = xla_tuple %s8, %s9
  %s11 = sld [smem:[#allocation0]]
  $region50: #{fused_head.1} parent=0
    _
  %s13 = ssub.s32 1, %s11
  %s14 = scalar_select 0, %s13, %s11
  // Predicated region
  $region2: #{fused_head.1} parent=0 // pred_check
    _
  $region3: #{fused_head.1} parent=0 // pred_check_branch
    %16 = sbr.rel (0) target = $region5
  $region4: #{fused_head.1} parent=0 // pred_region
    _
  $region5: #{fused_head.1} parent=0 // pred_fallthru
    _
  // Predicated region
  $region6: #{fused_head.1} parent=0 // pred_check
    _
  $region7: #{fused_head.1} parent=0 // pred_check_branch
    %18 = sbr.rel (0) target = $region9
  $region8: #{fused_head.1} parent=0 // pred_region
    _
  $region9: #{fused_head.1} parent=0 // pred_fallthru
    _
  // Predicated region
  $region10: #{fused_head.1} parent=0 // pred_check
    _
  $region11: #{fused_head.1} parent=0 // pred_check_branch
    %20 = sbr.rel (0) target = $region13
  $region12: #{fused_head.1} parent=0 // pred_region
    _
  $region13: #{fused_head.1} parent=0 // pred_fallthru
    _
  // Predicated region
  $region14: #{fused_head.1} parent=0 // pred_check
    _
  $region15: #{fused_head.1} parent=0 // pred_check_branch
    %22 = sbr.rel (0) target = $region17
  $region16: #{fused_head.1} parent=0 // pred_region
    _
  $region17: #{fused_head.1} parent=0 // pred_fallthru
    _
  // Predicated region
  $region18: #{fused_head.1} parent=0 // pred_check
    _
  $region19: #{fused_head.1} parent=0 // pred_check_branch
    %24 = sbr.rel (0) target = $region21
  $region20: #{fused_head.1} parent=0 // pred_region
    _
  $region21: #{fused_head.1} parent=0 // pred_fallthru
    _
  // Predicated region
  $region22: #{fused_head.1} parent=0 // pred_check
    _
  $region23: #{fused_head.1} parent=0 // pred_check_branch
    %26 = sbr.rel (0) target = $region25
  $region24: #{fused_head.1} parent=0 // pred_region
    _
  $region25: #{fused_head.1} parent=0 // pred_fallthru
    _
  // Predicated region
  $region26: #{fused_head.1} parent=0 // pred_check
    _
  $region27: #{fused_head.1} parent=0 // pred_check_branch
    %28 = sbr.rel (0) target = $region29
  $region28: #{fused_head.1} parent=0 // pred_region
    _
  $region29: #{fused_head.1} parent=0 // pred_fallthru
    _
  // Predicated region
  $region30: #{fused_head.1} parent=0 // pred_check
    _
  $region31: #{fused_head.1} parent=0 // pred_check_branch
    %30 = sbr.rel (0) target = $region33
  $region32: #{fused_head.1} parent=0 // pred_region
    _
  $region33: #{fused_head.1} parent=0 // pred_fallthru
    _
  %v32 = vld [vmem:[%s5] sm:$0xff]
  %v33 = vld [vmem:[%s5 + $0x8] sm:$0xff]
  %v34 = vld [vmem:[%s6] sm:$0xff]
  %36 = vset.pattern.permute.xlu0 0
  %37 = vperm.xlu0 %36, %v34
  %v38 = vpop.permute.xlu0 %37
  %v40 = vld [vmem:[%s1] sm:$0xf]
  %v41 = vld [vmem:[%s1 + $0x4] sm:$0xf]
  %v42 = vld [vmem:[%s1 + $0x8] sm:$0xf]
  %v43 = vld [vmem:[%s1 + $0xc] sm:$0xf]
  %v44 = vld [vmem:[%s1 + $0x10] sm:$0xf]
  %v45 = vld [vmem:[%s1 + $0x14] sm:$0xf]
  %v46 = vld [vmem:[%s1 + $0x18] sm:$0xf]
  %v47 = vld [vmem:[%s1 + $0x1c] sm:$0xf]
  %v48 = vld [vmem:[%s1 + $0x20] sm:$0xf]
  %v49 = vld [vmem:[%s1 + $0x24] sm:$0xf]
  %v50 = vld [vmem:[%s1 + $0x28] sm:$0xf]
  %v51 = vld [vmem:[%s1 + $0x2c] sm:$0xf]
  %v52 = vld [vmem:[%s1 + $0x30] sm:$0xf]
  %v53 = vld [vmem:[%s1 + $0x34] sm:$0xf]
  %v54 = vld [vmem:[%s1 + $0x38] sm:$0xf]
  %v55 = vld [vmem:[%s1 + $0x3c] sm:$0xf]
  %v56 = vld [vmem:[%s1 + $0x40] sm:$0xf]
  %v57 = vld [vmem:[%s1 + $0x44] sm:$0xf]
  %v58 = vld [vmem:[%s1 + $0x48] sm:$0xf]
  %v59 = vld [vmem:[%s1 + $0x4c] sm:$0xf]
  %v60 = vld [vmem:[%s1 + $0x50] sm:$0xf]
  %v61 = vld [vmem:[%s1 + $0x54] sm:$0xf]
  %v62 = vld [vmem:[%s1 + $0x58] sm:$0xf]
  %v63 = vld [vmem:[%s1 + $0x5c] sm:$0xf]
  %v64 = vld [vmem:[%s1 + $0x60] sm:$0xf]
  %v65 = vld [vmem:[%s1 + $0x64] sm:$0xf]
  %v66 = vld [vmem:[%s1 + $0x68] sm:$0xf]
  %v67 = vld [vmem:[%s1 + $0x6c] sm:$0xf]
  %v68 = vld [vmem:[%s1 + $0x70] sm:$0xf]
  %v69 = vld [vmem:[%s1 + $0x74] sm:$0xf]
  %v70 = vld [vmem:[%s1 + $0x78] sm:$0xf]
  %v71 = vld [vmem:[%s1 + $0x7c] sm:$0xf]
  %v72 = vld [vmem:[%s1 + $0x80] sm:$0xf]
  %v73 = vld [vmem:[%s1 + $0x84] sm:$0xf]
  %v74 = vld [vmem:[%s1 + $0x88] sm:$0xf]
  %v75 = vld [vmem:[%s1 + $0x8c] sm:$0xf]
  %v76 = vld [vmem:[%s1 + $0x90] sm:$0xf]
  %v77 = vld [vmem:[%s1 + $0x94] sm:$0xf]
  %v78 = vld [vmem:[%s1 + $0x98] sm:$0xf]
  %v79 = vld [vmem:[%s1 + $0x9c] sm:$0xf]
  %v80 = vld [vmem:[%s1 + $0xa0] sm:$0xf]
  %v81 = vld [vmem:[%s1 + $0xa4] sm:$0xf]
  %v82 = vld [vmem:[%s1 + $0xa8] sm:$0xf]
  %v83 = vld [vmem:[%s1 + $0xac] sm:$0xf]
  %v84 = vld [vmem:[%s1 + $0xb0] sm:$0xf]
  %v85 = vld [vmem:[%s1 + $0xb4] sm:$0xf]
  %v86 = vld [vmem:[%s1 + $0xb8] sm:$0xf]
  %v87 = vld [vmem:[%s1 + $0xbc] sm:$0xf]
  %v88 = vld [vmem:[%s1 + $0xc0] sm:$0xf]
  %v89 = vld [vmem:[%s1 + $0xc4] sm:$0xf]
  %v90 = vld [vmem:[%s1 + $0xc8] sm:$0xf]
  %v91 = vld [vmem:[%s1 + $0xcc] sm:$0xf]
  %v92 = vld [vmem:[%s1 + $0xd0] sm:$0xf]
  %v93 = vld [vmem:[%s1 + $0xd4] sm:$0xf]
  %v94 = vld [vmem:[%s1 + $0xd8] sm:$0xf]
  %v95 = vld [vmem:[%s1 + $0xdc] sm:$0xf]
  %v96 = vld [vmem:[%s1 + $0xe0] sm:$0xf]
  %v97 = vld [vmem:[%s1 + $0xe4] sm:$0xf]
  %v98 = vld [vmem:[%s1 + $0xe8] sm:$0xf]
  %v99 = vld [vmem:[%s1 + $0xec] sm:$0xf]
  %v100 = vld [vmem:[%s1 + $0xf0] sm:$0xf]
  %v101 = vld [vmem:[%s1 + $0xf4] sm:$0xf]
  %v102 = vld [vmem:[%s1 + $0xf8] sm:$0xf]
  %v103 = vld [vmem:[%s1 + $0xfc] sm:$0xf]
  %v104 = vld [vmem:[%s0] sm:$0xf]
  %v105 = vld [vmem:[%s0 + $0x4] sm:$0xf]
  %v106 = vld [vmem:[%s0 + $0x8] sm:$0xf]
  %v107 = vld [vmem:[%s2] sm:$0xff]
  %v108 = vld [vmem:[%s2 + $0x8] sm:$0xff]
  %v109 = vld [vmem:[%s2 + $0x10] sm:$0xff]
  %v110 = vld [vmem:[%s2 + $0x18] sm:$0xff]
  %v111 = vld [vmem:[%s2 + $0x20] sm:$0xff]
  %v112 = vld [vmem:[%s2 + $0x28] sm:$0xff]
  %v113 = vld [vmem:[%s2 + $0x30] sm:$0xff]
  %v114 = vld [vmem:[%s2 + $0x38] sm:$0xff]
  %v115 = vld [vmem:[%s2 + $0x40] sm:$0xff]
  %v116 = vld [vmem:[%s2 + $0x48] sm:$0xff]
  %v117 = vld [vmem:[%s2 + $0x50] sm:$0xff]
  %v118 = vld [vmem:[%s2 + $0x58] sm:$0xff]
  %v119 = vld [vmem:[%s2 + $0x60] sm:$0xff]
  %v120 = vld [vmem:[%s2 + $0x68] sm:$0xff]
  %v121 = vld [vmem:[%s2 + $0x70] sm:$0xff]
  %v122 = vld [vmem:[%s2 + $0x78] sm:$0xff]
  %v123 = vld [vmem:[%s2 + $0x80] sm:$0xff]
  %v124 = vld [vmem:[%s2 + $0x88] sm:$0xff]
  %v125 = vld [vmem:[%s2 + $0x90] sm:$0xff]
  %v126 = vld [vmem:[%s2 + $0x98] sm:$0xff]
  %v127 = vld [vmem:[%s2 + $0xa0] sm:$0xff]
  %v128 = vld [vmem:[%s2 + $0xa8] sm:$0xff]
  %v129 = vld [vmem:[%s2 + $0xb0] sm:$0xff]
  %v130 = vld [vmem:[%s2 + $0xb8] sm:$0xff]
  %v131 = vld [vmem:[%s2 + $0xc0] sm:$0xff]
  %v132 = vld [vmem:[%s2 + $0xc8] sm:$0xff]
  %v133 = vld [vmem:[%s2 + $0xd0] sm:$0xff]
  %v134 = vld [vmem:[%s2 + $0xd8] sm:$0xff]
  %v135 = vld [vmem:[%s2 + $0xe0] sm:$0xff]
  %v136 = vld [vmem:[%s2 + $0xe8] sm:$0xff]
  %v137 = vld [vmem:[%s2 + $0xf0] sm:$0xff]
  %v138 = vld [vmem:[%s2 + $0xf8] sm:$0xff]
  %v139 = vld [vmem:[%s2 + $0x100] sm:$0xff]
  %v140 = vld [vmem:[%s2 + $0x108] sm:$0xff]
  %v141 = vld [vmem:[%s2 + $0x110] sm:$0xff]
  %v142 = vld [vmem:[%s2 + $0x118] sm:$0xff]
  %v143 = vld [vmem:[%s2 + $0x120] sm:$0xff]
  %v144 = vld [vmem:[%s2 + $0x128] sm:$0xff]
  %v145 = vld [vmem:[%s2 + $0x130] sm:$0xff]
  %v146 = vld [vmem:[%s2 + $0x138] sm:$0xff]
  %v147 = vld [vmem:[%s2 + $0x140] sm:$0xff]
  %v148 = vld [vmem:[%s2 + $0x148] sm:$0xff]
  %v149 = vld [vmem:[%s2 + $0x150] sm:$0xff]
  %v150 = vld [vmem:[%s2 + $0x158] sm:$0xff]
  %v151 = vld [vmem:[%s2 + $0x160] sm:$0xff]
  %v152 = vld [vmem:[%s2 + $0x168] sm:$0xff]
  %v153 = vld [vmem:[%s2 + $0x170] sm:$0xff]
  %v154 = vld [vmem:[%s2 + $0x178] sm:$0xff]
  %v155 = vld [vmem:[%s2 + $0x180] sm:$0xff]
  %v156 = vld [vmem:[%s2 + $0x188] sm:$0xff]
  %v157 = vld [vmem:[%s2 + $0x190] sm:$0xff]
  %v158 = vld [vmem:[%s2 + $0x198] sm:$0xff]
  %v159 = vld [vmem:[%s2 + $0x1a0] sm:$0xff]
  %v160 = vld [vmem:[%s2 + $0x1a8] sm:$0xff]
  %v161 = vld [vmem:[%s2 + $0x1b0] sm:$0xff]
  %v162 = vld [vmem:[%s2 + $0x1b8] sm:$0xff]
  %v163 = vld [vmem:[%s2 + $0x1c0] sm:$0xff]
  %v164 = vld [vmem:[%s2 + $0x1c8] sm:$0xff]
  %v165 = vld [vmem:[%s2 + $0x1d0] sm:$0xff]
  %v166 = vld [vmem:[%s2 + $0x1d8] sm:$0xff]
  %v167 = vld [vmem:[%s2 + $0x1e0] sm:$0xff]
  %v168 = vld [vmem:[%s2 + $0x1e8] sm:$0xff]
  %v169 = vld [vmem:[%s2 + $0x1f0] sm:$0xff]
  %v170 = vld [vmem:[%s2 + $0x1f8] sm:$0xff]
  %172 = vset.pattern.permute.xlu0 0
  %173 = vperm.xlu0 %172, %v107
  %v174 = vpop.permute.xlu0 %173
  %177 = vset.pattern.permute.xlu0 0
  %178 = vperm.xlu0 %177, %v108
  %v179 = vpop.permute.xlu0 %178
  %182 = vset.pattern.permute.xlu0 0
  %183 = vperm.xlu0 %182, %v109
  %v184 = vpop.permute.xlu0 %183
  %187 = vset.pattern.permute.xlu0 0
  %188 = vperm.xlu0 %187, %v110
  %v189 = vpop.permute.xlu0 %188
  %192 = vset.pattern.permute.xlu0 0
  %193 = vperm.xlu0 %192, %v111
  %v194 = vpop.permute.xlu0 %193
  %197 = vset.pattern.permute.xlu0 0
  %198 = vperm.xlu0 %197, %v112
  %v199 = vpop.permute.xlu0 %198
  %202 = vset.pattern.permute.xlu0 0
  %203 = vperm.xlu0 %202, %v113
  %v204 = vpop.permute.xlu0 %203
  %207 = vset.pattern.permute.xlu0 0
  %208 = vperm.xlu0 %207, %v114
  %v209 = vpop.permute.xlu0 %208
  %212 = vset.pattern.permute.xlu0 0
  %213 = vperm.xlu0 %212, %v115
  %v214 = vpop.permute.xlu0 %213
  %217 = vset.pattern.permute.xlu0 0
  %218 = vperm.xlu0 %217, %v116
  %v219 = vpop.permute.xlu0 %218
  %222 = vset.pattern.permute.xlu0 0
  %223 = vperm.xlu0 %222, %v117
  %v224 = vpop.permute.xlu0 %223
  %227 = vset.pattern.permute.xlu0 0
  %228 = vperm.xlu0 %227, %v118
  %v229 = vpop.permute.xlu0 %228
  %232 = vset.pattern.permute.xlu0 0
  %233 = vperm.xlu0 %232, %v119
  %v234 = vpop.permute.xlu0 %233
  %237 = vset.pattern.permute.xlu0 0
  %238 = vperm.xlu0 %237, %v120
  %v239 = vpop.permute.xlu0 %238
  %242 = vset.pattern.permute.xlu0 0
  %243 = vperm.xlu0 %242, %v121
  %v244 = vpop.permute.xlu0 %243
  %247 = vset.pattern.permute.xlu0 0
  %248 = vperm.xlu0 %247, %v122
  %v249 = vpop.permute.xlu0 %248
  %252 = vset.pattern.permute.xlu0 0
  %253 = vperm.xlu0 %252, %v123
  %v254 = vpop.permute.xlu0 %253
  %257 = vset.pattern.permute.xlu0 0
  %258 = vperm.xlu0 %257, %v124
  %v259 = vpop.permute.xlu0 %258
  %262 = vset.pattern.permute.xlu0 0
  %263 = vperm.xlu0 %262, %v125
  %v264 = vpop.permute.xlu0 %263
  %267 = vset.pattern.permute.xlu0 0
  %268 = vperm.xlu0 %267, %v126
  %v269 = vpop.permute.xlu0 %268
  %272 = vset.pattern.permute.xlu0 0
  %273 = vperm.xlu0 %272, %v127
  %v274 = vpop.permute.xlu0 %273
  %277 = vset.pattern.permute.xlu0 0
  %278 = vperm.xlu0 %277, %v128
  %v279 = vpop.permute.xlu0 %278
  %282 = vset.pattern.permute.xlu0 0
  %283 = vperm.xlu0 %282, %v129
  %v284 = vpop.permute.xlu0 %283
  %287 = vset.pattern.permute.xlu0 0
  %288 = vperm.xlu0 %287, %v130
  %v289 = vpop.permute.xlu0 %288
  %292 = vset.pattern.permute.xlu0 0
  %293 = vperm.xlu0 %292, %v131
  %v294 = vpop.permute.xlu0 %293
  %297 = vset.pattern.permute.xlu0 0
  %298 = vperm.xlu0 %297, %v132
  %v299 = vpop.permute.xlu0 %298
  %302 = vset.pattern.permute.xlu0 0
  %303 = vperm.xlu0 %302, %v133
  %v304 = vpop.permute.xlu0 %303
  %307 = vset.pattern.permute.xlu0 0
  %308 = vperm.xlu0 %307, %v134
  %v309 = vpop.permute.xlu0 %308
  %312 = vset.pattern.permute.xlu0 0
  %313 = vperm.xlu0 %312, %v135
  %v314 = vpop.permute.xlu0 %313
  %317 = vset.pattern.permute.xlu0 0
  %318 = vperm.xlu0 %317, %v136
  %v319 = vpop.permute.xlu0 %318
  %322 = vset.pattern.permute.xlu0 0
  %323 = vperm.xlu0 %322, %v137
  %v324 = vpop.permute.xlu0 %323
  %327 = vset.pattern.permute.xlu0 0
  %328 = vperm.xlu0 %327, %v138
  %v329 = vpop.permute.xlu0 %328
  %332 = vset.pattern.permute.xlu0 0
  %333 = vperm.xlu0 %332, %v139
  %v334 = vpop.permute.xlu0 %333
  %337 = vset.pattern.permute.xlu0 0
  %338 = vperm.xlu0 %337, %v140
  %v339 = vpop.permute.xlu0 %338
  %342 = vset.pattern.permute.xlu0 0
  %343 = vperm.xlu0 %342, %v141
  %v344 = vpop.permute.xlu0 %343
  %347 = vset.pattern.permute.xlu0 0
  %348 = vperm.xlu0 %347, %v142
  %v349 = vpop.permute.xlu0 %348
  %352 = vset.pattern.permute.xlu0 0
  %353 = vperm.xlu0 %352, %v143
  %v354 = vpop.permute.xlu0 %353
  %357 = vset.pattern.permute.xlu0 0
  %358 = vperm.xlu0 %357, %v144
  %v359 = vpop.permute.xlu0 %358
  %362 = vset.pattern.permute.xlu0 0
  %363 = vperm.xlu0 %362, %v145
  %v364 = vpop.permute.xlu0 %363
  %367 = vset.pattern.permute.xlu0 0
  %368 = vperm.xlu0 %367, %v146
  %v369 = vpop.permute.xlu0 %368
  %372 = vset.pattern.permute.xlu0 0
  %373 = vperm.xlu0 %372, %v147
  %v374 = vpop.permute.xlu0 %373
  %377 = vset.pattern.permute.xlu0 0
  %378 = vperm.xlu0 %377, %v148
  %v379 = vpop.permute.xlu0 %378
  %382 = vset.pattern.permute.xlu0 0
  %383 = vperm.xlu0 %382, %v149
  %v384 = vpop.permute.xlu0 %383
  %387 = vset.pattern.permute.xlu0 0
  %388 = vperm.xlu0 %387, %v150
  %v389 = vpop.permute.xlu0 %388
  %392 = vset.pattern.permute.xlu0 0
  %393 = vperm.xlu0 %392, %v151
  %v394 = vpop.permute.xlu0 %393
  %397 = vset.pattern.permute.xlu0 0
  %398 = vperm.xlu0 %397, %v152
  %v399 = vpop.permute.xlu0 %398
  %402 = vset.pattern.permute.xlu0 0
  %403 = vperm.xlu0 %402, %v153
  %v404 = vpop.permute.xlu0 %403
  %407 = vset.pattern.permute.xlu0 0
  %408 = vperm.xlu0 %407, %v154
  %v409 = vpop.permute.xlu0 %408
  %412 = vset.pattern.permute.xlu0 0
  %413 = vperm.xlu0 %412, %v155
  %v414 = vpop.permute.xlu0 %413
  %417 = vset.pattern.permute.xlu0 0
  %418 = vperm.xlu0 %417, %v156
  %v419 = vpop.permute.xlu0 %418
  %422 = vset.pattern.permute.xlu0 0
  %423 = vperm.xlu0 %422, %v157
  %v424 = vpop.permute.xlu0 %423
  %427 = vset.pattern.permute.xlu0 0
  %428 = vperm.xlu0 %427, %v158
  %v429 = vpop.permute.xlu0 %428
  %432 = vset.pattern.permute.xlu0 0
  %433 = vperm.xlu0 %432, %v159
  %v434 = vpop.permute.xlu0 %433
  %437 = vset.pattern.permute.xlu0 0
  %438 = vperm.xlu0 %437, %v160
  %v439 = vpop.permute.xlu0 %438
  %442 = vset.pattern.permute.xlu0 0
  %443 = vperm.xlu0 %442, %v161
  %v444 = vpop.permute.xlu0 %443
  %447 = vset.pattern.permute.xlu0 0
  %448 = vperm.xlu0 %447, %v162
  %v449 = vpop.permute.xlu0 %448
  %452 = vset.pattern.permute.xlu0 0
  %453 = vperm.xlu0 %452, %v163
  %v454 = vpop.permute.xlu0 %453
  %457 = vset.pattern.permute.xlu0 0
  %458 = vperm.xlu0 %457, %v164
  %v459 = vpop.permute.xlu0 %458
  %462 = vset.pattern.permute.xlu0 0
  %463 = vperm.xlu0 %462, %v165
  %v464 = vpop.permute.xlu0 %463
  %467 = vset.pattern.permute.xlu0 0
  %468 = vperm.xlu0 %467, %v166
  %v469 = vpop.permute.xlu0 %468
  %472 = vset.pattern.permute.xlu0 0
  %473 = vperm.xlu0 %472, %v167
  %v474 = vpop.permute.xlu0 %473
  %477 = vset.pattern.permute.xlu0 0
  %478 = vperm.xlu0 %477, %v168
  %v479 = vpop.permute.xlu0 %478
  %482 = vset.pattern.permute.xlu0 0
  %483 = vperm.xlu0 %482, %v169
  %v484 = vpop.permute.xlu0 %483
  %487 = vset.pattern.permute.xlu0 0
  %488 = vperm.xlu0 %487, %v170
  %v489 = vpop.permute.xlu0 %488
  %v555 = vunpack.c.l.b16 %v40
  %v556 = vunpack.c.l.b16 %v41
  %v557 = vunpack.c.l.b16 %v42
  %v558 = vunpack.c.l.b16 %v43
  %v559 = vunpack.c.l.b16 %v44
  %v560 = vunpack.c.l.b16 %v45
  %v561 = vunpack.c.l.b16 %v46
  %v562 = vunpack.c.l.b16 %v47
  %v563 = vunpack.c.l.b16 %v48
  %v564 = vunpack.c.l.b16 %v49
  %v565 = vunpack.c.l.b16 %v50
  %v566 = vunpack.c.l.b16 %v51
  %v567 = vunpack.c.l.b16 %v52
  %v568 = vunpack.c.l.b16 %v53
  %v569 = vunpack.c.l.b16 %v54
  %v570 = vunpack.c.l.b16 %v55
  %v571 = vunpack.c.l.b16 %v56
  %v572 = vunpack.c.l.b16 %v57
  %v573 = vunpack.c.l.b16 %v58
  %v574 = vunpack.c.l.b16 %v59
  %v575 = vunpack.c.l.b16 %v60
  %v576 = vunpack.c.l.b16 %v61
  %v577 = vunpack.c.l.b16 %v62
  %v578 = vunpack.c.l.b16 %v63
  %v579 = vunpack.c.l.b16 %v64
  %v580 = vunpack.c.l.b16 %v65
  %v581 = vunpack.c.l.b16 %v66
  %v582 = vunpack.c.l.b16 %v67
  %v583 = vunpack.c.l.b16 %v68
  %v584 = vunpack.c.l.b16 %v69
  %v585 = vunpack.c.l.b16 %v70
  %v586 = vunpack.c.l.b16 %v71
  %v587 = vunpack.c.l.b16 %v72
  %v588 = vunpack.c.l.b16 %v73
  %v589 = vunpack.c.l.b16 %v74
  %v590 = vunpack.c.l.b16 %v75
  %v591 = vunpack.c.l.b16 %v76
  %v592 = vunpack.c.l.b16 %v77
  %v593 = vunpack.c.l.b16 %v78
  %v594 = vunpack.c.l.b16 %v79
  %v595 = vunpack.c.l.b16 %v80
  %v596 = vunpack.c.l.b16 %v81
  %v597 = vunpack.c.l.b16 %v82
  %v598 = vunpack.c.l.b16 %v83
  %v599 = vunpack.c.l.b16 %v84
  %v600 = vunpack.c.l.b16 %v85
  %v601 = vunpack.c.l.b16 %v86
  %v602 = vunpack.c.l.b16 %v87
  %v603 = vunpack.c.l.b16 %v88
  %v604 = vunpack.c.l.b16 %v89
  %v605 = vunpack.c.l.b16 %v90
  %v606 = vunpack.c.l.b16 %v91
  %v607 = vunpack.c.l.b16 %v92
  %v608 = vunpack.c.l.b16 %v93
  %v609 = vunpack.c.l.b16 %v94
  %v610 = vunpack.c.l.b16 %v95
  %v611 = vunpack.c.l.b16 %v96
  %v612 = vunpack.c.l.b16 %v97
  %v613 = vunpack.c.l.b16 %v98
  %v614 = vunpack.c.l.b16 %v99
  %v615 = vunpack.c.l.b16 %v100
  %v616 = vunpack.c.l.b16 %v101
  %v617 = vunpack.c.l.b16 %v102
  %v618 = vunpack.c.l.b16 %v103
  %v619 = vpack.c.b16 %v556, %v555
  %v620 = vpack.c.b16 %v558, %v557
  %v621 = vpack.c.b16 %v560, %v559
  %v622 = vpack.c.b16 %v562, %v561
  %v623 = vpack.c.b16 %v564, %v563
  %v624 = vpack.c.b16 %v566, %v565
  %v625 = vpack.c.b16 %v568, %v567
  %v626 = vpack.c.b16 %v570, %v569
  %v627 = vpack.c.b16 %v572, %v571
  %v628 = vpack.c.b16 %v574, %v573
  %v629 = vpack.c.b16 %v576, %v575
  %v630 = vpack.c.b16 %v578, %v577
  %v631 = vpack.c.b16 %v580, %v579
  %v632 = vpack.c.b16 %v582, %v581
  %v633 = vpack.c.b16 %v584, %v583
  %v634 = vpack.c.b16 %v586, %v585
  %v635 = vpack.c.b16 %v588, %v587
  %v636 = vpack.c.b16 %v590, %v589
  %v637 = vpack.c.b16 %v592, %v591
  %v638 = vpack.c.b16 %v594, %v593
  %v639 = vpack.c.b16 %v596, %v595
  %v640 = vpack.c.b16 %v598, %v597
  %v641 = vpack.c.b16 %v600, %v599
  %v642 = vpack.c.b16 %v602, %v601
  %v643 = vpack.c.b16 %v604, %v603
  %v644 = vpack.c.b16 %v606, %v605
  %v645 = vpack.c.b16 %v608, %v607
  %v646 = vpack.c.b16 %v610, %v609
  %v647 = vpack.c.b16 %v612, %v611
  %v648 = vpack.c.b16 %v614, %v613
  %v649 = vpack.c.b16 %v616, %v615
  %v650 = vpack.c.b16 %v618, %v617
  %v654 = vunpack.c.l.b16 %v104
  %v655 = vunpack.c.l.b16 %v105
  %v656 = vunpack.c.l.b16 %v106
  %v657 = vpack.c.b16 %v655, %v654
  %v658 = vpack.c.b16 %v656, %v656
  %vm660 = vcmask 195584
  %v662 = vsel %vm660, %v619, 0
  %v665 = vsel %vm660, %v620, 0
  %v668 = vsel %vm660, %v621, 0
  %v671 = vsel %vm660, %v622, 0
  %v674 = vsel %vm660, %v623, 0
  %v677 = vsel %vm660, %v624, 0
  %v680 = vsel %vm660, %v625, 0
  %v683 = vsel %vm660, %v626, 0
  %v686 = vsel %vm660, %v627, 0
  %v689 = vsel %vm660, %v628, 0
  %v692 = vsel %vm660, %v629, 0
  %v695 = vsel %vm660, %v630, 0
  %v698 = vsel %vm660, %v631, 0
  %v701 = vsel %vm660, %v632, 0
  %v704 = vsel %vm660, %v633, 0
  %v707 = vsel %vm660, %v634, 0
  %v710 = vsel %vm660, %v635, 0
  %v713 = vsel %vm660, %v636, 0
  %v716 = vsel %vm660, %v637, 0
  %v719 = vsel %vm660, %v638, 0
  %v722 = vsel %vm660, %v639, 0
  %v725 = vsel %vm660, %v640, 0
  %v728 = vsel %vm660, %v641, 0
  %v731 = vsel %vm660, %v642, 0
  %v734 = vsel %vm660, %v643, 0
  %v737 = vsel %vm660, %v644, 0
  %v740 = vsel %vm660, %v645, 0
  %v743 = vsel %vm660, %v646, 0
  %v746 = vsel %vm660, %v647, 0
  %v749 = vsel %vm660, %v648, 0
  %v752 = vsel %vm660, %v649, 0
  %v755 = vsel %vm660, %v650, 0
  %vm757 = vcmask 1043456
  %v759 = vsel %vm757, %v658, 0
  %761 = vmatprep.subr.bf16.mxu0 0
  %762 = vmatpush1.bf16.msra.mxu0 %v657
  %763 = vmatprep.subr.bf16.mxu0 0
  %764 = vmatpush1.bf16.msra.mxu0 %v759
  %765 = vmatprep.subr.bf16.mxu0 0
  %766 = vmatpush1.bf16.msra.mxu0 0
  %767 = vmatprep.subr.bf16.mxu0 0
  %768 = vmatpush1.bf16.msra.mxu0 0
  %769 = vmatprep.subr.bf16.mxu0 0
  %770 = vmatpush1.bf16.msra.mxu0 0
  %771 = vmatprep.subr.bf16.mxu0 0
  %772 = vmatpush1.bf16.msra.mxu0 0
  %773 = vmatprep.subr.bf16.mxu0 0
  %774 = vmatpush1.bf16.msra.mxu0 0
  %775 = vmatprep.subr.bf16.mxu0 0
  %776 = vmatpush1.bf16.msra.mxu0 0
  %777 = vmatprep.subr.bf16.mxu0 0
  %778 = vmatpush1.bf16.msra.mxu0 0
  %779 = vmatprep.subr.bf16.mxu0 0
  %780 = vmatpush1.bf16.msra.mxu0 0
  %781 = vmatprep.subr.bf16.mxu0 0
  %782 = vmatpush1.bf16.msra.mxu0 0
  %783 = vmatprep.subr.bf16.mxu0 0
  %784 = vmatpush1.bf16.msra.mxu0 0
  %785 = vmatprep.subr.bf16.mxu0 0
  %786 = vmatpush1.bf16.msra.mxu0 0
  %787 = vmatprep.subr.bf16.mxu0 0
  %788 = vmatpush1.bf16.msra.mxu0 0
  %789 = vmatprep.subr.bf16.mxu0 0
  %790 = vmatpush1.bf16.msra.mxu0 0
  %791 = vmatprep.subr.bf16.mxu0 0
  %792 = vmatpush1.bf16.msra.mxu0 0
  %793 = vmatprep.mubr.bf16.mxu0 0
  %794 = vmatmul.mubr.bf16.gmra.mrb[0].mxu0 %v662
  %v795 = vpop.f32.mrb[0].mxu0
  %v796 = vadd.f32 %v174, %v795
  %v797 = vpop.f32.mrb[0].mxu0
  %v798 = vpop.f32.mrb[0].mxu0
  %v799 = vadd.f32 %v179, %v798
  %v800 = vpop.f32.mrb[0].mxu0
  %801 = vmatprep.mubr.bf16.mxu0 0
  %802 = vmatmul.mubr.bf16.gmra.mrb[0].mxu0 %v665
  %v803 = vpop.f32.mrb[0].mxu0
  %v804 = vadd.f32 %v184, %v803
  %v805 = vpop.f32.mrb[0].mxu0
  %v806 = vpop.f32.mrb[0].mxu0
  %v807 = vadd.f32 %v189, %v806
  %v808 = vpop.f32.mrb[0].mxu0
  %809 = vmatprep.mubr.bf16.mxu0 0
  %810 = vmatmul.mubr.bf16.gmra.mrb[0].mxu0 %v668
  %v811 = vpop.f32.mrb[0].mxu0
  %v812 = vadd.f32 %v194, %v811
  %v813 = vpop.f32.mrb[0].mxu0
  %v814 = vpop.f32.mrb[0].mxu0
  %v815 = vadd.f32 %v199, %v814
  %v816 = vpop.f32.mrb[0].mxu0
  %817 = vmatprep.mubr.bf16.mxu0 0
  %818 = vmatmul.mubr.bf16.gmra.mrb[0].mxu0 %v671
  %v819 = vpop.f32.mrb[0].mxu0
  %v820 = vadd.f32 %v204, %v819
  %v821 = vpop.f32.mrb[0].mxu0
  %v822 = vpop.f32.mrb[0].mxu0
  %v823 = vadd.f32 %v209, %v822
  %v824 = vpop.f32.mrb[0].mxu0
  %825 = vmatprep.mubr.bf16.mxu0 0
  %826 = vmatmul.mubr.bf16.gmra.mrb[0].mxu0 %v674
  %v827 = vpop.f32.mrb[0].mxu0
  %v828 = vadd.f32 %v214, %v827
  %v829 = vpop.f32.mrb[0].mxu0
  %v830 = vpop.f32.mrb[0].mxu0
  %v831 = vadd.f32 %v219, %v830
  %v832 = vpop.f32.mrb[0].mxu0
  %833 = vmatprep.mubr.bf16.mxu0 0
  %834 = vmatmul.mubr.bf16.gmra.mrb[0].mxu0 %v677
  %v835 = vpop.f32.mrb[0].mxu0
  %v836 = vadd.f32 %v224, %v835
  %v837 = vpop.f32.mrb[0].mxu0
  %v838 = vpop.f32.mrb[0].mxu0
  %v839 = vadd.f32 %v229, %v838
  %v840 = vpop.f32.mrb[0].mxu0
  %841 = vmatprep.mubr.bf16.mxu0 0
  %842 = vmatmul.mubr.bf16.gmra.mrb[0].mxu0 %v680
  %v843 = vpop.f32.mrb[0].mxu0
  %v844 = vadd.f32 %v234, %v843
  %v845 = vpop.f32.mrb[0].mxu0
  %v846 = vpop.f32.mrb[0].mxu0
  %v847 = vadd.f32 %v239, %v846
  %v848 = vpop.f32.mrb[0].mxu0
  %849 = vmatprep.mubr.bf16.mxu0 0
  %850 = vmatmul.mubr.bf16.gmra.mrb[0].mxu0 %v683
  %v851 = vpop.f32.mrb[0].mxu0
  %v852 = vadd.f32 %v244, %v851
  %v853 = vpop.f32.mrb[0].mxu0
  %v854 = vpop.f32.mrb[0].mxu0
  %v855 = vadd.f32 %v249, %v854
  %v856 = vpop.f32.mrb[0].mxu0
  %857 = vmatprep.mubr.bf16.mxu0 0
  %858 = vmatmul.mubr.bf16.gmra.mrb[0].mxu0 %v686
  %v859 = vpop.f32.mrb[0].mxu0
  %v860 = vadd.f32 %v254, %v859
  %v861 = vpop.f32.mrb[0].mxu0
  %v862 = vpop.f32.mrb[0].mxu0
  %v863 = vadd.f32 %v259, %v862
  %v864 = vpop.f32.mrb[0].mxu0
  %865 = vmatprep.mubr.bf16.mxu0 0
  %866 = vmatmul.mubr.bf16.gmra.mrb[0].mxu0 %v689
  %v867 = vpop.f32.mrb[0].mxu0
  %v868 = vadd.f32 %v264, %v867
  %v869 = vpop.f32.mrb[0].mxu0
  %v870 = vpop.f32.mrb[0].mxu0
  %v871 = vadd.f32 %v269, %v870
  %v872 = vpop.f32.mrb[0].mxu0
  %873 = vmatprep.mubr.bf16.mxu0 0
  %874 = vmatmul.mubr.bf16.gmra.mrb[0].mxu0 %v692
  %v875 = vpop.f32.mrb[0].mxu0
  %v876 = vadd.f32 %v274, %v875
  %v877 = vpop.f32.mrb[0].mxu0
  %v878 = vpop.f32.mrb[0].mxu0
  %v879 = vadd.f32 %v279, %v878
  %v880 = vpop.f32.mrb[0].mxu0
  %881 = vmatprep.mubr.bf16.mxu0 0
  %882 = vmatmul.mubr.bf16.gmra.mrb[0].mxu0 %v695
  %v883 = vpop.f32.mrb[0].mxu0
  %v884 = vadd.f32 %v284, %v883
  %v885 = vpop.f32.mrb[0].mxu0
  %v886 = vpop.f32.mrb[0].mxu0
  %v887 = vadd.f32 %v289, %v886
  %v888 = vpop.f32.mrb[0].mxu0
  %889 = vmatprep.mubr.bf16.mxu0 0
  %890 = vmatmul.mubr.bf16.gmra.mrb[0].mxu0 %v698
  %v891 = vpop.f32.mrb[0].mxu0
  %v892 = vadd.f32 %v294, %v891
  %v893 = vpop.f32.mrb[0].mxu0
  %v894 = vpop.f32.mrb[0].mxu0
  %v895 = vadd.f32 %v299, %v894
  %v896 = vpop.f32.mrb[0].mxu0
  %897 = vmatprep.mubr.bf16.mxu0 0
  %898 = vmatmul.mubr.bf16.gmra.mrb[0].mxu0 %v701
  %v899 = vpop.f32.mrb[0].mxu0
  %v900 = vadd.f32 %v304, %v899
  %v901 = vpop.f32.mrb[0].mxu0
  %v902 = vpop.f32.mrb[0].mxu0
  %v903 = vadd.f32 %v309, %v902
  %v904 = vpop.f32.mrb[0].mxu0
  %905 = vmatprep.mubr.bf16.mxu0 0
  %906 = vmatmul.mubr.bf16.gmra.mrb[0].mxu0 %v704
  %v907 = vpop.f32.mrb[0].mxu0
  %v908 = vadd.f32 %v314, %v907
  %v909 = vpop.f32.mrb[0].mxu0
  %v910 = vpop.f32.mrb[0].mxu0
  %v911 = vadd.f32 %v319, %v910
  %v912 = vpop.f32.mrb[0].mxu0
  %913 = vmatprep.mubr.bf16.mxu0 0
  %914 = vmatmul.mubr.bf16.gmra.mrb[0].mxu0 %v707
  %v915 = vpop.f32.mrb[0].mxu0
  %v916 = vadd.f32 %v324, %v915
  %v917 = vpop.f32.mrb[0].mxu0
  %v918 = vpop.f32.mrb[0].mxu0
  %v919 = vadd.f32 %v329, %v918
  %v920 = vpop.f32.mrb[0].mxu0
  %921 = vmatprep.mubr.bf16.mxu0 0
  %922 = vmatmul.mubr.bf16.gmra.mrb[0].mxu0 %v710
  %v923 = vpop.f32.mrb[0].mxu0
  %v924 = vadd.f32 %v334, %v923
  %v925 = vpop.f32.mrb[0].mxu0
  %v926 = vpop.f32.mrb[0].mxu0
  %v927 = vadd.f32 %v339, %v926
  %v928 = vpop.f32.mrb[0].mxu0
  %929 = vmatprep.mubr.bf16.mxu0 0
  %930 = vmatmul.mubr.bf16.gmra.mrb[0].mxu0 %v713
  %v931 = vpop.f32.mrb[0].mxu0
  %v932 = vadd.f32 %v344, %v931
  %v933 = vpop.f32.mrb[0].mxu0
  %v934 = vpop.f32.mrb[0].mxu0
  %v935 = vadd.f32 %v349, %v934
  %v936 = vpop.f32.mrb[0].mxu0
  %937 = vmatprep.mubr.bf16.mxu0 0
  %938 = vmatmul.mubr.bf16.gmra.mrb[0].mxu0 %v716
  %v939 = vpop.f32.mrb[0].mxu0
  %v940 = vadd.f32 %v354, %v939
  %v941 = vpop.f32.mrb[0].mxu0
  %v942 = vpop.f32.mrb[0].mxu0
  %v943 = vadd.f32 %v359, %v942
  %v944 = vpop.f32.mrb[0].mxu0
  %945 = vmatprep.mubr.bf16.mxu0 0
  %946 = vmatmul.mubr.bf16.gmra.mrb[0].mxu0 %v719
  %v947 = vpop.f32.mrb[0].mxu0
  %v948 = vadd.f32 %v364, %v947
  %v949 = vpop.f32.mrb[0].mxu0
  %v950 = vpop.f32.mrb[0].mxu0
  %v951 = vadd.f32 %v369, %v950
  %v952 = vpop.f32.mrb[0].mxu0
  %953 = vmatprep.mubr.bf16.mxu0 0
  %954 = vmatmul.mubr.bf16.gmra.mrb[0].mxu0 %v722
  %v955 = vpop.f32.mrb[0].mxu0
  %v956 = vadd.f32 %v374, %v955
  %v957 = vpop.f32.mrb[0].mxu0
  %v958 = vpop.f32.mrb[0].mxu0
  %v959 = vadd.f32 %v379, %v958
  %v960 = vpop.f32.mrb[0].mxu0
  %961 = vmatprep.mubr.bf16.mxu0 0
  %962 = vmatmul.mubr.bf16.gmra.mrb[0].mxu0 %v725
  %v963 = vpop.f32.mrb[0].mxu0
  %v964 = vadd.f32 %v384, %v963
  %v965 = vpop.f32.mrb[0].mxu0
  %v966 = vpop.f32.mrb[0].mxu0
  %v967 = vadd.f32 %v389, %v966
  %v968 = vpop.f32.mrb[0].mxu0
  %969 = vmatprep.mubr.bf16.mxu0 0
  %970 = vmatmul.mubr.bf16.gmra.mrb[0].mxu0 %v728
  %v971 = vpop.f32.mrb[0].mxu0
  %v972 = vadd.f32 %v394, %v971
  %v973 = vpop.f32.mrb[0].mxu0
  %v974 = vpop.f32.mrb[0].mxu0
  %v975 = vadd.f32 %v399, %v974
  %v976 = vpop.f32.mrb[0].mxu0
  %977 = vmatprep.mubr.bf16.mxu0 0
  %978 = vmatmul.mubr.bf16.gmra.mrb[0].mxu0 %v731
  %v979 = vpop.f32.mrb[0].mxu0
  %v980 = vadd.f32 %v404, %v979
  %v981 = vpop.f32.mrb[0].mxu0
  %v982 = vpop.f32.mrb[0].mxu0
  %v983 = vadd.f32 %v409, %v982
  %v984 = vpop.f32.mrb[0].mxu0
  %985 = vmatprep.mubr.bf16.mxu0 0
  %986 = vmatmul.mubr.bf16.gmra.mrb[0].mxu0 %v734
  %v987 = vpop.f32.mrb[0].mxu0
  %v988 = vadd.f32 %v414, %v987
  %v989 = vpop.f32.mrb[0].mxu0
  %v990 = vpop.f32.mrb[0].mxu0
  %v991 = vadd.f32 %v419, %v990
  %v992 = vpop.f32.mrb[0].mxu0
  %993 = vmatprep.mubr.bf16.mxu0 0
  %994 = vmatmul.mubr.bf16.gmra.mrb[0].mxu0 %v737
  %v995 = vpop.f32.mrb[0].mxu0
  %v996 = vadd.f32 %v424, %v995
  %v997 = vpop.f32.mrb[0].mxu0
  %v998 = vpop.f32.mrb[0].mxu0
  %v999 = vadd.f32 %v429, %v998
  %v1000 = vpop.f32.mrb[0].mxu0
  %1001 = vmatprep.mubr.bf16.mxu0 0
  %1002 = vmatmul.mubr.bf16.gmra.mrb[0].mxu0 %v740
  %v1003 = vpop.f32.mrb[0].mxu0
  %v1004 = vadd.f32 %v434, %v1003
  %v1005 = vpop.f32.mrb[0].mxu0
  %v1006 = vpop.f32.mrb[0].mxu0
  %v1007 = vadd.f32 %v439, %v1006
  %v1008 = vpop.f32.mrb[0].mxu0
  %1009 = vmatprep.mubr.bf16.mxu0 0
  %1010 = vmatmul.mubr.bf16.gmra.mrb[0].mxu0 %v743
  %v1011 = vpop.f32.mrb[0].mxu0
  %v1012 = vadd.f32 %v444, %v1011
  %v1013 = vpop.f32.mrb[0].mxu0
  %v1014 = vpop.f32.mrb[0].mxu0
  %v1015 = vadd.f32 %v449, %v1014
  %v1016 = vpop.f32.mrb[0].mxu0
  %1017 = vmatprep.mubr.bf16.mxu0 0
  %1018 = vmatmul.mubr.bf16.gmra.mrb[0].mxu0 %v746
  %v1019 = vpop.f32.mrb[0].mxu0
  %v1020 = vadd.f32 %v454, %v1019
  %v1021 = vpop.f32.mrb[0].mxu0
  %v1022 = vpop.f32.mrb[0].mxu0
  %v1023 = vadd.f32 %v459, %v1022
  %v1024 = vpop.f32.mrb[0].mxu0
  %1025 = vmatprep.mubr.bf16.mxu0 0
  %1026 = vmatmul.mubr.bf16.gmra.mrb[0].mxu0 %v749
  %v1027 = vpop.f32.mrb[0].mxu0
  %v1028 = vadd.f32 %v464, %v1027
  %v1029 = vpop.f32.mrb[0].mxu0
  %v1030 = vpop.f32.mrb[0].mxu0
  %v1031 = vadd.f32 %v469, %v1030
  %v1032 = vpop.f32.mrb[0].mxu0
  %1033 = vmatprep.mubr.bf16.mxu0 0
  %1034 = vmatmul.mubr.bf16.gmra.mrb[0].mxu0 %v752
  %v1035 = vpop.f32.mrb[0].mxu0
  %v1036 = vadd.f32 %v474, %v1035
  %v1037 = vpop.f32.mrb[0].mxu0
  %v1038 = vpop.f32.mrb[0].mxu0
  %v1039 = vadd.f32 %v479, %v1038
  %v1040 = vpop.f32.mrb[0].mxu0
  %1041 = vmatprep.mubr.bf16.mxu0 0
  %1042 = vmatmul.mubr.bf16.gmra.mrb[0].mxu0 %v755
  %v1043 = vpop.f32.mrb[0].mxu0
  %v1044 = vadd.f32 %v484, %v1043
  %v1045 = vpop.f32.mrb[0].mxu0
  %v1046 = vpop.f32.mrb[0].mxu0
  %v1047 = vadd.f32 %v489, %v1046
  %v1048 = vpop.f32.mrb[0].mxu0
  %1049 = vdwg.mxu0
  %vm1050 = vcmp.ge.f32.partialorder %v796, 0.0
  %vm1051 = vcmp.ge.f32.partialorder %v799, 0.0
  %vm1052 = vcmp.ge.f32.partialorder %v804, 0.0
  %vm1053 = vcmp.ge.f32.partialorder %v807, 0.0
  %vm1054 = vcmp.ge.f32.partialorder %v812, 0.0
  %vm1055 = vcmp.ge.f32.partialorder %v815, 0.0
  %vm1056 = vcmp.ge.f32.partialorder %v820, 0.0
  %vm1057 = vcmp.ge.f32.partialorder %v823, 0.0
  %vm1058 = vcmp.ge.f32.partialorder %v828, 0.0
  %vm1059 = vcmp.ge.f32.partialorder %v831, 0.0
  %vm1060 = vcmp.ge.f32.partialorder %v836, 0.0
  %vm1061 = vcmp.ge.f32.partialorder %v839, 0.0
  %vm1062 = vcmp.ge.f32.partialorder %v844, 0.0
  %vm1063 = vcmp.ge.f32.partialorder %v847, 0.0
  %vm1064 = vcmp.ge.f32.partialorder %v852, 0.0
  %vm1065 = vcmp.ge.f32.partialorder %v855, 0.0
  %vm1066 = vcmp.ge.f32.partialorder %v860, 0.0
  %vm1067 = vcmp.ge.f32.partialorder %v863, 0.0
  %vm1068 = vcmp.ge.f32.partialorder %v868, 0.0
  %vm1069 = vcmp.ge.f32.partialorder %v871, 0.0
  %vm1070 = vcmp.ge.f32.partialorder %v876, 0.0
  %vm1071 = vcmp.ge.f32.partialorder %v879, 0.0
  %vm1072 = vcmp.ge.f32.partialorder %v884, 0.0
  %vm1073 = vcmp.ge.f32.partialorder %v887, 0.0
  %vm1074 = vcmp.ge.f32.partialorder %v892, 0.0
  %vm1075 = vcmp.ge.f32.partialorder %v895, 0.0
  %vm1076 = vcmp.ge.f32.partialorder %v900, 0.0
  %vm1077 = vcmp.ge.f32.partialorder %v903, 0.0
  %vm1078 = vcmp.ge.f32.partialorder %v908, 0.0
  %vm1079 = vcmp.ge.f32.partialorder %v911, 0.0
  %vm1080 = vcmp.ge.f32.partialorder %v916, 0.0
  %vm1081 = vcmp.ge.f32.partialorder %v919, 0.0
  %vm1082 = vcmp.ge.f32.partialorder %v924, 0.0
  %vm1083 = vcmp.ge.f32.partialorder %v927, 0.0
  %vm1084 = vcmp.ge.f32.partialorder %v932, 0.0
  %vm1085 = vcmp.ge.f32.partialorder %v935, 0.0
  %vm1086 = vcmp.ge.f32.partialorder %v940, 0.0
  %vm1087 = vcmp.ge.f32.partialorder %v943, 0.0
  %vm1088 = vcmp.ge.f32.partialorder %v948, 0.0
  %vm1089 = vcmp.ge.f32.partialorder %v951, 0.0
  %vm1090 = vcmp.ge.f32.partialorder %v956, 0.0
  %vm1091 = vcmp.ge.f32.partialorder %v959, 0.0
  %vm1092 = vcmp.ge.f32.partialorder %v964, 0.0
  %vm1093 = vcmp.ge.f32.partialorder %v967, 0.0
  %vm1094 = vcmp.ge.f32.partialorder %v972, 0.0
  %vm1095 = vcmp.ge.f32.partialorder %v975, 0.0
  %vm1096 = vcmp.ge.f32.partialorder %v980, 0.0
  %vm1097 = vcmp.ge.f32.partialorder %v983, 0.0
  %vm1098 = vcmp.ge.f32.partialorder %v988, 0.0
  %vm1099 = vcmp.ge.f32.partialorder %v991, 0.0
  %vm1100 = vcmp.ge.f32.partialorder %v996, 0.0
  %vm1101 = vcmp.ge.f32.partialorder %v999, 0.0
  %vm1102 = vcmp.ge.f32.partialorder %v1004, 0.0
  %vm1103 = vcmp.ge.f32.partialorder %v1007, 0.0
  %vm1104 = vcmp.ge.f32.partialorder %v1012, 0.0
  %vm1105 = vcmp.ge.f32.partialorder %v1015, 0.0
  %vm1106 = vcmp.ge.f32.partialorder %v1020, 0.0
  %vm1107 = vcmp.ge.f32.partialorder %v1023, 0.0
  %vm1108 = vcmp.ge.f32.partialorder %v1028, 0.0
  %vm1109 = vcmp.ge.f32.partialorder %v1031, 0.0
  %vm1110 = vcmp.ge.f32.partialorder %v1036, 0.0
  %vm1111 = vcmp.ge.f32.partialorder %v1039, 0.0
  %vm1112 = vcmp.ge.f32.partialorder %v1044, 0.0
  %vm1113 = vcmp.ge.f32.partialorder %v1047, 0.0
  %v1114 = vmul.f32 %v796, 0.1
  %v1115 = vmul.f32 %v799, 0.1
  %v1116 = vmul.f32 %v804, 0.1
  %v1117 = vmul.f32 %v807, 0.1
  %v1118 = vmul.f32 %v812, 0.1
  %v1119 = vmul.f32 %v815, 0.1
  %v1120 = vmul.f32 %v820, 0.1
  %v1121 = vmul.f32 %v823, 0.1
  %v1122 = vmul.f32 %v828, 0.1
  %v1123 = vmul.f32 %v831, 0.1
  %v1124 = vmul.f32 %v836, 0.1
  %v1125 = vmul.f32 %v839, 0.1
  %v1126 = vmul.f32 %v844, 0.1
  %v1127 = vmul.f32 %v847, 0.1
  %v1128 = vmul.f32 %v852, 0.1
  %v1129 = vmul.f32 %v855, 0.1
  %v1130 = vmul.f32 %v860, 0.1
  %v1131 = vmul.f32 %v863, 0.1
  %v1132 = vmul.f32 %v868, 0.1
  %v1133 = vmul.f32 %v871, 0.1
  %v1134 = vmul.f32 %v876, 0.1
  %v1135 = vmul.f32 %v879, 0.1
  %v1136 = vmul.f32 %v884, 0.1
  %v1137 = vmul.f32 %v887, 0.1
  %v1138 = vmul.f32 %v892, 0.1
  %v1139 = vmul.f32 %v895, 0.1
  %v1140 = vmul.f32 %v900, 0.1
  %v1141 = vmul.f32 %v903, 0.1
  %v1142 = vmul.f32 %v908, 0.1
  %v1143 = vmul.f32 %v911, 0.1
  %v1144 = vmul.f32 %v916, 0.1
  %v1145 = vmul.f32 %v919, 0.1
  %v1146 = vmul.f32 %v924, 0.1
  %v1147 = vmul.f32 %v927, 0.1
  %v1148 = vmul.f32 %v932, 0.1
  %v1149 = vmul.f32 %v935, 0.1
  %v1150 = vmul.f32 %v940, 0.1
  %v1151 = vmul.f32 %v943, 0.1
  %v1152 = vmul.f32 %v948, 0.1
  %v1153 = vmul.f32 %v951, 0.1
  %v1154 = vmul.f32 %v956, 0.1
  %v1155 = vmul.f32 %v959, 0.1
  %v1156 = vmul.f32 %v964, 0.1
  %v1157 = vmul.f32 %v967, 0.1
  %v1158 = vmul.f32 %v972, 0.1
  %v1159 = vmul.f32 %v975, 0.1
  %v1160 = vmul.f32 %v980, 0.1
  %v1161 = vmul.f32 %v983, 0.1
  %v1162 = vmul.f32 %v988, 0.1
  %v1163 = vmul.f32 %v991, 0.1
  %v1164 = vmul.f32 %v996, 0.1
  %v1165 = vmul.f32 %v999, 0.1
  %v1166 = vmul.f32 %v1004, 0.1
  %v1167 = vmul.f32 %v1007, 0.1
  %v1168 = vmul.f32 %v1012, 0.1
  %v1169 = vmul.f32 %v1015, 0.1
  %v1170 = vmul.f32 %v1020, 0.1
  %v1171 = vmul.f32 %v1023, 0.1
  %v1172 = vmul.f32 %v1028, 0.1
  %v1173 = vmul.f32 %v1031, 0.1
  %v1174 = vmul.f32 %v1036, 0.1
  %v1175 = vmul.f32 %v1039, 0.1
  %v1176 = vmul.f32 %v1044, 0.1
  %v1177 = vmul.f32 %v1047, 0.1
  %v1178 = vsel %vm1050, %v796, %v1114
  %v1179 = vsel %vm1051, %v799, %v1115
  %v1180 = vsel %vm1052, %v804, %v1116
  %v1181 = vsel %vm1053, %v807, %v1117
  %v1182 = vsel %vm1054, %v812, %v1118
  %v1183 = vsel %vm1055, %v815, %v1119
  %v1184 = vsel %vm1056, %v820, %v1120
  %v1185 = vsel %vm1057, %v823, %v1121
  %v1186 = vsel %vm1058, %v828, %v1122
  %v1187 = vsel %vm1059, %v831, %v1123
  %v1188 = vsel %vm1060, %v836, %v1124
  %v1189 = vsel %vm1061, %v839, %v1125
  %v1190 = vsel %vm1062, %v844, %v1126
  %v1191 = vsel %vm1063, %v847, %v1127
  %v1192 = vsel %vm1064, %v852, %v1128
  %v1193 = vsel %vm1065, %v855, %v1129
  %v1194 = vsel %vm1066, %v860, %v1130
  %v1195 = vsel %vm1067, %v863, %v1131
  %v1196 = vsel %vm1068, %v868, %v1132
  %v1197 = vsel %vm1069, %v871, %v1133
  %v1198 = vsel %vm1070, %v876, %v1134
  %v1199 = vsel %vm1071, %v879, %v1135
  %v1200 = vsel %vm1072, %v884, %v1136
  %v1201 = vsel %vm1073, %v887, %v1137
  %v1202 = vsel %vm1074, %v892, %v1138
  %v1203 = vsel %vm1075, %v895, %v1139
  %v1204 = vsel %vm1076, %v900, %v1140
  %v1205 = vsel %vm1077, %v903, %v1141
  %v1206 = vsel %vm1078, %v908, %v1142
  %v1207 = vsel %vm1079, %v911, %v1143
  %v1208 = vsel %vm1080, %v916, %v1144
  %v1209 = vsel %vm1081, %v919, %v1145
  %v1210 = vsel %vm1082, %v924, %v1146
  %v1211 = vsel %vm1083, %v927, %v1147
  %v1212 = vsel %vm1084, %v932, %v1148
  %v1213 = vsel %vm1085, %v935, %v1149
  %v1214 = vsel %vm1086, %v940, %v1150
  %v1215 = vsel %vm1087, %v943, %v1151
  %v1216 = vsel %vm1088, %v948, %v1152
  %v1217 = vsel %vm1089, %v951, %v1153
  %v1218 = vsel %vm1090, %v956, %v1154
  %v1219 = vsel %vm1091, %v959, %v1155
  %v1220 = vsel %vm1092, %v964, %v1156
  %v1221 = vsel %vm1093, %v967, %v1157
  %v1222 = vsel %vm1094, %v972, %v1158
  %v1223 = vsel %vm1095, %v975, %v1159
  %v1224 = vsel %vm1096, %v980, %v1160
  %v1225 = vsel %vm1097, %v983, %v1161
  %v1226 = vsel %vm1098, %v988, %v1162
  %v1227 = vsel %vm1099, %v991, %v1163
  %v1228 = vsel %vm1100, %v996, %v1164
  %v1229 = vsel %vm1101, %v999, %v1165
  %v1230 = vsel %vm1102, %v1004, %v1166
  %v1231 = vsel %vm1103, %v1007, %v1167
  %v1232 = vsel %vm1104, %v1012, %v1168
  %v1233 = vsel %vm1105, %v1015, %v1169
  %v1234 = vsel %vm1106, %v1020, %v1170
  %v1235 = vsel %vm1107, %v1023, %v1171
  %v1236 = vsel %vm1108, %v1028, %v1172
  %v1237 = vsel %vm1109, %v1031, %v1173
  %v1238 = vsel %vm1110, %v1036, %v1174
  %v1239 = vsel %vm1111, %v1039, %v1175
  %v1240 = vsel %vm1112, %v1044, %v1176
  %v1241 = vsel %vm1113, %v1047, %v1177
  %v1242 = vpack.c.bf16 %v1179, %v1178
  %v1243 = vpack.c.bf16 %v1181, %v1180
  %v1244 = vpack.c.bf16 %v1183, %v1182
  %v1245 = vpack.c.bf16 %v1185, %v1184
  %v1246 = vpack.c.bf16 %v1187, %v1186
  %v1247 = vpack.c.bf16 %v1189, %v1188
  %v1248 = vpack.c.bf16 %v1191, %v1190
  %v1249 = vpack.c.bf16 %v1193, %v1192
  %v1250 = vpack.c.bf16 %v1195, %v1194
  %v1251 = vpack.c.bf16 %v1197, %v1196
  %v1252 = vpack.c.bf16 %v1199, %v1198
  %v1253 = vpack.c.bf16 %v1201, %v1200
  %v1254 = vpack.c.bf16 %v1203, %v1202
  %v1255 = vpack.c.bf16 %v1205, %v1204
  %v1256 = vpack.c.bf16 %v1207, %v1206
  %v1257 = vpack.c.bf16 %v1209, %v1208
  %v1258 = vpack.c.bf16 %v1211, %v1210
  %v1259 = vpack.c.bf16 %v1213, %v1212
  %v1260 = vpack.c.bf16 %v1215, %v1214
  %v1261 = vpack.c.bf16 %v1217, %v1216
  %v1262 = vpack.c.bf16 %v1219, %v1218
  %v1263 = vpack.c.bf16 %v1221, %v1220
  %v1264 = vpack.c.bf16 %v1223, %v1222
  %v1265 = vpack.c.bf16 %v1225, %v1224
  %v1266 = vpack.c.bf16 %v1227, %v1226
  %v1267 = vpack.c.bf16 %v1229, %v1228
  %v1268 = vpack.c.bf16 %v1231, %v1230
  %v1269 = vpack.c.bf16 %v1233, %v1232
  %v1270 = vpack.c.bf16 %v1235, %v1234
  %v1271 = vpack.c.bf16 %v1237, %v1236
  %v1272 = vpack.c.bf16 %v1239, %v1238
  %v1273 = vpack.c.bf16 %v1241, %v1240
  %v1274 = vld [vmem:[%s3] sm:$0xf]
  %v1275 = vld [vmem:[%s4] sm:$0x1]
  %1277 = vset.pattern.permute.xlu0 0
  %1278 = vperm.xlu0 %1277, %v1275
  %v1279 = vpop.permute.xlu0 %1278
  %v1281 = vlaneseq
  %v1282 = vshrl.u32 %v1281, 7
  %v1283 = vsub.s32 0, %v1282
  %v1284 = vrot.slane %v1279, %v1283
  %v1287 = vunpack.c.l.s4 1966171168
  %v1288 = vunpack.c.0.s8 %v1287
  %v1289 = vlaneseq
  %v1290 = vshrl.u32 %v1289, 7
  %v1291 = vsub.s32 %v1288, %v1290
  %v1292 = vrot.slane %v1274, %v1291
  %v1293 = vcombine.high %v1292, %v1292
  %v1295 = vunpack.c.l.s4 1966171168
  %v1296 = vunpack.c.0.s8 %v1295
  %v1297 = vlaneseq
  %v1298 = vshrl.u32 %v1297, 7
  %v1299 = vsub.s32 %v1296, %v1298
  %v1300 = vrot.slane %v1292, %v1299
  %v1302 = vunpack.c.l.s4 1966171168
  %v1303 = vunpack.c.0.s8 %v1302
  %v1304 = vlaneseq
  %v1305 = vshrl.u32 %v1304, 7
  %v1306 = vsub.s32 %v1303, %v1305
  %v1307 = vrot.slane %v1293, %v1306
  %v1308 = vcombine.high %v1300, %v1300
  %v1309 = vcombine.high %v1307, %v1307
  %1314 = vmatprep.subr.bf16.mxu0 0
  %1315 = vmatpush1.bf16.msra.mxu0 %v1242
  %1316 = vmatprep.subr.bf16.mxu0 0
  %1317 = vmatpush1.bf16.msra.mxu0 %v1243
  %1318 = vmatprep.subr.bf16.mxu0 0
  %1319 = vmatpush1.bf16.msra.mxu0 %v1244
  %1320 = vmatprep.subr.bf16.mxu0 0
  %1321 = vmatpush1.bf16.msra.mxu0 %v1245
  %1322 = vmatprep.subr.bf16.mxu0 0
  %1323 = vmatpush1.bf16.msra.mxu0 %v1246
  %1324 = vmatprep.subr.bf16.mxu0 0
  %1325 = vmatpush1.bf16.msra.mxu0 %v1247
  %1326 = vmatprep.subr.bf16.mxu0 0
  %1327 = vmatpush1.bf16.msra.mxu0 %v1248
  %1328 = vmatprep.subr.bf16.mxu0 0
  %1329 = vmatpush1.bf16.msra.mxu0 %v1249
  %1330 = vmatprep.subr.bf16.mxu0 0
  %1331 = vmatpush1.bf16.msra.mxu0 %v1250
  %1332 = vmatprep.subr.bf16.mxu0 0
  %1333 = vmatpush1.bf16.msra.mxu0 %v1251
  %1334 = vmatprep.subr.bf16.mxu0 0
  %1335 = vmatpush1.bf16.msra.mxu0 %v1252
  %1336 = vmatprep.subr.bf16.mxu0 0
  %1337 = vmatpush1.bf16.msra.mxu0 %v1253
  %1338 = vmatprep.subr.bf16.mxu0 0
  %1339 = vmatpush1.bf16.msra.mxu0 %v1254
  %1340 = vmatprep.subr.bf16.mxu0 0
  %1341 = vmatpush1.bf16.msra.mxu0 %v1255
  %1342 = vmatprep.subr.bf16.mxu0 0
  %1343 = vmatpush1.bf16.msra.mxu0 %v1256
  %1344 = vmatprep.subr.bf16.mxu0 0
  %1345 = vmatpush1.bf16.msra.mxu0 %v1257
  %1346 = vmatprep.mubr.bf16.mxu0 %v1307
  %1347 = vmatmul.mubr.bf16.gmra.mrb[0].mxu0 %v1300
  %v1348 = vpop.f32.mrb[0].mxu0
  %v1349 = vadd.f32 %v1284, %v1348
  %v1350 = vpop.f32.mrb[0].mxu0
  %v1351 = vpop.f32.mrb[0].mxu0
  %v1352 = vpop.f32.mrb[0].mxu0
  %1353 = vdwg.mxu0
  %1354 = vmatprep.subr.bf16.mxu0 0
  %1355 = vmatpush1.bf16.msra.mxu0 %v1258
  %1356 = vmatprep.subr.bf16.mxu0 0
  %1357 = vmatpush1.bf16.msra.mxu0 %v1259
  %1358 = vmatprep.subr.bf16.mxu0 0
  %1359 = vmatpush1.bf16.msra.mxu0 %v1260
  %1360 = vmatprep.subr.bf16.mxu0 0
  %1361 = vmatpush1.bf16.msra.mxu0 %v1261
  %1362 = vmatprep.subr.bf16.mxu0 0
  %1363 = vmatpush1.bf16.msra.mxu0 %v1262
  %1364 = vmatprep.subr.bf16.mxu0 0
  %1365 = vmatpush1.bf16.msra.mxu0 %v1263
  %1366 = vmatprep.subr.bf16.mxu0 0
  %1367 = vmatpush1.bf16.msra.mxu0 %v1264
  %1368 = vmatprep.subr.bf16.mxu0 0
  %1369 = vmatpush1.bf16.msra.mxu0 %v1265
  %1370 = vmatprep.subr.bf16.mxu0 0
  %1371 = vmatpush1.bf16.msra.mxu0 %v1266
  %1372 = vmatprep.subr.bf16.mxu0 0
  %1373 = vmatpush1.bf16.msra.mxu0 %v1267
  %1374 = vmatprep.subr.bf16.mxu0 0
  %1375 = vmatpush1.bf16.msra.mxu0 %v1268
  %1376 = vmatprep.subr.bf16.mxu0 0
  %1377 = vmatpush1.bf16.msra.mxu0 %v1269
  %1378 = vmatprep.subr.bf16.mxu0 0
  %1379 = vmatpush1.bf16.msra.mxu0 %v1270
  %1380 = vmatprep.subr.bf16.mxu0 0
  %1381 = vmatpush1.bf16.msra.mxu0 %v1271
  %1382 = vmatprep.subr.bf16.mxu0 0
  %1383 = vmatpush1.bf16.msra.mxu0 %v1272
  %1384 = vmatprep.subr.bf16.mxu0 0
  %1385 = vmatpush1.bf16.msra.mxu0 %v1273
  %1386 = vmatprep.mubr.bf16.mxu0 %v1309
  %1387 = vmatmul.mubr.bf16.gmra.mrb[0].mxu0 %v1308
  %v1388 = vpop.f32.mrb[0].mxu0
  %v1389 = vadd.f32 %v1349, %v1388
  %v1390 = vpop.f32.mrb[0].mxu0
  %v1391 = vpop.f32.mrb[0].mxu0
  %v1392 = vpop.f32.mrb[0].mxu0
  %1393 = vdwg.mxu0
  %v1394 = vxor.u32 %v1389, 2147483648
  %v1395 = vmul.f32 %v1394, 1.442695
  %v1396 = vpow.pop %v1395
  %v1397 = vadd.f32 %v1396, 1.0
  %v1398 = vrcp.pop %v1397
  %v1399 = vmul.f32 1.0, %v1398
  %v1402 = vunpack.c.l.b16 %v32
  %v1403 = vunpack.c.h.b16 %v32
  %v1404 = vunpack.c.l.b16 %v33
  %v1405 = vunpack.c.h.b16 %v33
  %v1406 = vpack.c.b16 %v1402, %v1402
  %v1407 = vpack.c.b16 %v1403, %v1403
  %v1408 = vpack.c.b16 %v1404, %v1404
  %v1409 = vpack.c.b16 %v1405, %v1405
  %1414 = vmatprep.subr.bf16.mxu0 0
  %1415 = vmatpush1.bf16.msra.mxu0 %v1242
  %1416 = vmatprep.subr.bf16.mxu0 0
  %1417 = vmatpush1.bf16.msra.mxu0 %v1243
  %1418 = vmatprep.subr.bf16.mxu0 0
  %1419 = vmatpush1.bf16.msra.mxu0 %v1244
  %1420 = vmatprep.subr.bf16.mxu0 0
  %1421 = vmatpush1.bf16.msra.mxu0 %v1245
  %1422 = vmatprep.subr.bf16.mxu0 0
  %1423 = vmatpush1.bf16.msra.mxu0 %v1246
  %1424 = vmatprep.subr.bf16.mxu0 0
  %1425 = vmatpush1.bf16.msra.mxu0 %v1247
  %1426 = vmatprep.subr.bf16.mxu0 0
  %1427 = vmatpush1.bf16.msra.mxu0 %v1248
  %1428 = vmatprep.subr.bf16.mxu0 0
  %1429 = vmatpush1.bf16.msra.mxu0 %v1249
  %1430 = vmatprep.subr.bf16.mxu0 0
  %1431 = vmatpush1.bf16.msra.mxu0 %v1250
  %1432 = vmatprep.subr.bf16.mxu0 0
  %1433 = vmatpush1.bf16.msra.mxu0 %v1251
  %1434 = vmatprep.subr.bf16.mxu0 0
  %1435 = vmatpush1.bf16.msra.mxu0 %v1252
  %1436 = vmatprep.subr.bf16.mxu0 0
  %1437 = vmatpush1.bf16.msra.mxu0 %v1253
  %1438 = vmatprep.subr.bf16.mxu0 0
  %1439 = vmatpush1.bf16.msra.mxu0 %v1254
  %1440 = vmatprep.subr.bf16.mxu0 0
  %1441 = vmatpush1.bf16.msra.mxu0 %v1255
  %1442 = vmatprep.subr.bf16.mxu0 0
  %1443 = vmatpush1.bf16.msra.mxu0 %v1256
  %1444 = vmatprep.subr.bf16.mxu0 0
  %1445 = vmatpush1.bf16.msra.mxu0 %v1257
  %1446 = vmatprep.mubr.bf16.mxu0 %v1407
  %1447 = vmatmul.mubr.bf16.gmra.mrb[0].mxu0 %v1406
  %v1448 = vpop.f32.mrb[0].mxu0
  %v1449 = vadd.f32 %v38, %v1448
  %v1450 = vpop.f32.mrb[0].mxu0
  %v1451 = vpop.f32.mrb[0].mxu0
  %v1452 = vpop.f32.mrb[0].mxu0
  %1453 = vdwg.mxu0
  %1454 = vmatprep.subr.bf16.mxu0 0
  %1455 = vmatpush1.bf16.msra.mxu0 %v1258
  %1456 = vmatprep.subr.bf16.mxu0 0
  %1457 = vmatpush1.bf16.msra.mxu0 %v1259
  %1458 = vmatprep.subr.bf16.mxu0 0
  %1459 = vmatpush1.bf16.msra.mxu0 %v1260
  %1460 = vmatprep.subr.bf16.mxu0 0
  %1461 = vmatpush1.bf16.msra.mxu0 %v1261
  %1462 = vmatprep.subr.bf16.mxu0 0
  %1463 = vmatpush1.bf16.msra.mxu0 %v1262
  %1464 = vmatprep.subr.bf16.mxu0 0
  %1465 = vmatpush1.bf16.msra.mxu0 %v1263
  %1466 = vmatprep.subr.bf16.mxu0 0
  %1467 = vmatpush1.bf16.msra.mxu0 %v1264
  %1468 = vmatprep.subr.bf16.mxu0 0
  %1469 = vmatpush1.bf16.msra.mxu0 %v1265
  %1470 = vmatprep.subr.bf16.mxu0 0
  %1471 = vmatpush1.bf16.msra.mxu0 %v1266
  %1472 = vmatprep.subr.bf16.mxu0 0
  %1473 = vmatpush1.bf16.msra.mxu0 %v1267
  %1474 = vmatprep.subr.bf16.mxu0 0
  %1475 = vmatpush1.bf16.msra.mxu0 %v1268
  %1476 = vmatprep.subr.bf16.mxu0 0
  %1477 = vmatpush1.bf16.msra.mxu0 %v1269
  %1478 = vmatprep.subr.bf16.mxu0 0
  %1479 = vmatpush1.bf16.msra.mxu0 %v1270
  %1480 = vmatprep.subr.bf16.mxu0 0
  %1481 = vmatpush1.bf16.msra.mxu0 %v1271
  %1482 = vmatprep.subr.bf16.mxu0 0
  %1483 = vmatpush1.bf16.msra.mxu0 %v1272
  %1484 = vmatprep.subr.bf16.mxu0 0
  %1485 = vmatpush1.bf16.msra.mxu0 %v1273
  %1486 = vmatprep.mubr.bf16.mxu0 %v1409
  %1487 = vmatmul.mubr.bf16.gmra.mrb[0].mxu0 %v1408
  %v1488 = vpop.f32.mrb[0].mxu0
  %v1489 = vadd.f32 %v1449, %v1488
  %v1490 = vpop.f32.mrb[0].mxu0
  %v1491 = vpop.f32.mrb[0].mxu0
  %v1492 = vpop.f32.mrb[0].mxu0
  %1493 = vdwg.mxu0
  %vm1494 = vcmask 15360
  %1495 = vst.msk [vmem:[%s8] sm:$0xff] %vm1494, %v1489
  %v1496 = vld [vmem:[%s7] sm:$0x1]
  %v1497 = vsub.f32 1.0, %v1496
  %v1498 = vmul.f32 %v1497, %v1399
  %v1499 = vadd.f32 %v1498, %v1496
  %v1500 = vlaneseq
  %v1501 = vshrl.u32 %v1500, 7
  %v1502 = vsub.s32 0, %v1501
  %v1503 = vrot.slane %v1499, %v1502
  %v1504 = vmul.f32 %v1489, %v1503
  %v1505 = vadd.f32 %v1504, 0.0
  %v1506 = vadd.f32 %v1499, 0.0
  %s1507 = scalar_lea.vmem %s1, 256
  %v1508 = vld [vmem:[%s1507] sm:$0xf]
  %v1509 = vld [vmem:[%s1507 + $0x4] sm:$0xf]
  %v1510 = vld [vmem:[%s1507 + $0x8] sm:$0xf]
  %v1511 = vld [vmem:[%s1507 + $0xc] sm:$0xf]
  %v1512 = vld [vmem:[%s1507 + $0x10] sm:$0xf]
  %v1513 = vld [vmem:[%s1507 + $0x14] sm:$0xf]
  %v1514 = vld [vmem:[%s1507 + $0x18] sm:$0xf]
  %v1515 = vld [vmem:[%s1507 + $0x1c] sm:$0xf]
  %v1516 = vld [vmem:[%s1507 + $0x20] sm:$0xf]
  %v1517 = vld [vmem:[%s1507 + $0x24] sm:$0xf]
  %v1518 = vld [vmem:[%s1507 + $0x28] sm:$0xf]
  %v1519 = vld [vmem:[%s1507 + $0x2c] sm:$0xf]
  %v1520 = vld [vmem:[%s1507 + $0x30] sm:$0xf]
  %v1521 = vld [vmem:[%s1507 + $0x34] sm:$0xf]
  %v1522 = vld [vmem:[%s1507 + $0x38] sm:$0xf]
  %v1523 = vld [vmem:[%s1507 + $0x3c] sm:$0xf]
  %v1524 = vld [vmem:[%s1507 + $0x40] sm:$0xf]
  %v1525 = vld [vmem:[%s1507 + $0x44] sm:$0xf]
  %v1526 = vld [vmem:[%s1507 + $0x48] sm:$0xf]
  %v1527 = vld [vmem:[%s1507 + $0x4c] sm:$0xf]
  %v1528 = vld [vmem:[%s1507 + $0x50] sm:$0xf]
  %v1529 = vld [vmem:[%s1507 + $0x54] sm:$0xf]
  %v1530 = vld [vmem:[%s1507 + $0x58] sm:$0xf]
  %v1531 = vld [vmem:[%s1507 + $0x5c] sm:$0xf]
  %v1532 = vld [vmem:[%s1507 + $0x60] sm:$0xf]
  %v1533 = vld [vmem:[%s1507 + $0x64] sm:$0xf]
  %v1534 = vld [vmem:[%s1507 + $0x68] sm:$0xf]
  %v1535 = vld [vmem:[%s1507 + $0x6c] sm:$0xf]
  %v1536 = vld [vmem:[%s1507 + $0x70] sm:$0xf]
  %v1537 = vld [vmem:[%s1507 + $0x74] sm:$0xf]
  %v1538 = vld [vmem:[%s1507 + $0x78] sm:$0xf]
  %v1539 = vld [vmem:[%s1507 + $0x7c] sm:$0xf]
  %v1540 = vld [vmem:[%s1507 + $0x80] sm:$0xf]
  %v1541 = vld [vmem:[%s1507 + $0x84] sm:$0xf]
  %v1542 = vld [vmem:[%s1507 + $0x88] sm:$0xf]
  %v1543 = vld [vmem:[%s1507 + $0x8c] sm:$0xf]
  %v1544 = vld [vmem:[%s1507 + $0x90] sm:$0xf]
  %v1545 = vld [vmem:[%s1507 + $0x94] sm:$0xf]
  %v1546 = vld [vmem:[%s1507 + $0x98] sm:$0xf]
  %v1547 = vld [vmem:[%s1507 + $0x9c] sm:$0xf]
  %v1548 = vld [vmem:[%s1507 + $0xa0] sm:$0xf]
  %v1549 = vld [vmem:[%s1507 + $0xa4] sm:$0xf]
  %v1550 = vld [vmem:[%s1507 + $0xa8] sm:$0xf]
  %v1551 = vld [vmem:[%s1507 + $0xac] sm:$0xf]
  %v1552 = vld [vmem:[%s1507 + $0xb0] sm:$0xf]
  %v1553 = vld [vmem:[%s1507 + $0xb4] sm:$0xf]
  %v1554 = vld [vmem:[%s1507 + $0xb8] sm:$0xf]
  %v1555 = vld [vmem:[%s1507 + $0xbc] sm:$0xf]
  %v1556 = vld [vmem:[%s1507 + $0xc0] sm:$0xf]
  %v1557 = vld [vmem:[%s1507 + $0xc4] sm:$0xf]
  %v1558 = vld [vmem:[%s1507 + $0xc8] sm:$0xf]
  %v1559 = vld [vmem:[%s1507 + $0xcc] sm:$0xf]
  %v1560 = vld [vmem:[%s1507 + $0xd0] sm:$0xf]
  %v1561 = vld [vmem:[%s1507 + $0xd4] sm:$0xf]
  %v1562 = vld [vmem:[%s1507 + $0xd8] sm:$0xf]
  %v1563 = vld [vmem:[%s1507 + $0xdc] sm:$0xf]
  %v1564 = vld [vmem:[%s1507 + $0xe0] sm:$0xf]
  %v1565 = vld [vmem:[%s1507 + $0xe4] sm:$0xf]
  %v1566 = vld [vmem:[%s1507 + $0xe8] sm:$0xf]
  %v1567 = vld [vmem:[%s1507 + $0xec] sm:$0xf]
  %v1568 = vld [vmem:[%s1507 + $0xf0] sm:$0xf]
  %v1569 = vld [vmem:[%s1507 + $0xf4] sm:$0xf]
  %v1570 = vld [vmem:[%s1507 + $0xf8] sm:$0xf]
  %v1571 = vld [vmem:[%s1507 + $0xfc] sm:$0xf]
  %s1572 = scalar_lea.vmem %s0, 12
  %v1573 = vld [vmem:[%s1572] sm:$0xf]
  %v1574 = vld [vmem:[%s1572 + $0x4] sm:$0xf]
  %v1575 = vld [vmem:[%s1572 + $0x8] sm:$0xf]
  %s1576 = scalar_lea.vmem %s2, 512
  %v1577 = vld [vmem:[%s1576] sm:$0xff]
  %v1578 = vld [vmem:[%s1576 + $0x8] sm:$0xff]
  %v1579 = vld [vmem:[%s1576 + $0x10] sm:$0xff]
  %v1580 = vld [vmem:[%s1576 + $0x18] sm:$0xff]
  %v1581 = vld [vmem:[%s1576 + $0x20] sm:$0xff]
  %v1582 = vld [vmem:[%s1576 + $0x28] sm:$0xff]
  %v1583 = vld [vmem:[%s1576 + $0x30] sm:$0xff]
  %v1584 = vld [vmem:[%s1576 + $0x38] sm:$0xff]
  %v1585 = vld [vmem:[%s1576 + $0x40] sm:$0xff]
  %v1586 = vld [vmem:[%s1576 + $0x48] sm:$0xff]
  %v1587 = vld [vmem:[%s1576 + $0x50] sm:$0xff]
  %v1588 = vld [vmem:[%s1576 + $0x58] sm:$0xff]
  %v1589 = vld [vmem:[%s1576 + $0x60] sm:$0xff]
  %v1590 = vld [vmem:[%s1576 + $0x68] sm:$0xff]
  %v1591 = vld [vmem:[%s1576 + $0x70] sm:$0xff]
  %v1592 = vld [vmem:[%s1576 + $0x78] sm:$0xff]
  %v1593 = vld [vmem:[%s1576 + $0x80] sm:$0xff]
  %v1594 = vld [vmem:[%s1576 + $0x88] sm:$0xff]
  %v1595 = vld [vmem:[%s1576 + $0x90] sm:$0xff]
  %v1596 = vld [vmem:[%s1576 + $0x98] sm:$0xff]
  %v1597 = vld [vmem:[%s1576 + $0xa0] sm:$0xff]
  %v1598 = vld [vmem:[%s1576 + $0xa8] sm:$0xff]
  %v1599 = vld [vmem:[%s1576 + $0xb0] sm:$0xff]
  %v1600 = vld [vmem:[%s1576 + $0xb8] sm:$0xff]
  %v1601 = vld [vmem:[%s1576 + $0xc0] sm:$0xff]
  %v1602 = vld [vmem:[%s1576 + $0xc8] sm:$0xff]
  %v1603 = vld [vmem:[%s1576 + $0xd0] sm:$0xff]
  %v1604 = vld [vmem:[%s1576 + $0xd8] sm:$0xff]
  %v1605 = vld [vmem:[%s1576 + $0xe0] sm:$0xff]
  %v1606 = vld [vmem:[%s1576 + $0xe8] sm:$0xff]
  %v1607 = vld [vmem:[%s1576 + $0xf0] sm:$0xff]
  %v1608 = vld [vmem:[%s1576 + $0xf8] sm:$0xff]
  %v1609 = vld [vmem:[%s1576 + $0x100] sm:$0xff]
  %v1610 = vld [vmem:[%s1576 + $0x108] sm:$0xff]
  %v1611 = vld [vmem:[%s1576 + $0x110] sm:$0xff]
  %v1612 = vld [vmem:[%s1576 + $0x118] sm:$0xff]
  %v1613 = vld [vmem:[%s1576 + $0x120] sm:$0xff]
  %v1614 = vld [vmem:[%s1576 + $0x128] sm:$0xff]
  %v1615 = vld [vmem:[%s1576 + $0x130] sm:$0xff]
  %v1616 = vld [vmem:[%s1576 + $0x138] sm:$0xff]
  %v1617 = vld [vmem:[%s1576 + $0x140] sm:$0xff]
  %v1618 = vld [vmem:[%s1576 + $0x148] sm:$0xff]
  %v1619 = vld [vmem:[%s1576 + $0x150] sm:$0xff]
  %v1620 = vld [vmem:[%s1576 + $0x158] sm:$0xff]
  %v1621 = vld [vmem:[%s1576 + $0x160] sm:$0xff]
  %v1622 = vld [vmem:[%s1576 + $0x168] sm:$0xff]
  %v1623 = vld [vmem:[%s1576 + $0x170] sm:$0xff]
  %v1624 = vld [vmem:[%s1576 + $0x178] sm:$0xff]
  %v1625 = vld [vmem:[%s1576 + $0x180] sm:$0xff]
  %v1626 = vld [vmem:[%s1576 + $0x188] sm:$0xff]
  %v1627 = vld [vmem:[%s1576 + $0x190] sm:$0xff]
  %v1628 = vld [vmem:[%s1576 + $0x198] sm:$0xff]
  %v1629 = vld [vmem:[%s1576 + $0x1a0] sm:$0xff]
  %v1630 = vld [vmem:[%s1576 + $0x1a8] sm:$0xff]
  %v1631 = vld [vmem:[%s1576 + $0x1b0] sm:$0xff]
  %v1632 = vld [vmem:[%s1576 + $0x1b8] sm:$0xff]
  %v1633 = vld [vmem:[%s1576 + $0x1c0] sm:$0xff]
  %v1634 = vld [vmem:[%s1576 + $0x1c8] sm:$0xff]
  %v1635 = vld [vmem:[%s1576 + $0x1d0] sm:$0xff]
  %v1636 = vld [vmem:[%s1576 + $0x1d8] sm:$0xff]
  %v1637 = vld [vmem:[%s1576 + $0x1e0] sm:$0xff]
  %v1638 = vld [vmem:[%s1576 + $0x1e8] sm:$0xff]
  %v1639 = vld [vmem:[%s1576 + $0x1f0] sm:$0xff]
  %v1640 = vld [vmem:[%s1576 + $0x1f8] sm:$0xff]
  %1642 = vset.pattern.permute.xlu0 0
  %1643 = vperm.xlu0 %1642, %v1577
  %v1644 = vpop.permute.xlu0 %1643
  %1647 = vset.pattern.permute.xlu0 0
  %1648 = vperm.xlu0 %1647, %v1578
  %v1649 = vpop.permute.xlu0 %1648
  %1652 = vset.pattern.permute.xlu0 0
  %1653 = vperm.xlu0 %1652, %v1579
  %v1654 = vpop.permute.xlu0 %1653
  %1657 = vset.pattern.permute.xlu0 0
  %1658 = vperm.xlu0 %1657, %v1580
  %v1659 = vpop.permute.xlu0 %1658
  %1662 = vset.pattern.permute.xlu0 0
  %1663 = vperm.xlu0 %1662, %v1581
  %v1664 = vpop.permute.xlu0 %1663
  %1667 = vset.pattern.permute.xlu0 0
  %1668 = vperm.xlu0 %1667, %v1582
  %v1669 = vpop.permute.xlu0 %1668
  %1672 = vset.pattern.permute.xlu0 0
  %1673 = vperm.xlu0 %1672, %v1583
  %v1674 = vpop.permute.xlu0 %1673
  %1677 = vset.pattern.permute.xlu0 0
  %1678 = vperm.xlu0 %1677, %v1584
  %v1679 = vpop.permute.xlu0 %1678
  %1682 = vset.pattern.permute.xlu0 0
  %1683 = vperm.xlu0 %1682, %v1585
  %v1684 = vpop.permute.xlu0 %1683
  %1687 = vset.pattern.permute.xlu0 0
  %1688 = vperm.xlu0 %1687, %v1586
  %v1689 = vpop.permute.xlu0 %1688
  %1692 = vset.pattern.permute.xlu0 0
  %1693 = vperm.xlu0 %1692, %v1587
  %v1694 = vpop.permute.xlu0 %1693
  %1697 = vset.pattern.permute.xlu0 0
  %1698 = vperm.xlu0 %1697, %v1588
  %v1699 = vpop.permute.xlu0 %1698
  %1702 = vset.pattern.permute.xlu0 0
  %1703 = vperm.xlu0 %1702, %v1589
  %v1704 = vpop.permute.xlu0 %1703
  %1707 = vset.pattern.permute.xlu0 0
  %1708 = vperm.xlu0 %1707, %v1590
  %v1709 = vpop.permute.xlu0 %1708
  %1712 = vset.pattern.permute.xlu0 0
  %1713 = vperm.xlu0 %1712, %v1591
  %v1714 = vpop.permute.xlu0 %1713
  %1717 = vset.pattern.permute.xlu0 0
  %1718 = vperm.xlu0 %1717, %v1592
  %v1719 = vpop.permute.xlu0 %1718
  %1722 = vset.pattern.permute.xlu0 0
  %1723 = vperm.xlu0 %1722, %v1593
  %v1724 = vpop.permute.xlu0 %1723
  %1727 = vset.pattern.permute.xlu0 0
  %1728 = vperm.xlu0 %1727, %v1594
  %v1729 = vpop.permute.xlu0 %1728
  %1732 = vset.pattern.permute.xlu0 0
  %1733 = vperm.xlu0 %1732, %v1595
  %v1734 = vpop.permute.xlu0 %1733
  %1737 = vset.pattern.permute.xlu0 0
  %1738 = vperm.xlu0 %1737, %v1596
  %v1739 = vpop.permute.xlu0 %1738
  %1742 = vset.pattern.permute.xlu0 0
  %1743 = vperm.xlu0 %1742, %v1597
  %v1744 = vpop.permute.xlu0 %1743
  %1747 = vset.pattern.permute.xlu0 0
  %1748 = vperm.xlu0 %1747, %v1598
  %v1749 = vpop.permute.xlu0 %1748
  %1752 = vset.pattern.permute.xlu0 0
  %1753 = vperm.xlu0 %1752, %v1599
  %v1754 = vpop.permute.xlu0 %1753
  %1757 = vset.pattern.permute.xlu0 0
  %1758 = vperm.xlu0 %1757, %v1600
  %v1759 = vpop.permute.xlu0 %1758
  %1762 = vset.pattern.permute.xlu0 0
  %1763 = vperm.xlu0 %1762, %v1601
  %v1764 = vpop.permute.xlu0 %1763
  %1767 = vset.pattern.permute.xlu0 0
  %1768 = vperm.xlu0 %1767, %v1602
  %v1769 = vpop.permute.xlu0 %1768
  %1772 = vset.pattern.permute.xlu0 0
  %1773 = vperm.xlu0 %1772, %v1603
  %v1774 = vpop.permute.xlu0 %1773
  %1777 = vset.pattern.permute.xlu0 0
  %1778 = vperm.xlu0 %1777, %v1604
  %v1779 = vpop.permute.xlu0 %1778
  %1782 = vset.pattern.permute.xlu0 0
  %1783 = vperm.xlu0 %1782, %v1605
  %v1784 = vpop.permute.xlu0 %1783
  %1787 = vset.pattern.permute.xlu0 0
  %1788 = vperm.xlu0 %1787, %v1606
  %v1789 = vpop.permute.xlu0 %1788
  %1792 = vset.pattern.permute.xlu0 0
  %1793 = vperm.xlu0 %1792, %v1607
  %v1794 = vpop.permute.xlu0 %1793
  %1797 = vset.pattern.permute.xlu0 0
  %1798 = vperm.xlu0 %1797, %v1608
  %v1799 = vpop.permute.xlu0 %1798
  %1802 = vset.pattern.permute.xlu0 0
  %1803 = vperm.xlu0 %1802, %v1609
  %v1804 = vpop.permute.xlu0 %1803
  %1807 = vset.pattern.permute.xlu0 0
  %1808 = vperm.xlu0 %1807, %v1610
  %v1809 = vpop.permute.xlu0 %1808
  %1812 = vset.pattern.permute.xlu0 0
  %1813 = vperm.xlu0 %1812, %v1611
  %v1814 = vpop.permute.xlu0 %1813
  %1817 = vset.pattern.permute.xlu0 0
  %1818 = vperm.xlu0 %1817, %v1612
  %v1819 = vpop.permute.xlu0 %1818
  %1822 = vset.pattern.permute.xlu0 0
  %1823 = vperm.xlu0 %1822, %v1613
  %v1824 = vpop.permute.xlu0 %1823
  %1827 = vset.pattern.permute.xlu0 0
  %1828 = vperm.xlu0 %1827, %v1614
  %v1829 = vpop.permute.xlu0 %1828
  %1832 = vset.pattern.permute.xlu0 0
  %1833 = vperm.xlu0 %1832, %v1615
  %v1834 = vpop.permute.xlu0 %1833
  %1837 = vset.pattern.permute.xlu0 0
  %1838 = vperm.xlu0 %1837, %v1616
  %v1839 = vpop.permute.xlu0 %1838
  %1842 = vset.pattern.permute.xlu0 0
  %1843 = vperm.xlu0 %1842, %v1617
  %v1844 = vpop.permute.xlu0 %1843
  %1847 = vset.pattern.permute.xlu0 0
  %1848 = vperm.xlu0 %1847, %v1618
  %v1849 = vpop.permute.xlu0 %1848
  %1852 = vset.pattern.permute.xlu0 0
  %1853 = vperm.xlu0 %1852, %v1619
  %v1854 = vpop.permute.xlu0 %1853
  %1857 = vset.pattern.permute.xlu0 0
  %1858 = vperm.xlu0 %1857, %v1620
  %v1859 = vpop.permute.xlu0 %1858
  %1862 = vset.pattern.permute.xlu0 0
  %1863 = vperm.xlu0 %1862, %v1621
  %v1864 = vpop.permute.xlu0 %1863
  %1867 = vset.pattern.permute.xlu0 0
  %1868 = vperm.xlu0 %1867, %v1622
  %v1869 = vpop.permute.xlu0 %1868
  %1872 = vset.pattern.permute.xlu0 0
  %1873 = vperm.xlu0 %1872, %v1623
  %v1874 = vpop.permute.xlu0 %1873
  %1877 = vset.pattern.permute.xlu0 0
  %1878 = vperm.xlu0 %1877, %v1624
  %v1879 = vpop.permute.xlu0 %1878
  %1882 = vset.pattern.permute.xlu0 0
  %1883 = vperm.xlu0 %1882, %v1625
  %v1884 = vpop.permute.xlu0 %1883
  %1887 = vset.pattern.permute.xlu0 0
  %1888 = vperm.xlu0 %1887, %v1626
  %v1889 = vpop.permute.xlu0 %1888
  %1892 = vset.pattern.permute.xlu0 0
  %1893 = vperm.xlu0 %1892, %v1627
  %v1894 = vpop.permute.xlu0 %1893
  %1897 = vset.pattern.permute.xlu0 0
  %1898 = vperm.xlu0 %1897, %v1628
  %v1899 = vpop.permute.xlu0 %1898
  %1902 = vset.pattern.permute.xlu0 0
  %1903 = vperm.xlu0 %1902, %v1629
  %v1904 = vpop.permute.xlu0 %1903
  %1907 = vset.pattern.permute.xlu0 0
  %1908 = vperm.xlu0 %1907, %v1630
  %v1909 = vpop.permute.xlu0 %1908
  %1912 = vset.pattern.permute.xlu0 0
  %1913 = vperm.xlu0 %1912, %v1631
  %v1914 = vpop.permute.xlu0 %1913
  %1917 = vset.pattern.permute.xlu0 0
  %1918 = vperm.xlu0 %1917, %v1632
  %v1919 = vpop.permute.xlu0 %1918
  %1922 = vset.pattern.permute.xlu0 0
  %1923 = vperm.xlu0 %1922, %v1633
  %v1924 = vpop.permute.xlu0 %1923
  %1927 = vset.pattern.permute.xlu0 0
  %1928 = vperm.xlu0 %1927, %v1634
  %v1929 = vpop.permute.xlu0 %1928
  %1932 = vset.pattern.permute.xlu0 0
  %1933 = vperm.xlu0 %1932, %v1635
  %v1934 = vpop.permute.xlu0 %1933
  %1937 = vset.pattern.permute.xlu0 0
  %1938 = vperm.xlu0 %1937, %v1636
  %v1939 = vpop.permute.xlu0 %1938
  %1942 = vset.pattern.permute.xlu0 0
  %1943 = vperm.xlu0 %1942, %v1637
  %v1944 = vpop.permute.xlu0 %1943
  %1947 = vset.pattern.permute.xlu0 0
  %1948 = vperm.xlu0 %1947, %v1638
  %v1949 = vpop.permute.xlu0 %1948
  %1952 = vset.pattern.permute.xlu0 0
  %1953 = vperm.xlu0 %1952, %v1639
  %v1954 = vpop.permute.xlu0 %1953
  %1957 = vset.pattern.permute.xlu0 0
  %1958 = vperm.xlu0 %1957, %v1640
  %v1959 = vpop.permute.xlu0 %1958
  %v2025 = vunpack.c.l.b16 %v1508
  %v2026 = vunpack.c.l.b16 %v1509
  %v2027 = vunpack.c.l.b16 %v1510
  %v2028 = vunpack.c.l.b16 %v1511
  %v2029 = vunpack.c.l.b16 %v1512
  %v2030 = vunpack.c.l.b16 %v1513
  %v2031 = vunpack.c.l.b16 %v1514
  %v2032 = vunpack.c.l.b16 %v1515
  %v2033 = vunpack.c.l.b16 %v1516
  %v2034 = vunpack.c.l.b16 %v1517
  %v2035 = vunpack.c.l.b16 %v1518
  %v2036 = vunpack.c.l.b16 %v1519
  %v2037 = vunpack.c.l.b16 %v1520
  %v2038 = vunpack.c.l.b16 %v1521
  %v2039 = vunpack.c.l.b16 %v1522
  %v2040 = vunpack.c.l.b16 %v1523
  %v2041 = vunpack.c.l.b16 %v1524
  %v2042 = vunpack.c.l.b16 %v1525
  %v2043 = vunpack.c.l.b16 %v1526
  %v2044 = vunpack.c.l.b16 %v1527
  %v2045 = vunpack.c.l.b16 %v1528
  %v2046 = vunpack.c.l.b16 %v1529
  %v2047 = vunpack.c.l.b16 %v1530
  %v2048 = vunpack.c.l.b16 %v1531
  %v2049 = vunpack.c.l.b16 %v1532
  %v2050 = vunpack.c.l.b16 %v1533
  %v2051 = vunpack.c.l.b16 %v1534
  %v2052 = vunpack.c.l.b16 %v1535
  %v2053 = vunpack.c.l.b16 %v1536
  %v2054 = vunpack.c.l.b16 %v1537
  %v2055 = vunpack.c.l.b16 %v1538
  %v2056 = vunpack.c.l.b16 %v1539
  %v2057 = vunpack.c.l.b16 %v1540
  %v2058 = vunpack.c.l.b16 %v1541
  %v2059 = vunpack.c.l.b16 %v1542
  %v2060 = vunpack.c.l.b16 %v1543
  %v2061 = vunpack.c.l.b16 %v1544
  %v2062 = vunpack.c.l.b16 %v1545
  %v2063 = vunpack.c.l.b16 %v1546
  %v2064 = vunpack.c.l.b16 %v1547
  %v2065 = vunpack.c.l.b16 %v1548
  %v2066 = vunpack.c.l.b16 %v1549
  %v2067 = vunpack.c.l.b16 %v1550
  %v2068 = vunpack.c.l.b16 %v1551
  %v2069 = vunpack.c.l.b16 %v1552
  %v2070 = vunpack.c.l.b16 %v1553
  %v2071 = vunpack.c.l.b16 %v1554
  %v2072 = vunpack.c.l.b16 %v1555
  %v2073 = vunpack.c.l.b16 %v1556
  %v2074 = vunpack.c.l.b16 %v1557
  %v2075 = vunpack.c.l.b16 %v1558
  %v2076 = vunpack.c.l.b16 %v1559
  %v2077 = vunpack.c.l.b16 %v1560
  %v2078 = vunpack.c.l.b16 %v1561
  %v2079 = vunpack.c.l.b16 %v1562
  %v2080 = vunpack.c.l.b16 %v1563
  %v2081 = vunpack.c.l.b16 %v1564
  %v2082 = vunpack.c.l.b16 %v1565
  %v2083 = vunpack.c.l.b16 %v1566
  %v2084 = vunpack.c.l.b16 %v1567
  %v2085 = vunpack.c.l.b16 %v1568
  %v2086 = vunpack.c.l.b16 %v1569
  %v2087 = vunpack.c.l.b16 %v1570
  %v2088 = vunpack.c.l.b16 %v1571
  %v2089 = vpack.c.b16 %v2026, %v2025
  %v2090 = vpack.c.b16 %v2028, %v2027
  %v2091 = vpack.c.b16 %v2030, %v2029
  %v2092 = vpack.c.b16 %v2032, %v2031
  %v2093 = vpack.c.b16 %v2034, %v2033
  %v2094 = vpack.c.b16 %v2036, %v2035
  %v2095 = vpack.c.b16 %v2038, %v2037
  %v2096 = vpack.c.b16 %v2040, %v2039
  %v2097 = vpack.c.b16 %v2042, %v2041
  %v2098 = vpack.c.b16 %v2044, %v2043
  %v2099 = vpack.c.b16 %v2046, %v2045
  %v2100 = vpack.c.b16 %v2048, %v2047
  %v2101 = vpack.c.b16 %v2050, %v2049
  %v2102 = vpack.c.b16 %v2052, %v2051
  %v2103 = vpack.c.b16 %v2054, %v2053
  %v2104 = vpack.c.b16 %v2056, %v2055
  %v2105 = vpack.c.b16 %v2058, %v2057
  %v2106 = vpack.c.b16 %v2060, %v2059
  %v2107 = vpack.c.b16 %v2062, %v2061
  %v2108 = vpack.c.b16 %v2064, %v2063
  %v2109 = vpack.c.b16 %v2066, %v2065
  %v2110 = vpack.c.b16 %v2068, %v2067
  %v2111 = vpack.c.b16 %v2070, %v2069
  %v2112 = vpack.c.b16 %v2072, %v2071
  %v2113 = vpack.c.b16 %v2074, %v2073
  %v2114 = vpack.c.b16 %v2076, %v2075
  %v2115 = vpack.c.b16 %v2078, %v2077
  %v2116 = vpack.c.b16 %v2080, %v2079
  %v2117 = vpack.c.b16 %v2082, %v2081
  %v2118 = vpack.c.b16 %v2084, %v2083
  %v2119 = vpack.c.b16 %v2086, %v2085
  %v2120 = vpack.c.b16 %v2088, %v2087
  %v2124 = vunpack.c.l.b16 %v1573
  %v2125 = vunpack.c.l.b16 %v1574
  %v2126 = vunpack.c.l.b16 %v1575
  %v2127 = vpack.c.b16 %v2125, %v2124
  %v2128 = vpack.c.b16 %v2126, %v2126
  %v2131 = vsel %vm660, %v2089, 0
  %v2134 = vsel %vm660, %v2090, 0
  %v2137 = vsel %vm660, %v2091, 0
  %v2140 = vsel %vm660, %v2092, 0
  %v2143 = vsel %vm660, %v2093, 0
  %v2146 = vsel %vm660, %v2094, 0
  %v2149 = vsel %vm660, %v2095, 0
  %v2152 = vsel %vm660, %v2096, 0
  %v2155 = vsel %vm660, %v2097, 0
  %v2158 = vsel %vm660, %v2098, 0
  %v2161 = vsel %vm660, %v2099, 0
  %v2164 = vsel %vm660, %v2100, 0
  %v2167 = vsel %vm660, %v2101, 0
  %v2170 = vsel %vm660, %v2102, 0
  %v2173 = vsel %vm660, %v2103, 0
  %v2176 = vsel %vm660, %v2104, 0
  %v2179 = vsel %vm660, %v2105, 0
  %v2182 = vsel %vm660, %v2106, 0
  %v2185 = vsel %vm660, %v2107, 0
  %v2188 = vsel %vm660, %v2108, 0
  %v2191 = vsel %vm660, %v2109, 0
  %v2194 = vsel %vm660, %v2110, 0
  %v2197 = vsel %vm660, %v2111, 0
  %v2200 = vsel %vm660, %v2112, 0
  %v2203 = vsel %vm660, %v2113, 0
  %v2206 = vsel %vm660, %v2114, 0
  %v2209 = vsel %vm660, %v2115, 0
  %v2212 = vsel %vm660, %v2116, 0
  %v2215 = vsel %vm660, %v2117, 0
  %v2218 = vsel %vm660, %v2118, 0
  %v2221 = vsel %vm660, %v2119, 0
  %v2224 = vsel %vm660, %v2120, 0
  %v2227 = vsel %vm757, %v2128, 0
  %2229 = vmatprep.subr.bf16.mxu0 0
  %2230 = vmatpush1.bf16.msra.mxu0 %v2127
  %2231 = vmatprep.subr.bf16.mxu0 0
  %2232 = vmatpush1.bf16.msra.mxu0 %v2227
  %2233 = vmatprep.subr.bf16.mxu0 0
  %2234 = vmatpush1.bf16.msra.mxu0 0
  %2235 = vmatprep.subr.bf16.mxu0 0
  %2236 = vmatpush1.bf16.msra.mxu0 0
  %2237 = vmatprep.subr.bf16.mxu0 0
  %2238 = vmatpush1.bf16.msra.mxu0 0
  %2239 = vmatprep.subr.bf16.mxu0 0
  %2240 = vmatpush1.bf16.msra.mxu0 0
  %2241 = vmatprep.subr.bf16.mxu0 0
  %2242 = vmatpush1.bf16.msra.mxu0 0
  %2243 = vmatprep.subr.bf16.mxu0 0
  %2244 = vmatpush1.bf16.msra.mxu0 0
  %2245 = vmatprep.subr.bf16.mxu0 0
  %2246 = vmatpush1.bf16.msra.mxu0 0
  %2247 = vmatprep.subr.bf16.mxu0 0
  %2248 = vmatpush1.bf16.msra.mxu0 0
  %2249 = vmatprep.subr.bf16.mxu0 0
  %2250 = vmatpush1.bf16.msra.mxu0 0
  %2251 = vmatprep.subr.bf16.mxu0 0
  %2252 = vmatpush1.bf16.msra.mxu0 0
  %2253 = vmatprep.subr.bf16.mxu0 0
  %2254 = vmatpush1.bf16.msra.mxu0 0
  %2255 = vmatprep.subr.bf16.mxu0 0
  %2256 = vmatpush1.bf16.msra.mxu0 0
  %2257 = vmatprep.subr.bf16.mxu0 0
  %2258 = vmatpush1.bf16.msra.mxu0 0
  %2259 = vmatprep.subr.bf16.mxu0 0
  %2260 = vmatpush1.bf16.msra.mxu0 0
  %2261 = vmatprep.mubr.bf16.mxu0 0
  %2262 = vmatmul.mubr.bf16.gmra.mrb[0].mxu0 %v2131
  %v2263 = vpop.f32.mrb[0].mxu0
  %v2264 = vadd.f32 %v1644, %v2263
  %v2265 = vpop.f32.mrb[0].mxu0
  %v2266 = vpop.f32.mrb[0].mxu0
  %v2267 = vadd.f32 %v1649, %v2266
  %v2268 = vpop.f32.mrb[0].mxu0
  %2269 = vmatprep.mubr.bf16.mxu0 0
  %2270 = vmatmul.mubr.bf16.gmra.mrb[0].mxu0 %v2134
  %v2271 = vpop.f32.mrb[0].mxu0
  %v2272 = vadd.f32 %v1654, %v2271
  %v2273 = vpop.f32.mrb[0].mxu0
  %v2274 = vpop.f32.mrb[0].mxu0
  %v2275 = vadd.f32 %v1659, %v2274
  %v2276 = vpop.f32.mrb[0].mxu0
  %2277 = vmatprep.mubr.bf16.mxu0 0
  %2278 = vmatmul.mubr.bf16.gmra.mrb[0].mxu0 %v2137
  %v2279 = vpop.f32.mrb[0].mxu0
  %v2280 = vadd.f32 %v1664, %v2279
  %v2281 = vpop.f32.mrb[0].mxu0
  %v2282 = vpop.f32.mrb[0].mxu0
  %v2283 = vadd.f32 %v1669, %v2282
  %v2284 = vpop.f32.mrb[0].mxu0
  %2285 = vmatprep.mubr.bf16.mxu0 0
  %2286 = vmatmul.mubr.bf16.gmra.mrb[0].mxu0 %v2140
  %v2287 = vpop.f32.mrb[0].mxu0
  %v2288 = vadd.f32 %v1674, %v2287
  %v2289 = vpop.f32.mrb[0].mxu0
  %v2290 = vpop.f32.mrb[0].mxu0
  %v2291 = vadd.f32 %v1679, %v2290
  %v2292 = vpop.f32.mrb[0].mxu0
  %2293 = vmatprep.mubr.bf16.mxu0 0
  %2294 = vmatmul.mubr.bf16.gmra.mrb[0].mxu0 %v2143
  %v2295 = vpop.f32.mrb[0].mxu0
  %v2296 = vadd.f32 %v1684, %v2295
  %v2297 = vpop.f32.mrb[0].mxu0
  %v2298 = vpop.f32.mrb[0].mxu0
  %v2299 = vadd.f32 %v1689, %v2298
  %v2300 = vpop.f32.mrb[0].mxu0
  %2301 = vmatprep.mubr.bf16.mxu0 0
  %2302 = vmatmul.mubr.bf16.gmra.mrb[0].mxu0 %v2146
  %v2303 = vpop.f32.mrb[0].mxu0
  %v2304 = vadd.f32 %v1694, %v2303
  %v2305 = vpop.f32.mrb[0].mxu0
  %v2306 = vpop.f32.mrb[0].mxu0
  %v2307 = vadd.f32 %v1699, %v2306
  %v2308 = vpop.f32.mrb[0].mxu0
  %2309 = vmatprep.mubr.bf16.mxu0 0
  %2310 = vmatmul.mubr.bf16.gmra.mrb[0].mxu0 %v2149
  %v2311 = vpop.f32.mrb[0].mxu0
  %v2312 = vadd.f32 %v1704, %v2311
  %v2313 = vpop.f32.mrb[0].mxu0
  %v2314 = vpop.f32.mrb[0].mxu0
  %v2315 = vadd.f32 %v1709, %v2314
  %v2316 = vpop.f32.mrb[0].mxu0
  %2317 = vmatprep.mubr.bf16.mxu0 0
  %2318 = vmatmul.mubr.bf16.gmra.mrb[0].mxu0 %v2152
  %v2319 = vpop.f32.mrb[0].mxu0
  %v2320 = vadd.f32 %v1714, %v2319
  %v2321 = vpop.f32.mrb[0].mxu0
  %v2322 = vpop.f32.mrb[0].mxu0
  %v2323 = vadd.f32 %v1719, %v2322
  %v2324 = vpop.f32.mrb[0].mxu0
  %2325 = vmatprep.mubr.bf16.mxu0 0
  %2326 = vmatmul.mubr.bf16.gmra.mrb[0].mxu0 %v2155
  %v2327 = vpop.f32.mrb[0].mxu0
  %v2328 = vadd.f32 %v1724, %v2327
  %v2329 = vpop.f32.mrb[0].mxu0
  %v2330 = vpop.f32.mrb[0].mxu0
  %v2331 = vadd.f32 %v1729, %v2330
  %v2332 = vpop.f32.mrb[0].mxu0
  %2333 = vmatprep.mubr.bf16.mxu0 0
  %2334 = vmatmul.mubr.bf16.gmra.mrb[0].mxu0 %v2158
  %v2335 = vpop.f32.mrb[0].mxu0
  %v2336 = vadd.f32 %v1734, %v2335
  %v2337 = vpop.f32.mrb[0].mxu0
  %v2338 = vpop.f32.mrb[0].mxu0
  %v2339 = vadd.f32 %v1739, %v2338
  %v2340 = vpop.f32.mrb[0].mxu0
  %2341 = vmatprep.mubr.bf16.mxu0 0
  %2342 = vmatmul.mubr.bf16.gmra.mrb[0].mxu0 %v2161
  %v2343 = vpop.f32.mrb[0].mxu0
  %v2344 = vadd.f32 %v1744, %v2343
  %v2345 = vpop.f32.mrb[0].mxu0
  %v2346 = vpop.f32.mrb[0].mxu0
  %v2347 = vadd.f32 %v1749, %v2346
  %v2348 = vpop.f32.mrb[0].mxu0
  %2349 = vmatprep.mubr.bf16.mxu0 0
  %2350 = vmatmul.mubr.bf16.gmra.mrb[0].mxu0 %v2164
  %v2351 = vpop.f32.mrb[0].mxu0
  %v2352 = vadd.f32 %v1754, %v2351
  %v2353 = vpop.f32.mrb[0].mxu0
  %v2354 = vpop.f32.mrb[0].mxu0
  %v2355 = vadd.f32 %v1759, %v2354
  %v2356 = vpop.f32.mrb[0].mxu0
  %2357 = vmatprep.mubr.bf16.mxu0 0
  %2358 = vmatmul.mubr.bf16.gmra.mrb[0].mxu0 %v2167
  %v2359 = vpop.f32.mrb[0].mxu0
  %v2360 = vadd.f32 %v1764, %v2359
  %v2361 = vpop.f32.mrb[0].mxu0
  %v2362 = vpop.f32.mrb[0].mxu0
  %v2363 = vadd.f32 %v1769, %v2362
  %v2364 = vpop.f32.mrb[0].mxu0
  %2365 = vmatprep.mubr.bf16.mxu0 0
  %2366 = vmatmul.mubr.bf16.gmra.mrb[0].mxu0 %v2170
  %v2367 = vpop.f32.mrb[0].mxu0
  %v2368 = vadd.f32 %v1774, %v2367
  %v2369 = vpop.f32.mrb[0].mxu0
  %v2370 = vpop.f32.mrb[0].mxu0
  %v2371 = vadd.f32 %v1779, %v2370
  %v2372 = vpop.f32.mrb[0].mxu0
  %2373 = vmatprep.mubr.bf16.mxu0 0
  %2374 = vmatmul.mubr.bf16.gmra.mrb[0].mxu0 %v2173
  %v2375 = vpop.f32.mrb[0].mxu0
  %v2376 = vadd.f32 %v1784, %v2375
  %v2377 = vpop.f32.mrb[0].mxu0
  %v2378 = vpop.f32.mrb[0].mxu0
  %v2379 = vadd.f32 %v1789, %v2378
  %v2380 = vpop.f32.mrb[0].mxu0
  %2381 = vmatprep.mubr.bf16.mxu0 0
  %2382 = vmatmul.mubr.bf16.gmra.mrb[0].mxu0 %v2176
  %v2383 = vpop.f32.mrb[0].mxu0
  %v2384 = vadd.f32 %v1794, %v2383
  %v2385 = vpop.f32.mrb[0].mxu0
  %v2386 = vpop.f32.mrb[0].mxu0
  %v2387 = vadd.f32 %v1799, %v2386
  %v2388 = vpop.f32.mrb[0].mxu0
  %2389 = vmatprep.mubr.bf16.mxu0 0
  %2390 = vmatmul.mubr.bf16.gmra.mrb[0].mxu0 %v2179
  %v2391 = vpop.f32.mrb[0].mxu0
  %v2392 = vadd.f32 %v1804, %v2391
  %v2393 = vpop.f32.mrb[0].mxu0
  %v2394 = vpop.f32.mrb[0].mxu0
  %v2395 = vadd.f32 %v1809, %v2394
  %v2396 = vpop.f32.mrb[0].mxu0
  %2397 = vmatprep.mubr.bf16.mxu0 0
  %2398 = vmatmul.mubr.bf16.gmra.mrb[0].mxu0 %v2182
  %v2399 = vpop.f32.mrb[0].mxu0
  %v2400 = vadd.f32 %v1814, %v2399
  %v2401 = vpop.f32.mrb[0].mxu0
  %v2402 = vpop.f32.mrb[0].mxu0
  %v2403 = vadd.f32 %v1819, %v2402
  %v2404 = vpop.f32.mrb[0].mxu0
  %2405 = vmatprep.mubr.bf16.mxu0 0
  %2406 = vmatmul.mubr.bf16.gmra.mrb[0].mxu0 %v2185
  %v2407 = vpop.f32.mrb[0].mxu0
  %v2408 = vadd.f32 %v1824, %v2407
  %v2409 = vpop.f32.mrb[0].mxu0
  %v2410 = vpop.f32.mrb[0].mxu0
  %v2411 = vadd.f32 %v1829, %v2410
  %v2412 = vpop.f32.mrb[0].mxu0
  %2413 = vmatprep.mubr.bf16.mxu0 0
  %2414 = vmatmul.mubr.bf16.gmra.mrb[0].mxu0 %v2188
  %v2415 = vpop.f32.mrb[0].mxu0
  %v2416 = vadd.f32 %v1834, %v2415
  %v2417 = vpop.f32.mrb[0].mxu0
  %v2418 = vpop.f32.mrb[0].mxu0
  %v2419 = vadd.f32 %v1839, %v2418
  %v2420 = vpop.f32.mrb[0].mxu0
  %2421 = vmatprep.mubr.bf16.mxu0 0
  %2422 = vmatmul.mubr.bf16.gmra.mrb[0].mxu0 %v2191
  %v2423 = vpop.f32.mrb[0].mxu0
  %v2424 = vadd.f32 %v1844, %v2423
  %v2425 = vpop.f32.mrb[0].mxu0
  %v2426 = vpop.f32.mrb[0].mxu0
  %v2427 = vadd.f32 %v1849, %v2426
  %v2428 = vpop.f32.mrb[0].mxu0
  %2429 = vmatprep.mubr.bf16.mxu0 0
  %2430 = vmatmul.mubr.bf16.gmra.mrb[0].mxu0 %v2194
  %v2431 = vpop.f32.mrb[0].mxu0
  %v2432 = vadd.f32 %v1854, %v2431
  %v2433 = vpop.f32.mrb[0].mxu0
  %v2434 = vpop.f32.mrb[0].mxu0
  %v2435 = vadd.f32 %v1859, %v2434
  %v2436 = vpop.f32.mrb[0].mxu0
  %2437 = vmatprep.mubr.bf16.mxu0 0
  %2438 = vmatmul.mubr.bf16.gmra.mrb[0].mxu0 %v2197
  %v2439 = vpop.f32.mrb[0].mxu0
  %v2440 = vadd.f32 %v1864, %v2439
  %v2441 = vpop.f32.mrb[0].mxu0
  %v2442 = vpop.f32.mrb[0].mxu0
  %v2443 = vadd.f32 %v1869, %v2442
  %v2444 = vpop.f32.mrb[0].mxu0
  %2445 = vmatprep.mubr.bf16.mxu0 0
  %2446 = vmatmul.mubr.bf16.gmra.mrb[0].mxu0 %v2200
  %v2447 = vpop.f32.mrb[0].mxu0
  %v2448 = vadd.f32 %v1874, %v2447
  %v2449 = vpop.f32.mrb[0].mxu0
  %v2450 = vpop.f32.mrb[0].mxu0
  %v2451 = vadd.f32 %v1879, %v2450
  %v2452 = vpop.f32.mrb[0].mxu0
  %2453 = vmatprep.mubr.bf16.mxu0 0
  %2454 = vmatmul.mubr.bf16.gmra.mrb[0].mxu0 %v2203
  %v2455 = vpop.f32.mrb[0].mxu0
  %v2456 = vadd.f32 %v1884, %v2455
  %v2457 = vpop.f32.mrb[0].mxu0
  %v2458 = vpop.f32.mrb[0].mxu0
  %v2459 = vadd.f32 %v1889, %v2458
  %v2460 = vpop.f32.mrb[0].mxu0
  %2461 = vmatprep.mubr.bf16.mxu0 0
  %2462 = vmatmul.mubr.bf16.gmra.mrb[0].mxu0 %v2206
  %v2463 = vpop.f32.mrb[0].mxu0
  %v2464 = vadd.f32 %v1894, %v2463
  %v2465 = vpop.f32.mrb[0].mxu0
  %v2466 = vpop.f32.mrb[0].mxu0
  %v2467 = vadd.f32 %v1899, %v2466
  %v2468 = vpop.f32.mrb[0].mxu0
  %2469 = vmatprep.mubr.bf16.mxu0 0
  %2470 = vmatmul.mubr.bf16.gmra.mrb[0].mxu0 %v2209
  %v2471 = vpop.f32.mrb[0].mxu0
  %v2472 = vadd.f32 %v1904, %v2471
  %v2473 = vpop.f32.mrb[0].mxu0
  %v2474 = vpop.f32.mrb[0].mxu0
  %v2475 = vadd.f32 %v1909, %v2474
  %v2476 = vpop.f32.mrb[0].mxu0
  %2477 = vmatprep.mubr.bf16.mxu0 0
  %2478 = vmatmul.mubr.bf16.gmra.mrb[0].mxu0 %v2212
  %v2479 = vpop.f32.mrb[0].mxu0
  %v2480 = vadd.f32 %v1914, %v2479
  %v2481 = vpop.f32.mrb[0].mxu0
  %v2482 = vpop.f32.mrb[0].mxu0
  %v2483 = vadd.f32 %v1919, %v2482
  %v2484 = vpop.f32.mrb[0].mxu0
  %2485 = vmatprep.mubr.bf16.mxu0 0
  %2486 = vmatmul.mubr.bf16.gmra.mrb[0].mxu0 %v2215
  %v2487 = vpop.f32.mrb[0].mxu0
  %v2488 = vadd.f32 %v1924, %v2487
  %v2489 = vpop.f32.mrb[0].mxu0
  %v2490 = vpop.f32.mrb[0].mxu0
  %v2491 = vadd.f32 %v1929, %v2490
  %v2492 = vpop.f32.mrb[0].mxu0
  %2493 = vmatprep.mubr.bf16.mxu0 0
  %2494 = vmatmul.mubr.bf16.gmra.mrb[0].mxu0 %v2218
  %v2495 = vpop.f32.mrb[0].mxu0
  %v2496 = vadd.f32 %v1934, %v2495
  %v2497 = vpop.f32.mrb[0].mxu0
  %v2498 = vpop.f32.mrb[0].mxu0
  %v2499 = vadd.f32 %v1939, %v2498
  %v2500 = vpop.f32.mrb[0].mxu0
  %2501 = vmatprep.mubr.bf16.mxu0 0
  %2502 = vmatmul.mubr.bf16.gmra.mrb[0].mxu0 %v2221
  %v2503 = vpop.f32.mrb[0].mxu0
  %v2504 = vadd.f32 %v1944, %v2503
  %v2505 = vpop.f32.mrb[0].mxu0
  %v2506 = vpop.f32.mrb[0].mxu0
  %v2507 = vadd.f32 %v1949, %v2506
  %v2508 = vpop.f32.mrb[0].mxu0
  %2509 = vmatprep.mubr.bf16.mxu0 0
  %2510 = vmatmul.mubr.bf16.gmra.mrb[0].mxu0 %v2224
  %v2511 = vpop.f32.mrb[0].mxu0
  %v2512 = vadd.f32 %v1954, %v2511
  %v2513 = vpop.f32.mrb[0].mxu0
  %v2514 = vpop.f32.mrb[0].mxu0
  %v2515 = vadd.f32 %v1959, %v2514
  %v2516 = vpop.f32.mrb[0].mxu0
  %2517 = vdwg.mxu0
  %vm2518 = vcmp.ge.f32.partialorder %v2264, 0.0
  %vm2519 = vcmp.ge.f32.partialorder %v2267, 0.0
  %vm2520 = vcmp.ge.f32.partialorder %v2272, 0.0
  %vm2521 = vcmp.ge.f32.partialorder %v2275, 0.0
  %vm2522 = vcmp.ge.f32.partialorder %v2280, 0.0
  %vm2523 = vcmp.ge.f32.partialorder %v2283, 0.0
  %vm2524 = vcmp.ge.f32.partialorder %v2288, 0.0
  %vm2525 = vcmp.ge.f32.partialorder %v2291, 0.0
  %vm2526 = vcmp.ge.f32.partialorder %v2296, 0.0
  %vm2527 = vcmp.ge.f32.partialorder %v2299, 0.0
  %vm2528 = vcmp.ge.f32.partialorder %v2304, 0.0
  %vm2529 = vcmp.ge.f32.partialorder %v2307, 0.0
  %vm2530 = vcmp.ge.f32.partialorder %v2312, 0.0
  %vm2531 = vcmp.ge.f32.partialorder %v2315, 0.0
  %vm2532 = vcmp.ge.f32.partialorder %v2320, 0.0
  %vm2533 = vcmp.ge.f32.partialorder %v2323, 0.0
  %vm2534 = vcmp.ge.f32.partialorder %v2328, 0.0
  %vm2535 = vcmp.ge.f32.partialorder %v2331, 0.0
  %vm2536 = vcmp.ge.f32.partialorder %v2336, 0.0
  %vm2537 = vcmp.ge.f32.partialorder %v2339, 0.0
  %vm2538 = vcmp.ge.f32.partialorder %v2344, 0.0
  %vm2539 = vcmp.ge.f32.partialorder %v2347, 0.0
  %vm2540 = vcmp.ge.f32.partialorder %v2352, 0.0
  %vm2541 = vcmp.ge.f32.partialorder %v2355, 0.0
  %vm2542 = vcmp.ge.f32.partialorder %v2360, 0.0
  %vm2543 = vcmp.ge.f32.partialorder %v2363, 0.0
  %vm2544 = vcmp.ge.f32.partialorder %v2368, 0.0
  %vm2545 = vcmp.ge.f32.partialorder %v2371, 0.0
  %vm2546 = vcmp.ge.f32.partialorder %v2376, 0.0
  %vm2547 = vcmp.ge.f32.partialorder %v2379, 0.0
  %vm2548 = vcmp.ge.f32.partialorder %v2384, 0.0
  %vm2549 = vcmp.ge.f32.partialorder %v2387, 0.0
  %vm2550 = vcmp.ge.f32.partialorder %v2392, 0.0
  %vm2551 = vcmp.ge.f32.partialorder %v2395, 0.0
  %vm2552 = vcmp.ge.f32.partialorder %v2400, 0.0
  %vm2553 = vcmp.ge.f32.partialorder %v2403, 0.0
  %vm2554 = vcmp.ge.f32.partialorder %v2408, 0.0
  %vm2555 = vcmp.ge.f32.partialorder %v2411, 0.0
  %vm2556 = vcmp.ge.f32.partialorder %v2416, 0.0
  %vm2557 = vcmp.ge.f32.partialorder %v2419, 0.0
  %vm2558 = vcmp.ge.f32.partialorder %v2424, 0.0
  %vm2559 = vcmp.ge.f32.partialorder %v2427, 0.0
  %vm2560 = vcmp.ge.f32.partialorder %v2432, 0.0
  %vm2561 = vcmp.ge.f32.partialorder %v2435, 0.0
  %vm2562 = vcmp.ge.f32.partialorder %v2440, 0.0
  %vm2563 = vcmp.ge.f32.partialorder %v2443, 0.0
  %vm2564 = vcmp.ge.f32.partialorder %v2448, 0.0
  %vm2565 = vcmp.ge.f32.partialorder %v2451, 0.0
  %vm2566 = vcmp.ge.f32.partialorder %v2456, 0.0
  %vm2567 = vcmp.ge.f32.partialorder %v2459, 0.0
  %vm2568 = vcmp.ge.f32.partialorder %v2464, 0.0
  %vm2569 = vcmp.ge.f32.partialorder %v2467, 0.0
  %vm2570 = vcmp.ge.f32.partialorder %v2472, 0.0
  %vm2571 = vcmp.ge.f32.partialorder %v2475, 0.0
  %vm2572 = vcmp.ge.f32.partialorder %v2480, 0.0
  %vm2573 = vcmp.ge.f32.partialorder %v2483, 0.0
  %vm2574 = vcmp.ge.f32.partialorder %v2488, 0.0
  %vm2575 = vcmp.ge.f32.partialorder %v2491, 0.0
  %vm2576 = vcmp.ge.f32.partialorder %v2496, 0.0
  %vm2577 = vcmp.ge.f32.partialorder %v2499, 0.0
  %vm2578 = vcmp.ge.f32.partialorder %v2504, 0.0
  %vm2579 = vcmp.ge.f32.partialorder %v2507, 0.0
  %vm2580 = vcmp.ge.f32.partialorder %v2512, 0.0
  %vm2581 = vcmp.ge.f32.partialorder %v2515, 0.0
  %v2582 = vmul.f32 %v2264, 0.1
  %v2583 = vmul.f32 %v2267, 0.1
  %v2584 = vmul.f32 %v2272, 0.1
  %v2585 = vmul.f32 %v2275, 0.1
  %v2586 = vmul.f32 %v2280, 0.1
  %v2587 = vmul.f32 %v2283, 0.1
  %v2588 = vmul.f32 %v2288, 0.1
  %v2589 = vmul.f32 %v2291, 0.1
  %v2590 = vmul.f32 %v2296, 0.1
  %v2591 = vmul.f32 %v2299, 0.1
  %v2592 = vmul.f32 %v2304, 0.1
  %v2593 = vmul.f32 %v2307, 0.1
  %v2594 = vmul.f32 %v2312, 0.1
  %v2595 = vmul.f32 %v2315, 0.1
  %v2596 = vmul.f32 %v2320, 0.1
  %v2597 = vmul.f32 %v2323, 0.1
  %v2598 = vmul.f32 %v2328, 0.1
  %v2599 = vmul.f32 %v2331, 0.1
  %v2600 = vmul.f32 %v2336, 0.1
  %v2601 = vmul.f32 %v2339, 0.1
  %v2602 = vmul.f32 %v2344, 0.1
  %v2603 = vmul.f32 %v2347, 0.1
  %v2604 = vmul.f32 %v2352, 0.1
  %v2605 = vmul.f32 %v2355, 0.1
  %v2606 = vmul.f32 %v2360, 0.1
  %v2607 = vmul.f32 %v2363, 0.1
  %v2608 = vmul.f32 %v2368, 0.1
  %v2609 = vmul.f32 %v2371, 0.1
  %v2610 = vmul.f32 %v2376, 0.1
  %v2611 = vmul.f32 %v2379, 0.1
  %v2612 = vmul.f32 %v2384, 0.1
  %v2613 = vmul.f32 %v2387, 0.1
  %v2614 = vmul.f32 %v2392, 0.1
  %v2615 = vmul.f32 %v2395, 0.1
  %v2616 = vmul.f32 %v2400, 0.1
  %v2617 = vmul.f32 %v2403, 0.1
  %v2618 = vmul.f32 %v2408, 0.1
  %v2619 = vmul.f32 %v2411, 0.1
  %v2620 = vmul.f32 %v2416, 0.1
  %v2621 = vmul.f32 %v2419, 0.1
  %v2622 = vmul.f32 %v2424, 0.1
  %v2623 = vmul.f32 %v2427, 0.1
  %v2624 = vmul.f32 %v2432, 0.1
  %v2625 = vmul.f32 %v2435, 0.1
  %v2626 = vmul.f32 %v2440, 0.1
  %v2627 = vmul.f32 %v2443, 0.1
  %v2628 = vmul.f32 %v2448, 0.1
  %v2629 = vmul.f32 %v2451, 0.1
  %v2630 = vmul.f32 %v2456, 0.1
  %v2631 = vmul.f32 %v2459, 0.1
  %v2632 = vmul.f32 %v2464, 0.1
  %v2633 = vmul.f32 %v2467, 0.1
  %v2634 = vmul.f32 %v2472, 0.1
  %v2635 = vmul.f32 %v2475, 0.1
  %v2636 = vmul.f32 %v2480, 0.1
  %v2637 = vmul.f32 %v2483, 0.1
  %v2638 = vmul.f32 %v2488, 0.1
  %v2639 = vmul.f32 %v2491, 0.1
  %v2640 = vmul.f32 %v2496, 0.1
  %v2641 = vmul.f32 %v2499, 0.1
  %v2642 = vmul.f32 %v2504, 0.1
  %v2643 = vmul.f32 %v2507, 0.1
  %v2644 = vmul.f32 %v2512, 0.1
  %v2645 = vmul.f32 %v2515, 0.1
  %v2646 = vsel %vm2518, %v2264, %v2582
  %v2647 = vsel %vm2519, %v2267, %v2583
  %v2648 = vsel %vm2520, %v2272, %v2584
  %v2649 = vsel %vm2521, %v2275, %v2585
  %v2650 = vsel %vm2522, %v2280, %v2586
  %v2651 = vsel %vm2523, %v2283, %v2587
  %v2652 = vsel %vm2524, %v2288, %v2588
  %v2653 = vsel %vm2525, %v2291, %v2589
  %v2654 = vsel %vm2526, %v2296, %v2590
  %v2655 = vsel %vm2527, %v2299, %v2591
  %v2656 = vsel %vm2528, %v2304, %v2592
  %v2657 = vsel %vm2529, %v2307, %v2593
  %v2658 = vsel %vm2530, %v2312, %v2594
  %v2659 = vsel %vm2531, %v2315, %v2595
  %v2660 = vsel %vm2532, %v2320, %v2596
  %v2661 = vsel %vm2533, %v2323, %v2597
  %v2662 = vsel %vm2534, %v2328, %v2598
  %v2663 = vsel %vm2535, %v2331, %v2599
  %v2664 = vsel %vm2536, %v2336, %v2600
  %v2665 = vsel %vm2537, %v2339, %v2601
  %v2666 = vsel %vm2538, %v2344, %v2602
  %v2667 = vsel %vm2539, %v2347, %v2603
  %v2668 = vsel %vm2540, %v2352, %v2604
  %v2669 = vsel %vm2541, %v2355, %v2605
  %v2670 = vsel %vm2542, %v2360, %v2606
  %v2671 = vsel %vm2543, %v2363, %v2607
  %v2672 = vsel %vm2544, %v2368, %v2608
  %v2673 = vsel %vm2545, %v2371, %v2609
  %v2674 = vsel %vm2546, %v2376, %v2610
  %v2675 = vsel %vm2547, %v2379, %v2611
  %v2676 = vsel %vm2548, %v2384, %v2612
  %v2677 = vsel %vm2549, %v2387, %v2613
  %v2678 = vsel %vm2550, %v2392, %v2614
  %v2679 = vsel %vm2551, %v2395, %v2615
  %v2680 = vsel %vm2552, %v2400, %v2616
  %v2681 = vsel %vm2553, %v2403, %v2617
  %v2682 = vsel %vm2554, %v2408, %v2618
  %v2683 = vsel %vm2555, %v2411, %v2619
  %v2684 = vsel %vm2556, %v2416, %v2620
  %v2685 = vsel %vm2557, %v2419, %v2621
  %v2686 = vsel %vm2558, %v2424, %v2622
  %v2687 = vsel %vm2559, %v2427, %v2623
  %v2688 = vsel %vm2560, %v2432, %v2624
  %v2689 = vsel %vm2561, %v2435, %v2625
  %v2690 = vsel %vm2562, %v2440, %v2626
  %v2691 = vsel %vm2563, %v2443, %v2627
  %v2692 = vsel %vm2564, %v2448, %v2628
  %v2693 = vsel %vm2565, %v2451, %v2629
  %v2694 = vsel %vm2566, %v2456, %v2630
  %v2695 = vsel %vm2567, %v2459, %v2631
  %v2696 = vsel %vm2568, %v2464, %v2632
  %v2697 = vsel %vm2569, %v2467, %v2633
  %v2698 = vsel %vm2570, %v2472, %v2634
  %v2699 = vsel %vm2571, %v2475, %v2635
  %v2700 = vsel %vm2572, %v2480, %v2636
  %v2701 = vsel %vm2573, %v2483, %v2637
  %v2702 = vsel %vm2574, %v2488, %v2638
  %v2703 = vsel %vm2575, %v2491, %v2639
  %v2704 = vsel %vm2576, %v2496, %v2640
  %v2705 = vsel %vm2577, %v2499, %v2641
  %v2706 = vsel %vm2578, %v2504, %v2642
  %v2707 = vsel %vm2579, %v2507, %v2643
  %v2708 = vsel %vm2580, %v2512, %v2644
  %v2709 = vsel %vm2581, %v2515, %v2645
  %v2710 = vpack.c.bf16 %v2647, %v2646
  %v2711 = vpack.c.bf16 %v2649, %v2648
  %v2712 = vpack.c.bf16 %v2651, %v2650
  %v2713 = vpack.c.bf16 %v2653, %v2652
  %v2714 = vpack.c.bf16 %v2655, %v2654
  %v2715 = vpack.c.bf16 %v2657, %v2656
  %v2716 = vpack.c.bf16 %v2659, %v2658
  %v2717 = vpack.c.bf16 %v2661, %v2660
  %v2718 = vpack.c.bf16 %v2663, %v2662
  %v2719 = vpack.c.bf16 %v2665, %v2664
  %v2720 = vpack.c.bf16 %v2667, %v2666
  %v2721 = vpack.c.bf16 %v2669, %v2668
  %v2722 = vpack.c.bf16 %v2671, %v2670
  %v2723 = vpack.c.bf16 %v2673, %v2672
  %v2724 = vpack.c.bf16 %v2675, %v2674
  %v2725 = vpack.c.bf16 %v2677, %v2676
  %v2726 = vpack.c.bf16 %v2679, %v2678
  %v2727 = vpack.c.bf16 %v2681, %v2680
  %v2728 = vpack.c.bf16 %v2683, %v2682
  %v2729 = vpack.c.bf16 %v2685, %v2684
  %v2730 = vpack.c.bf16 %v2687, %v2686
  %v2731 = vpack.c.bf16 %v2689, %v2688
  %v2732 = vpack.c.bf16 %v2691, %v2690
  %v2733 = vpack.c.bf16 %v2693, %v2692
  %v2734 = vpack.c.bf16 %v2695, %v2694
  %v2735 = vpack.c.bf16 %v2697, %v2696
  %v2736 = vpack.c.bf16 %v2699, %v2698
  %v2737 = vpack.c.bf16 %v2701, %v2700
  %v2738 = vpack.c.bf16 %v2703, %v2702
  %v2739 = vpack.c.bf16 %v2705, %v2704
  %v2740 = vpack.c.bf16 %v2707, %v2706
  %v2741 = vpack.c.bf16 %v2709, %v2708
  %s2742 = scalar_lea.vmem %s3, 4
  %v2743 = vld [vmem:[%s2742] sm:$0xf]
  %s2744 = scalar_lea.vmem %s4, 1
  %v2745 = vld [vmem:[%s2744] sm:$0x1]
  %2747 = vset.pattern.permute.xlu0 0
  %2748 = vperm.xlu0 %2747, %v2745
  %v2749 = vpop.permute.xlu0 %2748
  %v2751 = vlaneseq
  %v2752 = vshrl.u32 %v2751, 7
  %v2753 = vsub.s32 0, %v2752
  %v2754 = vrot.slane %v2749, %v2753
  %v2757 = vunpack.c.l.s4 1966171168
  %v2758 = vunpack.c.0.s8 %v2757
  %v2759 = vlaneseq
  %v2760 = vshrl.u32 %v2759, 7
  %v2761 = vsub.s32 %v2758, %v2760
  %v2762 = vrot.slane %v2743, %v2761
  %v2763 = vcombine.high %v2762, %v2762
  %v2765 = vunpack.c.l.s4 1966171168
  %v2766 = vunpack.c.0.s8 %v2765
  %v2767 = vlaneseq
  %v2768 = vshrl.u32 %v2767, 7
  %v2769 = vsub.s32 %v2766, %v2768
  %v2770 = vrot.slane %v2762, %v2769
  %v2772 = vunpack.c.l.s4 1966171168
  %v2773 = vunpack.c.0.s8 %v2772
  %v2774 = vlaneseq
  %v2775 = vshrl.u32 %v2774, 7
  %v2776 = vsub.s32 %v2773, %v2775
  %v2777 = vrot.slane %v2763, %v2776
  %v2778 = vcombine.high %v2770, %v2770
  %v2779 = vcombine.high %v2777, %v2777
  %2784 = vmatprep.subr.bf16.mxu0 0
  %2785 = vmatpush1.bf16.msra.mxu0 %v2710
  %2786 = vmatprep.subr.bf16.mxu0 0
  %2787 = vmatpush1.bf16.msra.mxu0 %v2711
  %2788 = vmatprep.subr.bf16.mxu0 0
  %2789 = vmatpush1.bf16.msra.mxu0 %v2712
  %2790 = vmatprep.subr.bf16.mxu0 0
  %2791 = vmatpush1.bf16.msra.mxu0 %v2713
  %2792 = vmatprep.subr.bf16.mxu0 0
  %2793 = vmatpush1.bf16.msra.mxu0 %v2714
  %2794 = vmatprep.subr.bf16.mxu0 0
  %2795 = vmatpush1.bf16.msra.mxu0 %v2715
  %2796 = vmatprep.subr.bf16.mxu0 0
  %2797 = vmatpush1.bf16.msra.mxu0 %v2716
  %2798 = vmatprep.subr.bf16.mxu0 0
  %2799 = vmatpush1.bf16.msra.mxu0 %v2717
  %2800 = vmatprep.subr.bf16.mxu0 0
  %2801 = vmatpush1.bf16.msra.mxu0 %v2718
  %2802 = vmatprep.subr.bf16.mxu0 0
  %2803 = vmatpush1.bf16.msra.mxu0 %v2719
  %2804 = vmatprep.subr.bf16.mxu0 0
  %2805 = vmatpush1.bf16.msra.mxu0 %v2720
  %2806 = vmatprep.subr.bf16.mxu0 0
  %2807 = vmatpush1.bf16.msra.mxu0 %v2721
  %2808 = vmatprep.subr.bf16.mxu0 0
  %2809 = vmatpush1.bf16.msra.mxu0 %v2722
  %2810 = vmatprep.subr.bf16.mxu0 0
  %2811 = vmatpush1.bf16.msra.mxu0 %v2723
  %2812 = vmatprep.subr.bf16.mxu0 0
  %2813 = vmatpush1.bf16.msra.mxu0 %v2724
  %2814 = vmatprep.subr.bf16.mxu0 0
  %2815 = vmatpush1.bf16.msra.mxu0 %v2725
  %2816 = vmatprep.mubr.bf16.mxu0 %v2777
  %2817 = vmatmul.mubr.bf16.gmra.mrb[0].mxu0 %v2770
  %v2818 = vpop.f32.mrb[0].mxu0
  %v2819 = vadd.f32 %v2754, %v2818
  %v2820 = vpop.f32.mrb[0].mxu0
  %v2821 = vpop.f32.mrb[0].mxu0
  %v2822 = vpop.f32.mrb[0].mxu0
  %2823 = vdwg.mxu0
  %2824 = vmatprep.subr.bf16.mxu0 0
  %2825 = vmatpush1.bf16.msra.mxu0 %v2726
  %2826 = vmatprep.subr.bf16.mxu0 0
  %2827 = vmatpush1.bf16.msra.mxu0 %v2727
  %2828 = vmatprep.subr.bf16.mxu0 0
  %2829 = vmatpush1.bf16.msra.mxu0 %v2728
  %2830 = vmatprep.subr.bf16.mxu0 0
  %2831 = vmatpush1.bf16.msra.mxu0 %v2729
  %2832 = vmatprep.subr.bf16.mxu0 0
  %2833 = vmatpush1.bf16.msra.mxu0 %v2730
  %2834 = vmatprep.subr.bf16.mxu0 0
  %2835 = vmatpush1.bf16.msra.mxu0 %v2731
  %2836 = vmatprep.subr.bf16.mxu0 0
  %2837 = vmatpush1.bf16.msra.mxu0 %v2732
  %2838 = vmatprep.subr.bf16.mxu0 0
  %2839 = vmatpush1.bf16.msra.mxu0 %v2733
  %2840 = vmatprep.subr.bf16.mxu0 0
  %2841 = vmatpush1.bf16.msra.mxu0 %v2734
  %2842 = vmatprep.subr.bf16.mxu0 0
  %2843 = vmatpush1.bf16.msra.mxu0 %v2735
  %2844 = vmatprep.subr.bf16.mxu0 0
  %2845 = vmatpush1.bf16.msra.mxu0 %v2736
  %2846 = vmatprep.subr.bf16.mxu0 0
  %2847 = vmatpush1.bf16.msra.mxu0 %v2737
  %2848 = vmatprep.subr.bf16.mxu0 0
  %2849 = vmatpush1.bf16.msra.mxu0 %v2738
  %2850 = vmatprep.subr.bf16.mxu0 0
  %2851 = vmatpush1.bf16.msra.mxu0 %v2739
  %2852 = vmatprep.subr.bf16.mxu0 0
  %2853 = vmatpush1.bf16.msra.mxu0 %v2740
  %2854 = vmatprep.subr.bf16.mxu0 0
  %2855 = vmatpush1.bf16.msra.mxu0 %v2741
  %2856 = vmatprep.mubr.bf16.mxu0 %v2779
  %2857 = vmatmul.mubr.bf16.gmra.mrb[0].mxu0 %v2778
  %v2858 = vpop.f32.mrb[0].mxu0
  %v2859 = vadd.f32 %v2819, %v2858
  %v2860 = vpop.f32.mrb[0].mxu0
  %v2861 = vpop.f32.mrb[0].mxu0
  %v2862 = vpop.f32.mrb[0].mxu0
  %2863 = vdwg.mxu0
  %v2864 = vxor.u32 %v2859, 2147483648
  %v2865 = vmul.f32 %v2864, 1.442695
  %v2866 = vpow.pop %v2865
  %v2867 = vadd.f32 %v2866, 1.0
  %v2868 = vrcp.pop %v2867
  %v2869 = vmul.f32 1.0, %v2868
  %2870 = vmatprep.subr.bf16.mxu0 0
  %2871 = vmatpush1.bf16.msra.mxu0 %v2710
  %2872 = vmatprep.subr.bf16.mxu0 0
  %2873 = vmatpush1.bf16.msra.mxu0 %v2711
  %2874 = vmatprep.subr.bf16.mxu0 0
  %2875 = vmatpush1.bf16.msra.mxu0 %v2712
  %2876 = vmatprep.subr.bf16.mxu0 0
  %2877 = vmatpush1.bf16.msra.mxu0 %v2713
  %2878 = vmatprep.subr.bf16.mxu0 0
  %2879 = vmatpush1.bf16.msra.mxu0 %v2714
  %2880 = vmatprep.subr.bf16.mxu0 0
  %2881 = vmatpush1.bf16.msra.mxu0 %v2715
  %2882 = vmatprep.subr.bf16.mxu0 0
  %2883 = vmatpush1.bf16.msra.mxu0 %v2716
  %2884 = vmatprep.subr.bf16.mxu0 0
  %2885 = vmatpush1.bf16.msra.mxu0 %v2717
  %2886 = vmatprep.subr.bf16.mxu0 0
  %2887 = vmatpush1.bf16.msra.mxu0 %v2718
  %2888 = vmatprep.subr.bf16.mxu0 0
  %2889 = vmatpush1.bf16.msra.mxu0 %v2719
  %2890 = vmatprep.subr.bf16.mxu0 0
  %2891 = vmatpush1.bf16.msra.mxu0 %v2720
  %2892 = vmatprep.subr.bf16.mxu0 0
  %2893 = vmatpush1.bf16.msra.mxu0 %v2721
  %2894 = vmatprep.subr.bf16.mxu0 0
  %2895 = vmatpush1.bf16.msra.mxu0 %v2722
  %2896 = vmatprep.subr.bf16.mxu0 0
  %2897 = vmatpush1.bf16.msra.mxu0 %v2723
  %2898 = vmatprep.subr.bf16.mxu0 0
  %2899 = vmatpush1.bf16.msra.mxu0 %v2724
  %2900 = vmatprep.subr.bf16.mxu0 0
  %2901 = vmatpush1.bf16.msra.mxu0 %v2725
  %2902 = vmatprep.mubr.bf16.mxu0 %v1407
  %2903 = vmatmul.mubr.bf16.gmra.mrb[0].mxu0 %v1406
  %v2904 = vpop.f32.mrb[0].mxu0
  %v2905 = vadd.f32 %v38, %v2904
  %v2906 = vpop.f32.mrb[0].mxu0
  %v2907 = vpop.f32.mrb[0].mxu0
  %v2908 = vpop.f32.mrb[0].mxu0
  %2909 = vdwg.mxu0
  %2910 = vmatprep.subr.bf16.mxu0 0
  %2911 = vmatpush1.bf16.msra.mxu0 %v2726
  %2912 = vmatprep.subr.bf16.mxu0 0
  %2913 = vmatpush1.bf16.msra.mxu0 %v2727
  %2914 = vmatprep.subr.bf16.mxu0 0
  %2915 = vmatpush1.bf16.msra.mxu0 %v2728
  %2916 = vmatprep.subr.bf16.mxu0 0
  %2917 = vmatpush1.bf16.msra.mxu0 %v2729
  %2918 = vmatprep.subr.bf16.mxu0 0
  %2919 = vmatpush1.bf16.msra.mxu0 %v2730
  %2920 = vmatprep.subr.bf16.mxu0 0
  %2921 = vmatpush1.bf16.msra.mxu0 %v2731
  %2922 = vmatprep.subr.bf16.mxu0 0
  %2923 = vmatpush1.bf16.msra.mxu0 %v2732
  %2924 = vmatprep.subr.bf16.mxu0 0
  %2925 = vmatpush1.bf16.msra.mxu0 %v2733
  %2926 = vmatprep.subr.bf16.mxu0 0
  %2927 = vmatpush1.bf16.msra.mxu0 %v2734
  %2928 = vmatprep.subr.bf16.mxu0 0
  %2929 = vmatpush1.bf16.msra.mxu0 %v2735
  %2930 = vmatprep.subr.bf16.mxu0 0
  %2931 = vmatpush1.bf16.msra.mxu0 %v2736
  %2932 = vmatprep.subr.bf16.mxu0 0
  %2933 = vmatpush1.bf16.msra.mxu0 %v2737
  %2934 = vmatprep.subr.bf16.mxu0 0
  %2935 = vmatpush1.bf16.msra.mxu0 %v2738
  %2936 = vmatprep.subr.bf16.mxu0 0
  %2937 = vmatpush1.bf16.msra.mxu0 %v2739
  %2938 = vmatprep.subr.bf16.mxu0 0
  %2939 = vmatpush1.bf16.msra.mxu0 %v2740
  %2940 = vmatprep.subr.bf16.mxu0 0
  %2941 = vmatpush1.bf16.msra.mxu0 %v2741
  %2942 = vmatprep.mubr.bf16.mxu0 %v1409
  %2943 = vmatmul.mubr.bf16.gmra.mrb[0].mxu0 %v1408
  %v2944 = vpop.f32.mrb[0].mxu0
  %v2945 = vadd.f32 %v2905, %v2944
  %v2946 = vpop.f32.mrb[0].mxu0
  %v2947 = vpop.f32.mrb[0].mxu0
  %v2948 = vpop.f32.mrb[0].mxu0
  %2949 = vdwg.mxu0
  %s2950 = scalar_lea.vmem %s8, 8
  %2951 = vst.msk [vmem:[%s2950] sm:$0xff] %vm1494, %v2945
  %v2952 = vld [vmem:[%s7 + $0x1] sm:$0x1]
  %v2953 = vsub.f32 1.0, %v2952
  %v2954 = vmul.f32 %v2953, %v2869
  %v2955 = vadd.f32 %v2954, %v2952
  %v2956 = vlaneseq
  %v2957 = vshrl.u32 %v2956, 7
  %v2958 = vsub.s32 0, %v2957
  %v2959 = vrot.slane %v2955, %v2958
  %v2960 = vmul.f32 %v2945, %v2959
  %v2961 = vadd.f32 %v1505, %v2960
  %v2962 = vadd.f32 %v1506, %v2955
  %s2963 = scalar_lea.vmem %s1, 512
  %v2964 = vld [vmem:[%s2963] sm:$0xf]
  %v2965 = vld [vmem:[%s2963 + $0x4] sm:$0xf]
  %v2966 = vld [vmem:[%s2963 + $0x8] sm:$0xf]
  %v2967 = vld [vmem:[%s2963 + $0xc] sm:$0xf]
  %v2968 = vld [vmem:[%s2963 + $0x10] sm:$0xf]
  %v2969 = vld [vmem:[%s2963 + $0x14] sm:$0xf]
  %v2970 = vld [vmem:[%s2963 + $0x18] sm:$0xf]
  %v2971 = vld [vmem:[%s2963 + $0x1c] sm:$0xf]
  %v2972 = vld [vmem:[%s2963 + $0x20] sm:$0xf]
  %v2973 = vld [vmem:[%s2963 + $0x24] sm:$0xf]
  %v2974 = vld [vmem:[%s2963 + $0x28] sm:$0xf]
  %v2975 = vld [vmem:[%s2963 + $0x2c] sm:$0xf]
  %v2976 = vld [vmem:[%s2963 + $0x30] sm:$0xf]
  %v2977 = vld [vmem:[%s2963 + $0x34] sm:$0xf]
  %v2978 = vld [vmem:[%s2963 + $0x38] sm:$0xf]
  %v2979 = vld [vmem:[%s2963 + $0x3c] sm:$0xf]
  %v2980 = vld [vmem:[%s2963 + $0x40] sm:$0xf]
  %v2981 = vld [vmem:[%s2963 + $0x44] sm:$0xf]
  %v2982 = vld [vmem:[%s2963 + $0x48] sm:$0xf]
  %v2983 = vld [vmem:[%s2963 + $0x4c] sm:$0xf]
  %v2984 = vld [vmem:[%s2963 + $0x50] sm:$0xf]
  %v2985 = vld [vmem:[%s2963 + $0x54] sm:$0xf]
  %v2986 = vld [vmem:[%s2963 + $0x58] sm:$0xf]
  %v2987 = vld [vmem:[%s2963 + $0x5c] sm:$0xf]
  %v2988 = vld [vmem:[%s2963 + $0x60] sm:$0xf]
  %v2989 = vld [vmem:[%s2963 + $0x64] sm:$0xf]
  %v2990 = vld [vmem:[%s2963 + $0x68] sm:$0xf]
  %v2991 = vld [vmem:[%s2963 + $0x6c] sm:$0xf]
  %v2992 = vld [vmem:[%s2963 + $0x70] sm:$0xf]
  %v2993 = vld [vmem:[%s2963 + $0x74] sm:$0xf]
  %v2994 = vld [vmem:[%s2963 + $0x78] sm:$0xf]
  %v2995 = vld [vmem:[%s2963 + $0x7c] sm:$0xf]
  %v2996 = vld [vmem:[%s2963 + $0x80] sm:$0xf]
  %v2997 = vld [vmem:[%s2963 + $0x84] sm:$0xf]
  %v2998 = vld [vmem:[%s2963 + $0x88] sm:$0xf]
  %v2999 = vld [vmem:[%s2963 + $0x8c] sm:$0xf]
  %v3000 = vld [vmem:[%s2963 + $0x90] sm:$0xf]
  %v3001 = vld [vmem:[%s2963 + $0x94] sm:$0xf]
  %v3002 = vld [vmem:[%s2963 + $0x98] sm:$0xf]
  %v3003 = vld [vmem:[%s2963 + $0x9c] sm:$0xf]
  %v3004 = vld [vmem:[%s2963 + $0xa0] sm:$0xf]
  %v3005 = vld [vmem:[%s2963 + $0xa4] sm:$0xf]
  %v3006 = vld [vmem:[%s2963 + $0xa8] sm:$0xf]
  %v3007 = vld [vmem:[%s2963 + $0xac] sm:$0xf]
  %v3008 = vld [vmem:[%s2963 + $0xb0] sm:$0xf]
  %v3009 = vld [vmem:[%s2963 + $0xb4] sm:$0xf]
  %v3010 = vld [vmem:[%s2963 + $0xb8] sm:$0xf]
  %v3011 = vld [vmem:[%s2963 + $0xbc] sm:$0xf]
  %v3012 = vld [vmem:[%s2963 + $0xc0] sm:$0xf]
  %v3013 = vld [vmem:[%s2963 + $0xc4] sm:$0xf]
  %v3014 = vld [vmem:[%s2963 + $0xc8] sm:$0xf]
  %v3015 = vld [vmem:[%s2963 + $0xcc] sm:$0xf]
  %v3016 = vld [vmem:[%s2963 + $0xd0] sm:$0xf]
  %v3017 = vld [vmem:[%s2963 + $0xd4] sm:$0xf]
  %v3018 = vld [vmem:[%s2963 + $0xd8] sm:$0xf]
  %v3019 = vld [vmem:[%s2963 + $0xdc] sm:$0xf]
  %v3020 = vld [vmem:[%s2963 + $0xe0] sm:$0xf]
  %v3021 = vld [vmem:[%s2963 + $0xe4] sm:$0xf]
  %v3022 = vld [vmem:[%s2963 + $0xe8] sm:$0xf]
  %v3023 = vld [vmem:[%s2963 + $0xec] sm:$0xf]
  %v3024 = vld [vmem:[%s2963 + $0xf0] sm:$0xf]
  %v3025 = vld [vmem:[%s2963 + $0xf4] sm:$0xf]
  %v3026 = vld [vmem:[%s2963 + $0xf8] sm:$0xf]
  %v3027 = vld [vmem:[%s2963 + $0xfc] sm:$0xf]
  %s3028 = scalar_lea.vmem %s0, 24
  %v3029 = vld [vmem:[%s3028] sm:$0xf]
  %v3030 = vld [vmem:[%s3028 + $0x4] sm:$0xf]
  %v3031 = vld [vmem:[%s3028 + $0x8] sm:$0xf]
  %s3032 = scalar_lea.vmem %s2, 1024
  %v3033 = vld [vmem:[%s3032] sm:$0xff]
  %v3034 = vld [vmem:[%s3032 + $0x8] sm:$0xff]
  %v3035 = vld [vmem:[%s3032 + $0x10] sm:$0xff]
  %v3036 = vld [vmem:[%s3032 + $0x18] sm:$0xff]
  %v3037 = vld [vmem:[%s3032 + $0x20] sm:$0xff]
  %v3038 = vld [vmem:[%s3032 + $0x28] sm:$0xff]
  %v3039 = vld [vmem:[%s3032 + $0x30] sm:$0xff]
  %v3040 = vld [vmem:[%s3032 + $0x38] sm:$0xff]
  %v3041 = vld [vmem:[%s3032 + $0x40] sm:$0xff]
  %v3042 = vld [vmem:[%s3032 + $0x48] sm:$0xff]
  %v3043 = vld [vmem:[%s3032 + $0x50] sm:$0xff]
  %v3044 = vld [vmem:[%s3032 + $0x58] sm:$0xff]
  %v3045 = vld [vmem:[%s3032 + $0x60] sm:$0xff]
  %v3046 = vld [vmem:[%s3032 + $0x68] sm:$0xff]
  %v3047 = vld [vmem:[%s3032 + $0x70] sm:$0xff]
  %v3048 = vld [vmem:[%s3032 + $0x78] sm:$0xff]
  %v3049 = vld [vmem:[%s3032 + $0x80] sm:$0xff]
  %v3050 = vld [vmem:[%s3032 + $0x88] sm:$0xff]
  %v3051 = vld [vmem:[%s3032 + $0x90] sm:$0xff]
  %v3052 = vld [vmem:[%s3032 + $0x98] sm:$0xff]
  %v3053 = vld [vmem:[%s3032 + $0xa0] sm:$0xff]
  %v3054 = vld [vmem:[%s3032 + $0xa8] sm:$0xff]
  %v3055 = vld [vmem:[%s3032 + $0xb0] sm:$0xff]
  %v3056 = vld [vmem:[%s3032 + $0xb8] sm:$0xff]
  %v3057 = vld [vmem:[%s3032 + $0xc0] sm:$0xff]
  %v3058 = vld [vmem:[%s3032 + $0xc8] sm:$0xff]
  %v3059 = vld [vmem:[%s3032 + $0xd0] sm:$0xff]
  %v3060 = vld [vmem:[%s3032 + $0xd8] sm:$0xff]
  %v3061 = vld [vmem:[%s3032 + $0xe0] sm:$0xff]
  %v3062 = vld [vmem:[%s3032 + $0xe8] sm:$0xff]
  %v3063 = vld [vmem:[%s3032 + $0xf0] sm:$0xff]
  %v3064 = vld [vmem:[%s3032 + $0xf8] sm:$0xff]
  %v3065 = vld [vmem:[%s3032 + $0x100] sm:$0xff]
  %v3066 = vld [vmem:[%s3032 + $0x108] sm:$0xff]
  %v3067 = vld [vmem:[%s3032 + $0x110] sm:$0xff]
  %v3068 = vld [vmem:[%s3032 + $0x118] sm:$0xff]
  %v3069 = vld [vmem:[%s3032 + $0x120] sm:$0xff]
  %v3070 = vld [vmem:[%s3032 + $0x128] sm:$0xff]
  %v3071 = vld [vmem:[%s3032 + $0x130] sm:$0xff]
  %v3072 = vld [vmem:[%s3032 + $0x138] sm:$0xff]
  %v3073 = vld [vmem:[%s3032 + $0x140] sm:$0xff]
  %v3074 = vld [vmem:[%s3032 + $0x148] sm:$0xff]
  %v3075 = vld [vmem:[%s3032 + $0x150] sm:$0xff]
  %v3076 = vld [vmem:[%s3032 + $0x158] sm:$0xff]
  %v3077 = vld [vmem:[%s3032 + $0x160] sm:$0xff]
  %v3078 = vld [vmem:[%s3032 + $0x168] sm:$0xff]
  %v3079 = vld [vmem:[%s3032 + $0x170] sm:$0xff]
  %v3080 = vld [vmem:[%s3032 + $0x178] sm:$0xff]
  %v3081 = vld [vmem:[%s3032 + $0x180] sm:$0xff]
  %v3082 = vld [vmem:[%s3032 + $0x188] sm:$0xff]
  %v3083 = vld [vmem:[%s3032 + $0x190] sm:$0xff]
  %v3084 = vld [vmem:[%s3032 + $0x198] sm:$0xff]
  %v3085 = vld [vmem:[%s3032 + $0x1a0] sm:$0xff]
  %v3086 = vld [vmem:[%s3032 + $0x1a8] sm:$0xff]
  %v3087 = vld [vmem:[%s3032 + $0x1b0] sm:$0xff]
  %v3088 = vld [vmem:[%s3032 + $0x1b8] sm:$0xff]
  %v3089 = vld [vmem:[%s3032 + $0x1c0] sm:$0xff]
  %v3090 = vld [vmem:[%s3032 + $0x1c8] sm:$0xff]
  %v3091 = vld [vmem:[%s3032 + $0x1d0] sm:$0xff]
  %v3092 = vld [vmem:[%s3032 + $0x1d8] sm:$0xff]
  %v3093 = vld [vmem:[%s3032 + $0x1e0] sm:$0xff]
  %v3094 = vld [vmem:[%s3032 + $0x1e8] sm:$0xff]
  %v3095 = vld [vmem:[%s3032 + $0x1f0] sm:$0xff]
  %v3096 = vld [vmem:[%s3032 + $0x1f8] sm:$0xff]
  %3098 = vset.pattern.permute.xlu0 0
  %3099 = vperm.xlu0 %3098, %v3033
  %v3100 = vpop.permute.xlu0 %3099
  %3103 = vset.pattern.permute.xlu0 0
  %3104 = vperm.xlu0 %3103, %v3034
  %v3105 = vpop.permute.xlu0 %3104
  %3108 = vset.pattern.permute.xlu0 0
  %3109 = vperm.xlu0 %3108, %v3035
  %v3110 = vpop.permute.xlu0 %3109
  %3113 = vset.pattern.permute.xlu0 0
  %3114 = vperm.xlu0 %3113, %v3036
  %v3115 = vpop.permute.xlu0 %3114
  %3118 = vset.pattern.permute.xlu0 0
  %3119 = vperm.xlu0 %3118, %v3037
  %v3120 = vpop.permute.xlu0 %3119
  %3123 = vset.pattern.permute.xlu0 0
  %3124 = vperm.xlu0 %3123, %v3038
  %v3125 = vpop.permute.xlu0 %3124
  %3128 = vset.pattern.permute.xlu0 0
  %3129 = vperm.xlu0 %3128, %v3039
  %v3130 = vpop.permute.xlu0 %3129
  %3133 = vset.pattern.permute.xlu0 0
  %3134 = vperm.xlu0 %3133, %v3040
  %v3135 = vpop.permute.xlu0 %3134
  %3138 = vset.pattern.permute.xlu0 0
  %3139 = vperm.xlu0 %3138, %v3041
  %v3140 = vpop.permute.xlu0 %3139
  %3143 = vset.pattern.permute.xlu0 0
  %3144 = vperm.xlu0 %3143, %v3042
  %v3145 = vpop.permute.xlu0 %3144
  %3148 = vset.pattern.permute.xlu0 0
  %3149 = vperm.xlu0 %3148, %v3043
  %v3150 = vpop.permute.xlu0 %3149
  %3153 = vset.pattern.permute.xlu0 0
  %3154 = vperm.xlu0 %3153, %v3044
  %v3155 = vpop.permute.xlu0 %3154
  %3158 = vset.pattern.permute.xlu0 0
  %3159 = vperm.xlu0 %3158, %v3045
  %v3160 = vpop.permute.xlu0 %3159
  %3163 = vset.pattern.permute.xlu0 0
  %3164 = vperm.xlu0 %3163, %v3046
  %v3165 = vpop.permute.xlu0 %3164
  %3168 = vset.pattern.permute.xlu0 0
  %3169 = vperm.xlu0 %3168, %v3047
  %v3170 = vpop.permute.xlu0 %3169
  %3173 = vset.pattern.permute.xlu0 0
  %3174 = vperm.xlu0 %3173, %v3048
  %v3175 = vpop.permute.xlu0 %3174
  %3178 = vset.pattern.permute.xlu0 0
  %3179 = vperm.xlu0 %3178, %v3049
  %v3180 = vpop.permute.xlu0 %3179
  %3183 = vset.pattern.permute.xlu0 0
  %3184 = vperm.xlu0 %3183, %v3050
  %v3185 = vpop.permute.xlu0 %3184
  %3188 = vset.pattern.permute.xlu0 0
  %3189 = vperm.xlu0 %3188, %v3051
  %v3190 = vpop.permute.xlu0 %3189
  %3193 = vset.pattern.permute.xlu0 0
  %3194 = vperm.xlu0 %3193, %v3052
  %v3195 = vpop.permute.xlu0 %3194
  %3198 = vset.pattern.permute.xlu0 0
  %3199 = vperm.xlu0 %3198, %v3053
  %v3200 = vpop.permute.xlu0 %3199
  %3203 = vset.pattern.permute.xlu0 0
  %3204 = vperm.xlu0 %3203, %v3054
  %v3205 = vpop.permute.xlu0 %3204
  %3208 = vset.pattern.permute.xlu0 0
  %3209 = vperm.xlu0 %3208, %v3055
  %v3210 = vpop.permute.xlu0 %3209
  %3213 = vset.pattern.permute.xlu0 0
  %3214 = vperm.xlu0 %3213, %v3056
  %v3215 = vpop.permute.xlu0 %3214
  %3218 = vset.pattern.permute.xlu0 0
  %3219 = vperm.xlu0 %3218, %v3057
  %v3220 = vpop.permute.xlu0 %3219
  %3223 = vset.pattern.permute.xlu0 0
  %3224 = vperm.xlu0 %3223, %v3058
  %v3225 = vpop.permute.xlu0 %3224
  %3228 = vset.pattern.permute.xlu0 0
  %3229 = vperm.xlu0 %3228, %v3059
  %v3230 = vpop.permute.xlu0 %3229
  %3233 = vset.pattern.permute.xlu0 0
  %3234 = vperm.xlu0 %3233, %v3060
  %v3235 = vpop.permute.xlu0 %3234
  %3238 = vset.pattern.permute.xlu0 0
  %3239 = vperm.xlu0 %3238, %v3061
  %v3240 = vpop.permute.xlu0 %3239
  %3243 = vset.pattern.permute.xlu0 0
  %3244 = vperm.xlu0 %3243, %v3062
  %v3245 = vpop.permute.xlu0 %3244
  %3248 = vset.pattern.permute.xlu0 0
  %3249 = vperm.xlu0 %3248, %v3063
  %v3250 = vpop.permute.xlu0 %3249
  %3253 = vset.pattern.permute.xlu0 0
  %3254 = vperm.xlu0 %3253, %v3064
  %v3255 = vpop.permute.xlu0 %3254
  %3258 = vset.pattern.permute.xlu0 0
  %3259 = vperm.xlu0 %3258, %v3065
  %v3260 = vpop.permute.xlu0 %3259
  %3263 = vset.pattern.permute.xlu0 0
  %3264 = vperm.xlu0 %3263, %v3066
  %v3265 = vpop.permute.xlu0 %3264
  %3268 = vset.pattern.permute.xlu0 0
  %3269 = vperm.xlu0 %3268, %v3067
  %v3270 = vpop.permute.xlu0 %3269
  %3273 = vset.pattern.permute.xlu0 0
  %3274 = vperm.xlu0 %3273, %v3068
  %v3275 = vpop.permute.xlu0 %3274
  %3278 = vset.pattern.permute.xlu0 0
  %3279 = vperm.xlu0 %3278, %v3069
  %v3280 = vpop.permute.xlu0 %3279
  %3283 = vset.pattern.permute.xlu0 0
  %3284 = vperm.xlu0 %3283, %v3070
  %v3285 = vpop.permute.xlu0 %3284
  %3288 = vset.pattern.permute.xlu0 0
  %3289 = vperm.xlu0 %3288, %v3071
  %v3290 = vpop.permute.xlu0 %3289
  %3293 = vset.pattern.permute.xlu0 0
  %3294 = vperm.xlu0 %3293, %v3072
  %v3295 = vpop.permute.xlu0 %3294
  %3298 = vset.pattern.permute.xlu0 0
  %3299 = vperm.xlu0 %3298, %v3073
  %v3300 = vpop.permute.xlu0 %3299
  %3303 = vset.pattern.permute.xlu0 0
  %3304 = vperm.xlu0 %3303, %v3074
  %v3305 = vpop.permute.xlu0 %3304
  %3308 = vset.pattern.permute.xlu0 0
  %3309 = vperm.xlu0 %3308, %v3075
  %v3310 = vpop.permute.xlu0 %3309
  %3313 = vset.pattern.permute.xlu0 0
  %3314 = vperm.xlu0 %3313, %v3076
  %v3315 = vpop.permute.xlu0 %3314
  %3318 = vset.pattern.permute.xlu0 0
  %3319 = vperm.xlu0 %3318, %v3077
  %v3320 = vpop.permute.xlu0 %3319
  %3323 = vset.pattern.permute.xlu0 0
  %3324 = vperm.xlu0 %3323, %v3078
  %v3325 = vpop.permute.xlu0 %3324
  %3328 = vset.pattern.permute.xlu0 0
  %3329 = vperm.xlu0 %3328, %v3079
  %v3330 = vpop.permute.xlu0 %3329
  %3333 = vset.pattern.permute.xlu0 0
  %3334 = vperm.xlu0 %3333, %v3080
  %v3335 = vpop.permute.xlu0 %3334
  %3338 = vset.pattern.permute.xlu0 0
  %3339 = vperm.xlu0 %3338, %v3081
  %v3340 = vpop.permute.xlu0 %3339
  %3343 = vset.pattern.permute.xlu0 0
  %3344 = vperm.xlu0 %3343, %v3082
  %v3345 = vpop.permute.xlu0 %3344
  %3348 = vset.pattern.permute.xlu0 0
  %3349 = vperm.xlu0 %3348, %v3083
  %v3350 = vpop.permute.xlu0 %3349
  %3353 = vset.pattern.permute.xlu0 0
  %3354 = vperm.xlu0 %3353, %v3084
  %v3355 = vpop.permute.xlu0 %3354
  %3358 = vset.pattern.permute.xlu0 0
  %3359 = vperm.xlu0 %3358, %v3085
  %v3360 = vpop.permute.xlu0 %3359
  %3363 = vset.pattern.permute.xlu0 0
  %3364 = vperm.xlu0 %3363, %v3086
  %v3365 = vpop.permute.xlu0 %3364
  %3368 = vset.pattern.permute.xlu0 0
  %3369 = vperm.xlu0 %3368, %v3087
  %v3370 = vpop.permute.xlu0 %3369
  %3373 = vset.pattern.permute.xlu0 0
  %3374 = vperm.xlu0 %3373, %v3088
  %v3375 = vpop.permute.xlu0 %3374
  %3378 = vset.pattern.permute.xlu0 0
  %3379 = vperm.xlu0 %3378, %v3089
  %v3380 = vpop.permute.xlu0 %3379
  %3383 = vset.pattern.permute.xlu0 0
  %3384 = vperm.xlu0 %3383, %v3090
  %v3385 = vpop.permute.xlu0 %3384
  %3388 = vset.pattern.permute.xlu0 0
  %3389 = vperm.xlu0 %3388, %v3091
  %v3390 = vpop.permute.xlu0 %3389
  %3393 = vset.pattern.permute.xlu0 0
  %3394 = vperm.xlu0 %3393, %v3092
  %v3395 = vpop.permute.xlu0 %3394
  %3398 = vset.pattern.permute.xlu0 0
  %3399 = vperm.xlu0 %3398, %v3093
  %v3400 = vpop.permute.xlu0 %3399
  %3403 = vset.pattern.permute.xlu0 0
  %3404 = vperm.xlu0 %3403, %v3094
  %v3405 = vpop.permute.xlu0 %3404
  %3408 = vset.pattern.permute.xlu0 0
  %3409 = vperm.xlu0 %3408, %v3095
  %v3410 = vpop.permute.xlu0 %3409
  %3413 = vset.pattern.permute.xlu0 0
  %3414 = vperm.xlu0 %3413, %v3096
  %v3415 = vpop.permute.xlu0 %3414
  %v3481 = vunpack.c.l.b16 %v2964
  %v3482 = vunpack.c.l.b16 %v2965
  %v3483 = vunpack.c.l.b16 %v2966
  %v3484 = vunpack.c.l.b16 %v2967
  %v3485 = vunpack.c.l.b16 %v2968
  %v3486 = vunpack.c.l.b16 %v2969
  %v3487 = vunpack.c.l.b16 %v2970
  %v3488 = vunpack.c.l.b16 %v2971
  %v3489 = vunpack.c.l.b16 %v2972
  %v3490 = vunpack.c.l.b16 %v2973
  %v3491 = vunpack.c.l.b16 %v2974
  %v3492 = vunpack.c.l.b16 %v2975
  %v3493 = vunpack.c.l.b16 %v2976
  %v3494 = vunpack.c.l.b16 %v2977
  %v3495 = vunpack.c.l.b16 %v2978
  %v3496 = vunpack.c.l.b16 %v2979
  %v3497 = vunpack.c.l.b16 %v2980
  %v3498 = vunpack.c.l.b16 %v2981
  %v3499 = vunpack.c.l.b16 %v2982
  %v3500 = vunpack.c.l.b16 %v2983
  %v3501 = vunpack.c.l.b16 %v2984
  %v3502 = vunpack.c.l.b16 %v2985
  %v3503 = vunpack.c.l.b16 %v2986
  %v3504 = vunpack.c.l.b16 %v2987
  %v3505 = vunpack.c.l.b16 %v2988
  %v3506 = vunpack.c.l.b16 %v2989
  %v3507 = vunpack.c.l.b16 %v2990
  %v3508 = vunpack.c.l.b16 %v2991
  %v3509 = vunpack.c.l.b16 %v2992
  %v3510 = vunpack.c.l.b16 %v2993
  %v3511 = vunpack.c.l.b16 %v2994
  %v3512 = vunpack.c.l.b16 %v2995
  %v3513 = vunpack.c.l.b16 %v2996
  %v3514 = vunpack.c.l.b16 %v2997
  %v3515 = vunpack.c.l.b16 %v2998
  %v3516 = vunpack.c.l.b16 %v2999
  %v3517 = vunpack.c.l.b16 %v3000
  %v3518 = vunpack.c.l.b16 %v3001
  %v3519 = vunpack.c.l.b16 %v3002
  %v3520 = vunpack.c.l.b16 %v3003
  %v3521 = vunpack.c.l.b16 %v3004
  %v3522 = vunpack.c.l.b16 %v3005
  %v3523 = vunpack.c.l.b16 %v3006
  %v3524 = vunpack.c.l.b16 %v3007
  %v3525 = vunpack.c.l.b16 %v3008
  %v3526 = vunpack.c.l.b16 %v3009
  %v3527 = vunpack.c.l.b16 %v3010
  %v3528 = vunpack.c.l.b16 %v3011
  %v3529 = vunpack.c.l.b16 %v3012
  %v3530 = vunpack.c.l.b16 %v3013
  %v3531 = vunpack.c.l.b16 %v3014
  %v3532 = vunpack.c.l.b16 %v3015
  %v3533 = vunpack.c.l.b16 %v3016
  %v3534 = vunpack.c.l.b16 %v3017
  %v3535 = vunpack.c.l.b16 %v3018
  %v3536 = vunpack.c.l.b16 %v3019
  %v3537 = vunpack.c.l.b16 %v3020
  %v3538 = vunpack.c.l.b16 %v3021
  %v3539 = vunpack.c.l.b16 %v3022
  %v3540 = vunpack.c.l.b16 %v3023
  %v3541 = vunpack.c.l.b16 %v3024
  %v3542 = vunpack.c.l.b16 %v3025
  %v3543 = vunpack.c.l.b16 %v3026
  %v3544 = vunpack.c.l.b16 %v3027
  %v3545 = vpack.c.b16 %v3482, %v3481
  %v3546 = vpack.c.b16 %v3484, %v3483
  %v3547 = vpack.c.b16 %v3486, %v3485
  %v3548 = vpack.c.b16 %v3488, %v3487
  %v3549 = vpack.c.b16 %v3490, %v3489
  %v3550 = vpack.c.b16 %v3492, %v3491
  %v3551 = vpack.c.b16 %v3494, %v3493
  %v3552 = vpack.c.b16 %v3496, %v3495
  %v3553 = vpack.c.b16 %v3498, %v3497
  %v3554 = vpack.c.b16 %v3500, %v3499
  %v3555 = vpack.c.b16 %v3502, %v3501
  %v3556 = vpack.c.b16 %v3504, %v3503
  %v3557 = vpack.c.b16 %v3506, %v3505
  %v3558 = vpack.c.b16 %v3508, %v3507
  %v3559 = vpack.c.b16 %v3510, %v3509
  %v3560 = vpack.c.b16 %v3512, %v3511
  %v3561 = vpack.c.b16 %v3514, %v3513
  %v3562 = vpack.c.b16 %v3516, %v3515
  %v3563 = vpack.c.b16 %v3518, %v3517
  %v3564 = vpack.c.b16 %v3520, %v3519
  %v3565 = vpack.c.b16 %v3522, %v3521
  %v3566 = vpack.c.b16 %v3524, %v3523
  %v3567 = vpack.c.b16 %v3526, %v3525
  %v3568 = vpack.c.b16 %v3528, %v3527
  %v3569 = vpack.c.b16 %v3530, %v3529
  %v3570 = vpack.c.b16 %v3532, %v3531
  %v3571 = vpack.c.b16 %v3534, %v3533
  %v3572 = vpack.c.b16 %v3536, %v3535
  %v3573 = vpack.c.b16 %v3538, %v3537
  %v3574 = vpack.c.b16 %v3540, %v3539
  %v3575 = vpack.c.b16 %v3542, %v3541
  %v3576 = vpack.c.b16 %v3544, %v3543
  %v3580 = vunpack.c.l.b16 %v3029
  %v3581 = vunpack.c.l.b16 %v3030
  %v3582 = vunpack.c.l.b16 %v3031
  %v3583 = vpack.c.b16 %v3581, %v3580
  %v3584 = vpack.c.b16 %v3582, %v3582
  %v3587 = vsel %vm660, %v3545, 0
  %v3590 = vsel %vm660, %v3546, 0
  %v3593 = vsel %vm660, %v3547, 0
  %v3596 = vsel %vm660, %v3548, 0
  %v3599 = vsel %vm660, %v3549, 0
  %v3602 = vsel %vm660, %v3550, 0
  %v3605 = vsel %vm660, %v3551, 0
  %v3608 = vsel %vm660, %v3552, 0
  %v3611 = vsel %vm660, %v3553, 0
  %v3614 = vsel %vm660, %v3554, 0
  %v3617 = vsel %vm660, %v3555, 0
  %v3620 = vsel %vm660, %v3556, 0
  %v3623 = vsel %vm660, %v3557, 0
  %v3626 = vsel %vm660, %v3558, 0
  %v3629 = vsel %vm660, %v3559, 0
  %v3632 = vsel %vm660, %v3560, 0
  %v3635 = vsel %vm660, %v3561, 0
  %v3638 = vsel %vm660, %v3562, 0
  %v3641 = vsel %vm660, %v3563, 0
  %v3644 = vsel %vm660, %v3564, 0
  %v3647 = vsel %vm660, %v3565, 0
  %v3650 = vsel %vm660, %v3566, 0
  %v3653 = vsel %vm660, %v3567, 0
  %v3656 = vsel %vm660, %v3568, 0
  %v3659 = vsel %vm660, %v3569, 0
  %v3662 = vsel %vm660, %v3570, 0
  %v3665 = vsel %vm660, %v3571, 0
  %v3668 = vsel %vm660, %v3572, 0
  %v3671 = vsel %vm660, %v3573, 0
  %v3674 = vsel %vm660, %v3574, 0
  %v3677 = vsel %vm660, %v3575, 0
  %v3680 = vsel %vm660, %v3576, 0
  %v3683 = vsel %vm757, %v3584, 0
  %3685 = vmatprep.subr.bf16.mxu0 0
  %3686 = vmatpush1.bf16.msra.mxu0 %v3583
  %3687 = vmatprep.subr.bf16.mxu0 0
  %3688 = vmatpush1.bf16.msra.mxu0 %v3683
  %3689 = vmatprep.subr.bf16.mxu0 0
  %3690 = vmatpush1.bf16.msra.mxu0 0
  %3691 = vmatprep.subr.bf16.mxu0 0
  %3692 = vmatpush1.bf16.msra.mxu0 0
  %3693 = vmatprep.subr.bf16.mxu0 0
  %3694 = vmatpush1.bf16.msra.mxu0 0
  %3695 = vmatprep.subr.bf16.mxu0 0
  %3696 = vmatpush1.bf16.msra.mxu0 0
  %3697 = vmatprep.subr.bf16.mxu0 0
  %3698 = vmatpush1.bf16.msra.mxu0 0
  %3699 = vmatprep.subr.bf16.mxu0 0
  %3700 = vmatpush1.bf16.msra.mxu0 0
  %3701 = vmatprep.subr.bf16.mxu0 0
  %3702 = vmatpush1.bf16.msra.mxu0 0
  %3703 = vmatprep.subr.bf16.mxu0 0
  %3704 = vmatpush1.bf16.msra.mxu0 0
  %3705 = vmatprep.subr.bf16.mxu0 0
  %3706 = vmatpush1.bf16.msra.mxu0 0
  %3707 = vmatprep.subr.bf16.mxu0 0
  %3708 = vmatpush1.bf16.msra.mxu0 0
  %3709 = vmatprep.subr.bf16.mxu0 0
  %3710 = vmatpush1.bf16.msra.mxu0 0
  %3711 = vmatprep.subr.bf16.mxu0 0
  %3712 = vmatpush1.bf16.msra.mxu0 0
  %3713 = vmatprep.subr.bf16.mxu0 0
  %3714 = vmatpush1.bf16.msra.mxu0 0
  %3715 = vmatprep.subr.bf16.mxu0 0
  %3716 = vmatpush1.bf16.msra.mxu0 0
  %3717 = vmatprep.mubr.bf16.mxu0 0
  %3718 = vmatmul.mubr.bf16.gmra.mrb[0].mxu0 %v3587
  %v3719 = vpop.f32.mrb[0].mxu0
  %v3720 = vadd.f32 %v3100, %v3719
  %v3721 = vpop.f32.mrb[0].mxu0
  %v3722 = vpop.f32.mrb[0].mxu0
  %v3723 = vadd.f32 %v3105, %v3722
  %v3724 = vpop.f32.mrb[0].mxu0
  %3725 = vmatprep.mubr.bf16.mxu0 0
  %3726 = vmatmul.mubr.bf16.gmra.mrb[0].mxu0 %v3590
  %v3727 = vpop.f32.mrb[0].mxu0
  %v3728 = vadd.f32 %v3110, %v3727
  %v3729 = vpop.f32.mrb[0].mxu0
  %v3730 = vpop.f32.mrb[0].mxu0
  %v3731 = vadd.f32 %v3115, %v3730
  %v3732 = vpop.f32.mrb[0].mxu0
  %3733 = vmatprep.mubr.bf16.mxu0 0
  %3734 = vmatmul.mubr.bf16.gmra.mrb[0].mxu0 %v3593
  %v3735 = vpop.f32.mrb[0].mxu0
  %v3736 = vadd.f32 %v3120, %v3735
  %v3737 = vpop.f32.mrb[0].mxu0
  %v3738 = vpop.f32.mrb[0].mxu0
  %v3739 = vadd.f32 %v3125, %v3738
  %v3740 = vpop.f32.mrb[0].mxu0
  %3741 = vmatprep.mubr.bf16.mxu0 0
  %3742 = vmatmul.mubr.bf16.gmra.mrb[0].mxu0 %v3596
  %v3743 = vpop.f32.mrb[0].mxu0
  %v3744 = vadd.f32 %v3130, %v3743
  %v3745 = vpop.f32.mrb[0].mxu0
  %v3746 = vpop.f32.mrb[0].mxu0
  %v3747 = vadd.f32 %v3135, %v3746
  %v3748 = vpop.f32.mrb[0].mxu0
  %3749 = vmatprep.mubr.bf16.mxu0 0
  %3750 = vmatmul.mubr.bf16.gmra.mrb[0].mxu0 %v3599
  %v3751 = vpop.f32.mrb[0].mxu0
  %v3752 = vadd.f32 %v3140, %v3751
  %v3753 = vpop.f32.mrb[0].mxu0
  %v3754 = vpop.f32.mrb[0].mxu0
  %v3755 = vadd.f32 %v3145, %v3754
  %v3756 = vpop.f32.mrb[0].mxu0
  %3757 = vmatprep.mubr.bf16.mxu0 0
  %3758 = vmatmul.mubr.bf16.gmra.mrb[0].mxu0 %v3602
  %v3759 = vpop.f32.mrb[0].mxu0
  %v3760 = vadd.f32 %v3150, %v3759
  %v3761 = vpop.f32.mrb[0].mxu0
  %v3762 = vpop.f32.mrb[0].mxu0
  %v3763 = vadd.f32 %v3155, %v3762
  %v3764 = vpop.f32.mrb[0].mxu0
  %3765 = vmatprep.mubr.bf16.mxu0 0
  %3766 = vmatmul.mubr.bf16.gmra.mrb[0].mxu0 %v3605
  %v3767 = vpop.f32.mrb[0].mxu0
  %v3768 = vadd.f32 %v3160, %v3767
  %v3769 = vpop.f32.mrb[0].mxu0
  %v3770 = vpop.f32.mrb[0].mxu0
  %v3771 = vadd.f32 %v3165, %v3770
  %v3772 = vpop.f32.mrb[0].mxu0
  %3773 = vmatprep.mubr.bf16.mxu0 0
  %3774 = vmatmul.mubr.bf16.gmra.mrb[0].mxu0 %v3608
  %v3775 = vpop.f32.mrb[0].mxu0
  %v3776 = vadd.f32 %v3170, %v3775
  %v3777 = vpop.f32.mrb[0].mxu0
  %v3778 = vpop.f32.mrb[0].mxu0
  %v3779 = vadd.f32 %v3175, %v3778
  %v3780 = vpop.f32.mrb[0].mxu0
  %3781 = vmatprep.mubr.bf16.mxu0 0
  %3782 = vmatmul.mubr.bf16.gmra.mrb[0].mxu0 %v3611
  %v3783 = vpop.f32.mrb[0].mxu0
  %v3784 = vadd.f32 %v3180, %v3783
  %v3785 = vpop.f32.mrb[0].mxu0
  %v3786 = vpop.f32.mrb[0].mxu0
  %v3787 = vadd.f32 %v3185, %v3786
  %v3788 = vpop.f32.mrb[0].mxu0
  %3789 = vmatprep.mubr.bf16.mxu0 0
  %3790 = vmatmul.mubr.bf16.gmra.mrb[0].mxu0 %v3614
  %v3791 = vpop.f32.mrb[0].mxu0
  %v3792 = vadd.f32 %v3190, %v3791
  %v3793 = vpop.f32.mrb[0].mxu0
  %v3794 = vpop.f32.mrb[0].mxu0
  %v3795 = vadd.f32 %v3195, %v3794
  %v3796 = vpop.f32.mrb[0].mxu0
  %3797 = vmatprep.mubr.bf16.mxu0 0
  %3798 = vmatmul.mubr.bf16.gmra.mrb[0].mxu0 %v3617
  %v3799 = vpop.f32.mrb[0].mxu0
  %v3800 = vadd.f32 %v3200, %v3799
  %v3801 = vpop.f32.mrb[0].mxu0
  %v3802 = vpop.f32.mrb[0].mxu0
  %v3803 = vadd.f32 %v3205, %v3802
  %v3804 = vpop.f32.mrb[0].mxu0
  %3805 = vmatprep.mubr.bf16.mxu0 0
  %3806 = vmatmul.mubr.bf16.gmra.mrb[0].mxu0 %v3620
  %v3807 = vpop.f32.mrb[0].mxu0
  %v3808 = vadd.f32 %v3210, %v3807
  %v3809 = vpop.f32.mrb[0].mxu0
  %v3810 = vpop.f32.mrb[0].mxu0
  %v3811 = vadd.f32 %v3215, %v3810
  %v3812 = vpop.f32.mrb[0].mxu0
  %3813 = vmatprep.mubr.bf16.mxu0 0
  %3814 = vmatmul.mubr.bf16.gmra.mrb[0].mxu0 %v3623
  %v3815 = vpop.f32.mrb[0].mxu0
  %v3816 = vadd.f32 %v3220, %v3815
  %v3817 = vpop.f32.mrb[0].mxu0
  %v3818 = vpop.f32.mrb[0].mxu0
  %v3819 = vadd.f32 %v3225, %v3818
  %v3820 = vpop.f32.mrb[0].mxu0
  %3821 = vmatprep.mubr.bf16.mxu0 0
  %3822 = vmatmul.mubr.bf16.gmra.mrb[0].mxu0 %v3626
  %v3823 = vpop.f32.mrb[0].mxu0
  %v3824 = vadd.f32 %v3230, %v3823
  %v3825 = vpop.f32.mrb[0].mxu0
  %v3826 = vpop.f32.mrb[0].mxu0
  %v3827 = vadd.f32 %v3235, %v3826
  %v3828 = vpop.f32.mrb[0].mxu0
  %3829 = vmatprep.mubr.bf16.mxu0 0
  %3830 = vmatmul.mubr.bf16.gmra.mrb[0].mxu0 %v3629
  %v3831 = vpop.f32.mrb[0].mxu0
  %v3832 = vadd.f32 %v3240, %v3831
  %v3833 = vpop.f32.mrb[0].mxu0
  %v3834 = vpop.f32.mrb[0].mxu0
  %v3835 = vadd.f32 %v3245, %v3834
  %v3836 = vpop.f32.mrb[0].mxu0
  %3837 = vmatprep.mubr.bf16.mxu0 0
  %3838 = vmatmul.mubr.bf16.gmra.mrb[0].mxu0 %v3632
  %v3839 = vpop.f32.mrb[0].mxu0
  %v3840 = vadd.f32 %v3250, %v3839
  %v3841 = vpop.f32.mrb[0].mxu0
  %v3842 = vpop.f32.mrb[0].mxu0
  %v3843 = vadd.f32 %v3255, %v3842
  %v3844 = vpop.f32.mrb[0].mxu0
  %3845 = vmatprep.mubr.bf16.mxu0 0
  %3846 = vmatmul.mubr.bf16.gmra.mrb[0].mxu0 %v3635
  %v3847 = vpop.f32.mrb[0].mxu0
  %v3848 = vadd.f32 %v3260, %v3847
  %v3849 = vpop.f32.mrb[0].mxu0
  %v3850 = vpop.f32.mrb[0].mxu0
  %v3851 = vadd.f32 %v3265, %v3850
  %v3852 = vpop.f32.mrb[0].mxu0
  %3853 = vmatprep.mubr.bf16.mxu0 0
  %3854 = vmatmul.mubr.bf16.gmra.mrb[0].mxu0 %v3638
  %v3855 = vpop.f32.mrb[0].mxu0
  %v3856 = vadd.f32 %v3270, %v3855
  %v3857 = vpop.f32.mrb[0].mxu0
  %v3858 = vpop.f32.mrb[0].mxu0
  %v3859 = vadd.f32 %v3275, %v3858
  %v3860 = vpop.f32.mrb[0].mxu0
  %3861 = vmatprep.mubr.bf16.mxu0 0
  %3862 = vmatmul.mubr.bf16.gmra.mrb[0].mxu0 %v3641
  %v3863 = vpop.f32.mrb[0].mxu0
  %v3864 = vadd.f32 %v3280, %v3863
  %v3865 = vpop.f32.mrb[0].mxu0
  %v3866 = vpop.f32.mrb[0].mxu0
  %v3867 = vadd.f32 %v3285, %v3866
  %v3868 = vpop.f32.mrb[0].mxu0
  %3869 = vmatprep.mubr.bf16.mxu0 0
  %3870 = vmatmul.mubr.bf16.gmra.mrb[0].mxu0 %v3644
  %v3871 = vpop.f32.mrb[0].mxu0
  %v3872 = vadd.f32 %v3290, %v3871
  %v3873 = vpop.f32.mrb[0].mxu0
  %v3874 = vpop.f32.mrb[0].mxu0
  %v3875 = vadd.f32 %v3295, %v3874
  %v3876 = vpop.f32.mrb[0].mxu0
  %3877 = vmatprep.mubr.bf16.mxu0 0
  %3878 = vmatmul.mubr.bf16.gmra.mrb[0].mxu0 %v3647
  %v3879 = vpop.f32.mrb[0].mxu0
  %v3880 = vadd.f32 %v3300, %v3879
  %v3881 = vpop.f32.mrb[0].mxu0
  %v3882 = vpop.f32.mrb[0].mxu0
  %v3883 = vadd.f32 %v3305, %v3882
  %v3884 = vpop.f32.mrb[0].mxu0
  %3885 = vmatprep.mubr.bf16.mxu0 0
  %3886 = vmatmul.mubr.bf16.gmra.mrb[0].mxu0 %v3650
  %v3887 = vpop.f32.mrb[0].mxu0
  %v3888 = vadd.f32 %v3310, %v3887
  %v3889 = vpop.f32.mrb[0].mxu0
  %v3890 = vpop.f32.mrb[0].mxu0
  %v3891 = vadd.f32 %v3315, %v3890
  %v3892 = vpop.f32.mrb[0].mxu0
  %3893 = vmatprep.mubr.bf16.mxu0 0
  %3894 = vmatmul.mubr.bf16.gmra.mrb[0].mxu0 %v3653
  %v3895 = vpop.f32.mrb[0].mxu0
  %v3896 = vadd.f32 %v3320, %v3895
  %v3897 = vpop.f32.mrb[0].mxu0
  %v3898 = vpop.f32.mrb[0].mxu0
  %v3899 = vadd.f32 %v3325, %v3898
  %v3900 = vpop.f32.mrb[0].mxu0
  %3901 = vmatprep.mubr.bf16.mxu0 0
  %3902 = vmatmul.mubr.bf16.gmra.mrb[0].mxu0 %v3656
  %v3903 = vpop.f32.mrb[0].mxu0
  %v3904 = vadd.f32 %v3330, %v3903
  %v3905 = vpop.f32.mrb[0].mxu0
  %v3906 = vpop.f32.mrb[0].mxu0
  %v3907 = vadd.f32 %v3335, %v3906
  %v3908 = vpop.f32.mrb[0].mxu0
  %3909 = vmatprep.mubr.bf16.mxu0 0
  %3910 = vmatmul.mubr.bf16.gmra.mrb[0].mxu0 %v3659
  %v3911 = vpop.f32.mrb[0].mxu0
  %v3912 = vadd.f32 %v3340, %v3911
  %v3913 = vpop.f32.mrb[0].mxu0
  %v3914 = vpop.f32.mrb[0].mxu0
  %v3915 = vadd.f32 %v3345, %v3914
  %v3916 = vpop.f32.mrb[0].mxu0
  %3917 = vmatprep.mubr.bf16.mxu0 0
  %3918 = vmatmul.mubr.bf16.gmra.mrb[0].mxu0 %v3662
  %v3919 = vpop.f32.mrb[0].mxu0
  %v3920 = vadd.f32 %v3350, %v3919
  %v3921 = vpop.f32.mrb[0].mxu0
  %v3922 = vpop.f32.mrb[0].mxu0
  %v3923 = vadd.f32 %v3355, %v3922
  %v3924 = vpop.f32.mrb[0].mxu0
  %3925 = vmatprep.mubr.bf16.mxu0 0
  %3926 = vmatmul.mubr.bf16.gmra.mrb[0].mxu0 %v3665
  %v3927 = vpop.f32.mrb[0].mxu0
  %v3928 = vadd.f32 %v3360, %v3927
  %v3929 = vpop.f32.mrb[0].mxu0
  %v3930 = vpop.f32.mrb[0].mxu0
  %v3931 = vadd.f32 %v3365, %v3930
  %v3932 = vpop.f32.mrb[0].mxu0
  %3933 = vmatprep.mubr.bf16.mxu0 0
  %3934 = vmatmul.mubr.bf16.gmra.mrb[0].mxu0 %v3668
  %v3935 = vpop.f32.mrb[0].mxu0
  %v3936 = vadd.f32 %v3370, %v3935
  %v3937 = vpop.f32.mrb[0].mxu0
  %v3938 = vpop.f32.mrb[0].mxu0
  %v3939 = vadd.f32 %v3375, %v3938
  %v3940 = vpop.f32.mrb[0].mxu0
  %3941 = vmatprep.mubr.bf16.mxu0 0
  %3942 = vmatmul.mubr.bf16.gmra.mrb[0].mxu0 %v3671
  %v3943 = vpop.f32.mrb[0].mxu0
  %v3944 = vadd.f32 %v3380, %v3943
  %v3945 = vpop.f32.mrb[0].mxu0
  %v3946 = vpop.f32.mrb[0].mxu0
  %v3947 = vadd.f32 %v3385, %v3946
  %v3948 = vpop.f32.mrb[0].mxu0
  %3949 = vmatprep.mubr.bf16.mxu0 0
  %3950 = vmatmul.mubr.bf16.gmra.mrb[0].mxu0 %v3674
  %v3951 = vpop.f32.mrb[0].mxu0
  %v3952 = vadd.f32 %v3390, %v3951
  %v3953 = vpop.f32.mrb[0].mxu0
  %v3954 = vpop.f32.mrb[0].mxu0
  %v3955 = vadd.f32 %v3395, %v3954
  %v3956 = vpop.f32.mrb[0].mxu0
  %3957 = vmatprep.mubr.bf16.mxu0 0
  %3958 = vmatmul.mubr.bf16.gmra.mrb[0].mxu0 %v3677
  %v3959 = vpop.f32.mrb[0].mxu0
  %v3960 = vadd.f32 %v3400, %v3959
  %v3961 = vpop.f32.mrb[0].mxu0
  %v3962 = vpop.f32.mrb[0].mxu0
  %v3963 = vadd.f32 %v3405, %v3962
  %v3964 = vpop.f32.mrb[0].mxu0
  %3965 = vmatprep.mubr.bf16.mxu0 0
  %3966 = vmatmul.mubr.bf16.gmra.mrb[0].mxu0 %v3680
  %v3967 = vpop.f32.mrb[0].mxu0
  %v3968 = vadd.f32 %v3410, %v3967
  %v3969 = vpop.f32.mrb[0].mxu0
  %v3970 = vpop.f32.mrb[0].mxu0
  %v3971 = vadd.f32 %v3415, %v3970
  %v3972 = vpop.f32.mrb[0].mxu0
  %3973 = vdwg.mxu0
  %vm3974 = vcmp.ge.f32.partialorder %v3720, 0.0
  %vm3975 = vcmp.ge.f32.partialorder %v3723, 0.0
  %vm3976 = vcmp.ge.f32.partialorder %v3728, 0.0
  %vm3977 = vcmp.ge.f32.partialorder %v3731, 0.0
  %vm3978 = vcmp.ge.f32.partialorder %v3736, 0.0
  %vm3979 = vcmp.ge.f32.partialorder %v3739, 0.0
  %vm3980 = vcmp.ge.f32.partialorder %v3744, 0.0
  %vm3981 = vcmp.ge.f32.partialorder %v3747, 0.0
  %vm3982 = vcmp.ge.f32.partialorder %v3752, 0.0
  %vm3983 = vcmp.ge.f32.partialorder %v3755, 0.0
  %vm3984 = vcmp.ge.f32.partialorder %v3760, 0.0
  %vm3985 = vcmp.ge.f32.partialorder %v3763, 0.0
  %vm3986 = vcmp.ge.f32.partialorder %v3768, 0.0
  %vm3987 = vcmp.ge.f32.partialorder %v3771, 0.0
  %vm3988 = vcmp.ge.f32.partialorder %v3776, 0.0
  %vm3989 = vcmp.ge.f32.partialorder %v3779, 0.0
  %vm3990 = vcmp.ge.f32.partialorder %v3784, 0.0
  %vm3991 = vcmp.ge.f32.partialorder %v3787, 0.0
  %vm3992 = vcmp.ge.f32.partialorder %v3792, 0.0
  %vm3993 = vcmp.ge.f32.partialorder %v3795, 0.0
  %vm3994 = vcmp.ge.f32.partialorder %v3800, 0.0
  %vm3995 = vcmp.ge.f32.partialorder %v3803, 0.0
  %vm3996 = vcmp.ge.f32.partialorder %v3808, 0.0
  %vm3997 = vcmp.ge.f32.partialorder %v3811, 0.0
  %vm3998 = vcmp.ge.f32.partialorder %v3816, 0.0
  %vm3999 = vcmp.ge.f32.partialorder %v3819, 0.0
  %vm4000 = vcmp.ge.f32.partialorder %v3824, 0.0
  %vm4001 = vcmp.ge.f32.partialorder %v3827, 0.0
  %vm4002 = vcmp.ge.f32.partialorder %v3832, 0.0
  %vm4003 = vcmp.ge.f32.partialorder %v3835, 0.0
  %vm4004 = vcmp.ge.f32.partialorder %v3840, 0.0
  %vm4005 = vcmp.ge.f32.partialorder %v3843, 0.0
  %vm4006 = vcmp.ge.f32.partialorder %v3848, 0.0
  %vm4007 = vcmp.ge.f32.partialorder %v3851, 0.0
  %vm4008 = vcmp.ge.f32.partialorder %v3856, 0.0
  %vm4009 = vcmp.ge.f32.partialorder %v3859, 0.0
  %vm4010 = vcmp.ge.f32.partialorder %v3864, 0.0
  %vm4011 = vcmp.ge.f32.partialorder %v3867, 0.0
  %vm4012 = vcmp.ge.f32.partialorder %v3872, 0.0
  %vm4013 = vcmp.ge.f32.partialorder %v3875, 0.0
  %vm4014 = vcmp.ge.f32.partialorder %v3880, 0.0
  %vm4015 = vcmp.ge.f32.partialorder %v3883, 0.0
  %vm4016 = vcmp.ge.f32.partialorder %v3888, 0.0
  %vm4017 = vcmp.ge.f32.partialorder %v3891, 0.0
  %vm4018 = vcmp.ge.f32.partialorder %v3896, 0.0
  %vm4019 = vcmp.ge.f32.partialorder %v3899, 0.0
  %vm4020 = vcmp.ge.f32.partialorder %v3904, 0.0
  %vm4021 = vcmp.ge.f32.partialorder %v3907, 0.0
  %vm4022 = vcmp.ge.f32.partialorder %v3912, 0.0
  %vm4023 = vcmp.ge.f32.partialorder %v3915, 0.0
  %vm4024 = vcmp.ge.f32.partialorder %v3920, 0.0
  %vm4025 = vcmp.ge.f32.partialorder %v3923, 0.0
  %vm4026 = vcmp.ge.f32.partialorder %v3928, 0.0
  %vm4027 = vcmp.ge.f32.partialorder %v3931, 0.0
  %vm4028 = vcmp.ge.f32.partialorder %v3936, 0.0
  %vm4029 = vcmp.ge.f32.partialorder %v3939, 0.0
  %vm4030 = vcmp.ge.f32.partialorder %v3944, 0.0
  %vm4031 = vcmp.ge.f32.partialorder %v3947, 0.0
  %vm4032 = vcmp.ge.f32.partialorder %v3952, 0.0
  %vm4033 = vcmp.ge.f32.partialorder %v3955, 0.0
  %vm4034 = vcmp.ge.f32.partialorder %v3960, 0.0
  %vm4035 = vcmp.ge.f32.partialorder %v3963, 0.0
  %vm4036 = vcmp.ge.f32.partialorder %v3968, 0.0
  %vm4037 = vcmp.ge.f32.partialorder %v3971, 0.0
  %v4038 = vmul.f32 %v3720, 0.1
  %v4039 = vmul.f32 %v3723, 0.1
  %v4040 = vmul.f32 %v3728, 0.1
  %v4041 = vmul.f32 %v3731, 0.1
  %v4042 = vmul.f32 %v3736, 0.1
  %v4043 = vmul.f32 %v3739, 0.1
  %v4044 = vmul.f32 %v3744, 0.1
  %v4045 = vmul.f32 %v3747, 0.1
  %v4046 = vmul.f32 %v3752, 0.1
  %v4047 = vmul.f32 %v3755, 0.1
  %v4048 = vmul.f32 %v3760, 0.1
  %v4049 = vmul.f32 %v3763, 0.1
  %v4050 = vmul.f32 %v3768, 0.1
  %v4051 = vmul.f32 %v3771, 0.1
  %v4052 = vmul.f32 %v3776, 0.1
  %v4053 = vmul.f32 %v3779, 0.1
  %v4054 = vmul.f32 %v3784, 0.1
  %v4055 = vmul.f32 %v3787, 0.1
  %v4056 = vmul.f32 %v3792, 0.1
  %v4057 = vmul.f32 %v3795, 0.1
  %v4058 = vmul.f32 %v3800, 0.1
  %v4059 = vmul.f32 %v3803, 0.1
  %v4060 = vmul.f32 %v3808, 0.1
  %v4061 = vmul.f32 %v3811, 0.1
  %v4062 = vmul.f32 %v3816, 0.1
  %v4063 = vmul.f32 %v3819, 0.1
  %v4064 = vmul.f32 %v3824, 0.1
  %v4065 = vmul.f32 %v3827, 0.1
  %v4066 = vmul.f32 %v3832, 0.1
  %v4067 = vmul.f32 %v3835, 0.1
  %v4068 = vmul.f32 %v3840, 0.1
  %v4069 = vmul.f32 %v3843, 0.1
  %v4070 = vmul.f32 %v3848, 0.1
  %v4071 = vmul.f32 %v3851, 0.1
  %v4072 = vmul.f32 %v3856, 0.1
  %v4073 = vmul.f32 %v3859, 0.1
  %v4074 = vmul.f32 %v3864, 0.1
  %v4075 = vmul.f32 %v3867, 0.1
  %v4076 = vmul.f32 %v3872, 0.1
  %v4077 = vmul.f32 %v3875, 0.1
  %v4078 = vmul.f32 %v3880, 0.1
  %v4079 = vmul.f32 %v3883, 0.1
  %v4080 = vmul.f32 %v3888, 0.1
  %v4081 = vmul.f32 %v3891, 0.1
  %v4082 = vmul.f32 %v3896, 0.1
  %v4083 = vmul.f32 %v3899, 0.1
  %v4084 = vmul.f32 %v3904, 0.1
  %v4085 = vmul.f32 %v3907, 0.1
  %v4086 = vmul.f32 %v3912, 0.1
  %v4087 = vmul.f32 %v3915, 0.1
  %v4088 = vmul.f32 %v3920, 0.1
  %v4089 = vmul.f32 %v3923, 0.1
  %v4090 = vmul.f32 %v3928, 0.1
  %v4091 = vmul.f32 %v3931, 0.1
  %v4092 = vmul.f32 %v3936, 0.1
  %v4093 = vmul.f32 %v3939, 0.1
  %v4094 = vmul.f32 %v3944, 0.1
  %v4095 = vmul.f32 %v3947, 0.1
  %v4096 = vmul.f32 %v3952, 0.1
  %v4097 = vmul.f32 %v3955, 0.1
  %v4098 = vmul.f32 %v3960, 0.1
  %v4099 = vmul.f32 %v3963, 0.1
  %v4100 = vmul.f32 %v3968, 0.1
  %v4101 = vmul.f32 %v3971, 0.1
  %v4102 = vsel %vm3974, %v3720, %v4038
  %v4103 = vsel %vm3975, %v3723, %v4039
  %v4104 = vsel %vm3976, %v3728, %v4040
  %v4105 = vsel %vm3977, %v3731, %v4041
  %v4106 = vsel %vm3978, %v3736, %v4042
  %v4107 = vsel %vm3979, %v3739, %v4043
  %v4108 = vsel %vm3980, %v3744, %v4044
  %v4109 = vsel %vm3981, %v3747, %v4045
  %v4110 = vsel %vm3982, %v3752, %v4046
  %v4111 = vsel %vm3983, %v3755, %v4047
  %v4112 = vsel %vm3984, %v3760, %v4048
  %v4113 = vsel %vm3985, %v3763, %v4049
  %v4114 = vsel %vm3986, %v3768, %v4050
  %v4115 = vsel %vm3987, %v3771, %v4051
  %v4116 = vsel %vm3988, %v3776, %v4052
  %v4117 = vsel %vm3989, %v3779, %v4053
  %v4118 = vsel %vm3990, %v3784, %v4054
  %v4119 = vsel %vm3991, %v3787, %v4055
  %v4120 = vsel %vm3992, %v3792, %v4056
  %v4121 = vsel %vm3993, %v3795, %v4057
  %v4122 = vsel %vm3994, %v3800, %v4058
  %v4123 = vsel %vm3995, %v3803, %v4059
  %v4124 = vsel %vm3996, %v3808, %v4060
  %v4125 = vsel %vm3997, %v3811, %v4061
  %v4126 = vsel %vm3998, %v3816, %v4062
  %v4127 = vsel %vm3999, %v3819, %v4063
  %v4128 = vsel %vm4000, %v3824, %v4064
  %v4129 = vsel %vm4001, %v3827, %v4065
  %v4130 = vsel %vm4002, %v3832, %v4066
  %v4131 = vsel %vm4003, %v3835, %v4067
  %v4132 = vsel %vm4004, %v3840, %v4068
  %v4133 = vsel %vm4005, %v3843, %v4069
  %v4134 = vsel %vm4006, %v3848, %v4070
  %v4135 = vsel %vm4007, %v3851, %v4071
  %v4136 = vsel %vm4008, %v3856, %v4072
  %v4137 = vsel %vm4009, %v3859, %v4073
  %v4138 = vsel %vm4010, %v3864, %v4074
  %v4139 = vsel %vm4011, %v3867, %v4075
  %v4140 = vsel %vm4012, %v3872, %v4076
  %v4141 = vsel %vm4013, %v3875, %v4077
  %v4142 = vsel %vm4014, %v3880, %v4078
  %v4143 = vsel %vm4015, %v3883, %v4079
  %v4144 = vsel %vm4016, %v3888, %v4080
  %v4145 = vsel %vm4017, %v3891, %v4081
  %v4146 = vsel %vm4018, %v3896, %v4082
  %v4147 = vsel %vm4019, %v3899, %v4083
  %v4148 = vsel %vm4020, %v3904, %v4084
  %v4149 = vsel %vm4021, %v3907, %v4085
  %v4150 = vsel %vm4022, %v3912, %v4086
  %v4151 = vsel %vm4023, %v3915, %v4087
  %v4152 = vsel %vm4024, %v3920, %v4088
  %v4153 = vsel %vm4025, %v3923, %v4089
  %v4154 = vsel %vm4026, %v3928, %v4090
  %v4155 = vsel %vm4027, %v3931, %v4091
  %v4156 = vsel %vm4028, %v3936, %v4092
  %v4157 = vsel %vm4029, %v3939, %v4093
  %v4158 = vsel %vm4030, %v3944, %v4094
  %v4159 = vsel %vm4031, %v3947, %v4095
  %v4160 = vsel %vm4032, %v3952, %v4096
  %v4161 = vsel %vm4033, %v3955, %v4097
  %v4162 = vsel %vm4034, %v3960, %v4098
  %v4163 = vsel %vm4035, %v3963, %v4099
  %v4164 = vsel %vm4036, %v3968, %v4100
  %v4165 = vsel %vm4037, %v3971, %v4101
  %v4166 = vpack.c.bf16 %v4103, %v4102
  %v4167 = vpack.c.bf16 %v4105, %v4104
  %v4168 = vpack.c.bf16 %v4107, %v4106
  %v4169 = vpack.c.bf16 %v4109, %v4108
  %v4170 = vpack.c.bf16 %v4111, %v4110
  %v4171 = vpack.c.bf16 %v4113, %v4112
  %v4172 = vpack.c.bf16 %v4115, %v4114
  %v4173 = vpack.c.bf16 %v4117, %v4116
  %v4174 = vpack.c.bf16 %v4119, %v4118
  %v4175 = vpack.c.bf16 %v4121, %v4120
  %v4176 = vpack.c.bf16 %v4123, %v4122
  %v4177 = vpack.c.bf16 %v4125, %v4124
  %v4178 = vpack.c.bf16 %v4127, %v4126
  %v4179 = vpack.c.bf16 %v4129, %v4128
  %v4180 = vpack.c.bf16 %v4131, %v4130
  %v4181 = vpack.c.bf16 %v4133, %v4132
  %v4182 = vpack.c.bf16 %v4135, %v4134
  %v4183 = vpack.c.bf16 %v4137, %v4136
  %v4184 = vpack.c.bf16 %v4139, %v4138
  %v4185 = vpack.c.bf16 %v4141, %v4140
  %v4186 = vpack.c.bf16 %v4143, %v4142
  %v4187 = vpack.c.bf16 %v4145, %v4144
  %v4188 = vpack.c.bf16 %v4147, %v4146
  %v4189 = vpack.c.bf16 %v4149, %v4148
  %v4190 = vpack.c.bf16 %v4151, %v4150
  %v4191 = vpack.c.bf16 %v4153, %v4152
  %v4192 = vpack.c.bf16 %v4155, %v4154
  %v4193 = vpack.c.bf16 %v4157, %v4156
  %v4194 = vpack.c.bf16 %v4159, %v4158
  %v4195 = vpack.c.bf16 %v4161, %v4160
  %v4196 = vpack.c.bf16 %v4163, %v4162
  %v4197 = vpack.c.bf16 %v4165, %v4164
  %s4198 = scalar_lea.vmem %s3, 8
  %v4199 = vld [vmem:[%s4198] sm:$0xf]
  %s4200 = scalar_lea.vmem %s4, 2
  %v4201 = vld [vmem:[%s4200] sm:$0x1]
  %4203 = vset.pattern.permute.xlu0 0
  %4204 = vperm.xlu0 %4203, %v4201
  %v4205 = vpop.permute.xlu0 %4204
  %v4207 = vlaneseq
  %v4208 = vshrl.u32 %v4207, 7
  %v4209 = vsub.s32 0, %v4208
  %v4210 = vrot.slane %v4205, %v4209
  %v4213 = vunpack.c.l.s4 1966171168
  %v4214 = vunpack.c.0.s8 %v4213
  %v4215 = vlaneseq
  %v4216 = vshrl.u32 %v4215, 7
  %v4217 = vsub.s32 %v4214, %v4216
  %v4218 = vrot.slane %v4199, %v4217
  %v4219 = vcombine.high %v4218, %v4218
  %v4221 = vunpack.c.l.s4 1966171168
  %v4222 = vunpack.c.0.s8 %v4221
  %v4223 = vlaneseq
  %v4224 = vshrl.u32 %v4223, 7
  %v4225 = vsub.s32 %v4222, %v4224
  %v4226 = vrot.slane %v4218, %v4225
  %v4228 = vunpack.c.l.s4 1966171168
  %v4229 = vunpack.c.0.s8 %v4228
  %v4230 = vlaneseq
  %v4231 = vshrl.u32 %v4230, 7
  %v4232 = vsub.s32 %v4229, %v4231
  %v4233 = vrot.slane %v4219, %v4232
  %v4234 = vcombine.high %v4226, %v4226
  %v4235 = vcombine.high %v4233, %v4233
  %4240 = vmatprep.subr.bf16.mxu0 0
  %4241 = vmatpush1.bf16.msra.mxu0 %v4166
  %4242 = vmatprep.subr.bf16.mxu0 0
  %4243 = vmatpush1.bf16.msra.mxu0 %v4167
  %4244 = vmatprep.subr.bf16.mxu0 0
  %4245 = vmatpush1.bf16.msra.mxu0 %v4168
  %4246 = vmatprep.subr.bf16.mxu0 0
  %4247 = vmatpush1.bf16.msra.mxu0 %v4169
  %4248 = vmatprep.subr.bf16.mxu0 0
  %4249 = vmatpush1.bf16.msra.mxu0 %v4170
  %4250 = vmatprep.subr.bf16.mxu0 0
  %4251 = vmatpush1.bf16.msra.mxu0 %v4171
  %4252 = vmatprep.subr.bf16.mxu0 0
  %4253 = vmatpush1.bf16.msra.mxu0 %v4172
  %4254 = vmatprep.subr.bf16.mxu0 0
  %4255 = vmatpush1.bf16.msra.mxu0 %v4173
  %4256 = vmatprep.subr.bf16.mxu0 0
  %4257 = vmatpush1.bf16.msra.mxu0 %v4174
  %4258 = vmatprep.subr.bf16.mxu0 0
  %4259 = vmatpush1.bf16.msra.mxu0 %v4175
  %4260 = vmatprep.subr.bf16.mxu0 0
  %4261 = vmatpush1.bf16.msra.mxu0 %v4176
  %4262 = vmatprep.subr.bf16.mxu0 0
  %4263 = vmatpush1.bf16.msra.mxu0 %v4177
  %4264 = vmatprep.subr.bf16.mxu0 0
  %4265 = vmatpush1.bf16.msra.mxu0 %v4178
  %4266 = vmatprep.subr.bf16.mxu0 0
  %4267 = vmatpush1.bf16.msra.mxu0 %v4179
  %4268 = vmatprep.subr.bf16.mxu0 0
  %4269 = vmatpush1.bf16.msra.mxu0 %v4180
  %4270 = vmatprep.subr.bf16.mxu0 0
  %4271 = vmatpush1.bf16.msra.mxu0 %v4181
  %4272 = vmatprep.mubr.bf16.mxu0 %v4233
  %4273 = vmatmul.mubr.bf16.gmra.mrb[0].mxu0 %v4226
  %v4274 = vpop.f32.mrb[0].mxu0
  %v4275 = vadd.f32 %v4210, %v4274
  %v4276 = vpop.f32.mrb[0].mxu0
  %v4277 = vpop.f32.mrb[0].mxu0
  %v4278 = vpop.f32.mrb[0].mxu0
  %4279 = vdwg.mxu0
  %4280 = vmatprep.subr.bf16.mxu0 0
  %4281 = vmatpush1.bf16.msra.mxu0 %v4182
  %4282 = vmatprep.subr.bf16.mxu0 0
  %4283 = vmatpush1.bf16.msra.mxu0 %v4183
  %4284 = vmatprep.subr.bf16.mxu0 0
  %4285 = vmatpush1.bf16.msra.mxu0 %v4184
  %4286 = vmatprep.subr.bf16.mxu0 0
  %4287 = vmatpush1.bf16.msra.mxu0 %v4185
  %4288 = vmatprep.subr.bf16.mxu0 0
  %4289 = vmatpush1.bf16.msra.mxu0 %v4186
  %4290 = vmatprep.subr.bf16.mxu0 0
  %4291 = vmatpush1.bf16.msra.mxu0 %v4187
  %4292 = vmatprep.subr.bf16.mxu0 0
  %4293 = vmatpush1.bf16.msra.mxu0 %v4188
  %4294 = vmatprep.subr.bf16.mxu0 0
  %4295 = vmatpush1.bf16.msra.mxu0 %v4189
  %4296 = vmatprep.subr.bf16.mxu0 0
  %4297 = vmatpush1.bf16.msra.mxu0 %v4190
  %4298 = vmatprep.subr.bf16.mxu0 0
  %4299 = vmatpush1.bf16.msra.mxu0 %v4191
  %4300 = vmatprep.subr.bf16.mxu0 0
  %4301 = vmatpush1.bf16.msra.mxu0 %v4192
  %4302 = vmatprep.subr.bf16.mxu0 0
  %4303 = vmatpush1.bf16.msra.mxu0 %v4193
  %4304 = vmatprep.subr.bf16.mxu0 0
  %4305 = vmatpush1.bf16.msra.mxu0 %v4194
  %4306 = vmatprep.subr.bf16.mxu0 0
  %4307 = vmatpush1.bf16.msra.mxu0 %v4195
  %4308 = vmatprep.subr.bf16.mxu0 0
  %4309 = vmatpush1.bf16.msra.mxu0 %v4196
  %4310 = vmatprep.subr.bf16.mxu0 0
  %4311 = vmatpush1.bf16.msra.mxu0 %v4197
  %4312 = vmatprep.mubr.bf16.mxu0 %v4235
  %4313 = vmatmul.mubr.bf16.gmra.mrb[0].mxu0 %v4234
  %v4314 = vpop.f32.mrb[0].mxu0
  %v4315 = vadd.f32 %v4275, %v4314
  %v4316 = vpop.f32.mrb[0].mxu0
  %v4317 = vpop.f32.mrb[0].mxu0
  %v4318 = vpop.f32.mrb[0].mxu0
  %4319 = vdwg.mxu0
  %v4320 = vxor.u32 %v4315, 2147483648
  %v4321 = vmul.f32 %v4320, 1.442695
  %v4322 = vpow.pop %v4321
  %v4323 = vadd.f32 %v4322, 1.0
  %v4324 = vrcp.pop %v4323
  %v4325 = vmul.f32 1.0, %v4324
  %4326 = vmatprep.subr.bf16.mxu0 0
  %4327 = vmatpush1.bf16.msra.mxu0 %v4166
  %4328 = vmatprep.subr.bf16.mxu0 0
  %4329 = vmatpush1.bf16.msra.mxu0 %v4167
  %4330 = vmatprep.subr.bf16.mxu0 0
  %4331 = vmatpush1.bf16.msra.mxu0 %v4168
  %4332 = vmatprep.subr.bf16.mxu0 0
  %4333 = vmatpush1.bf16.msra.mxu0 %v4169
  %4334 = vmatprep.subr.bf16.mxu0 0
  %4335 = vmatpush1.bf16.msra.mxu0 %v4170
  %4336 = vmatprep.subr.bf16.mxu0 0
  %4337 = vmatpush1.bf16.msra.mxu0 %v4171
  %4338 = vmatprep.subr.bf16.mxu0 0
  %4339 = vmatpush1.bf16.msra.mxu0 %v4172
  %4340 = vmatprep.subr.bf16.mxu0 0
  %4341 = vmatpush1.bf16.msra.mxu0 %v4173
  %4342 = vmatprep.subr.bf16.mxu0 0
  %4343 = vmatpush1.bf16.msra.mxu0 %v4174
  %4344 = vmatprep.subr.bf16.mxu0 0
  %4345 = vmatpush1.bf16.msra.mxu0 %v4175
  %4346 = vmatprep.subr.bf16.mxu0 0
  %4347 = vmatpush1.bf16.msra.mxu0 %v4176
  %4348 = vmatprep.subr.bf16.mxu0 0
  %4349 = vmatpush1.bf16.msra.mxu0 %v4177
  %4350 = vmatprep.subr.bf16.mxu0 0
  %4351 = vmatpush1.bf16.msra.mxu0 %v4178
  %4352 = vmatprep.subr.bf16.mxu0 0
  %4353 = vmatpush1.bf16.msra.mxu0 %v4179
  %4354 = vmatprep.subr.bf16.mxu0 0
  %4355 = vmatpush1.bf16.msra.mxu0 %v4180
  %4356 = vmatprep.subr.bf16.mxu0 0
  %4357 = vmatpush1.bf16.msra.mxu0 %v4181
  %4358 = vmatprep.mubr.bf16.mxu0 %v1407
  %4359 = vmatmul.mubr.bf16.gmra.mrb[0].mxu0 %v1406
  %v4360 = vpop.f32.mrb[0].mxu0
  %v4361 = vadd.f32 %v38, %v4360
  %v4362 = vpop.f32.mrb[0].mxu0
  %v4363 = vpop.f32.mrb[0].mxu0
  %v4364 = vpop.f32.mrb[0].mxu0
  %4365 = vdwg.mxu0
  %4366 = vmatprep.subr.bf16.mxu0 0
  %4367 = vmatpush1.bf16.msra.mxu0 %v4182
  %4368 = vmatprep.subr.bf16.mxu0 0
  %4369 = vmatpush1.bf16.msra.mxu0 %v4183
  %4370 = vmatprep.subr.bf16.mxu0 0
  %4371 = vmatpush1.bf16.msra.mxu0 %v4184
  %4372 = vmatprep.subr.bf16.mxu0 0
  %4373 = vmatpush1.bf16.msra.mxu0 %v4185
  %4374 = vmatprep.subr.bf16.mxu0 0
  %4375 = vmatpush1.bf16.msra.mxu0 %v4186
  %4376 = vmatprep.subr.bf16.mxu0 0
  %4377 = vmatpush1.bf16.msra.mxu0 %v4187
  %4378 = vmatprep.subr.bf16.mxu0 0
  %4379 = vmatpush1.bf16.msra.mxu0 %v4188
  %4380 = vmatprep.subr.bf16.mxu0 0
  %4381 = vmatpush1.bf16.msra.mxu0 %v4189
  %4382 = vmatprep.subr.bf16.mxu0 0
  %4383 = vmatpush1.bf16.msra.mxu0 %v4190
  %4384 = vmatprep.subr.bf16.mxu0 0
  %4385 = vmatpush1.bf16.msra.mxu0 %v4191
  %4386 = vmatprep.subr.bf16.mxu0 0
  %4387 = vmatpush1.bf16.msra.mxu0 %v4192
  %4388 = vmatprep.subr.bf16.mxu0 0
  %4389 = vmatpush1.bf16.msra.mxu0 %v4193
  %4390 = vmatprep.subr.bf16.mxu0 0
  %4391 = vmatpush1.bf16.msra.mxu0 %v4194
  %4392 = vmatprep.subr.bf16.mxu0 0
  %4393 = vmatpush1.bf16.msra.mxu0 %v4195
  %4394 = vmatprep.subr.bf16.mxu0 0
  %4395 = vmatpush1.bf16.msra.mxu0 %v4196
  %4396 = vmatprep.subr.bf16.mxu0 0
  %4397 = vmatpush1.bf16.msra.mxu0 %v4197
  %4398 = vmatprep.mubr.bf16.mxu0 %v1409
  %4399 = vmatmul.mubr.bf16.gmra.mrb[0].mxu0 %v1408
  %v4400 = vpop.f32.mrb[0].mxu0
  %v4401 = vadd.f32 %v4361, %v4400
  %v4402 = vpop.f32.mrb[0].mxu0
  %v4403 = vpop.f32.mrb[0].mxu0
  %v4404 = vpop.f32.mrb[0].mxu0
  %4405 = vdwg.mxu0
  %s4406 = scalar_lea.vmem %s8, 16
  %4407 = vst.msk [vmem:[%s4406] sm:$0xff] %vm1494, %v4401
  %v4408 = vld [vmem:[%s7 + $0x2] sm:$0x1]
  %v4409 = vsub.f32 1.0, %v4408
  %v4410 = vmul.f32 %v4409, %v4325
  %v4411 = vadd.f32 %v4410, %v4408
  %v4412 = vlaneseq
  %v4413 = vshrl.u32 %v4412, 7
  %v4414 = vsub.s32 0, %v4413
  %v4415 = vrot.slane %v4411, %v4414
  %v4416 = vmul.f32 %v4401, %v4415
  %v4417 = vadd.f32 %v2961, %v4416
  %v4418 = vadd.f32 %v2962, %v4411
  %v4419 = vadd.f32 %v4418, 1e-09
  %v4420 = vlaneseq
  %v4421 = vshrl.u32 %v4420, 7
  %v4422 = vsub.s32 0, %v4421
  %v4423 = vrot.slane %v4419, %v4422
  %v4424 = vrcp.pop %v4423
  %v4425 = vmul.f32 %v4417, %v4424
  %v4426 = vxor.u32 %v4425, 2147483648
  %v4427 = vmul.f32 %v4426, 1.442695
  %v4428 = vpow.pop %v4427
  %v4429 = vadd.f32 %v4428, 1.0
  %v4430 = vrcp.pop %v4429
  %v4431 = vmul.f32 1.0, %v4430
  %4432 = vst.msk [vmem:[%s9] sm:$0xff] %vm1494, %v4431
  // Predicated region
  $region34: #{fused_head.1} parent=0 // pred_check
    _
  $region35: #{fused_head.1} parent=0 // pred_check_branch
    %4434 = sbr.rel (0) target = $region37
  $region36: #{fused_head.1} parent=0 // pred_region
    _
  $region37: #{fused_head.1} parent=0 // pred_fallthru
    _
  // Predicated region
  $region38: #{fused_head.1} parent=0 // pred_check
    _
  $region39: #{fused_head.1} parent=0 // pred_check_branch
    %4436 = sbr.rel (0) target = $region41
  $region40: #{fused_head.1} parent=0 // pred_region
    _
  $region41: #{fused_head.1} parent=0 // pred_fallthru
    _
  // Predicated region
  $region42: #{fused_head.1} parent=0 // pred_check
    _
  $region43: #{fused_head.1} parent=0 // pred_check_branch
    %4438 = sbr.rel (0) target = $region45
  $region44: #{fused_head.1} parent=0 // pred_region
    _
  $region45: #{fused_head.1} parent=0 // pred_fallthru
    _
  // Predicated region
  $region46: #{fused_head.1} parent=0 // pred_check
    _
  $region47: #{fused_head.1} parent=0 // pred_check_branch
    %4440 = sbr.rel (0) target = $region49
  $region48: #{fused_head.1} parent=0 // pred_region
    _
  $region49: #{fused_head.1} parent=0 // pred_fallthru
    _

</llo_original>
